<compile_context>
chip_gen: v6e
topology: v6e:2x2x1
jax: 0.10.0
libtpu: 0.0.40
codegen_flags: <defaults>
</compile_context>

<pallas_src>
import functools

import jax
import jax.numpy as jnp
from jax import lax
from jax.experimental import pallas as pl
from jax.experimental.pallas import tpu as pltpu


# ----------------------------------------------------------------------------
# helpers
# ----------------------------------------------------------------------------
def _round_up(x, m):
    return ((x + m - 1) // m) * m


def _pad_dim(a, axis, target):
    pad = target - a.shape[axis]
    if pad == 0:
        return a
    widths = [(0, 0)] * a.ndim
    widths[axis] = (0, pad)
    return jnp.pad(a, widths)


def _im2col_3x3(x_nhwc, stride):
    """3x3, padding=1 im2col. Returns (B*Ho*Wo, 9*C) with K ordered (kh, kw, c)."""
    B, H, W, C = x_nhwc.shape
    Ho = (H + 2 - 3) // stride + 1
    Wo = (W + 2 - 3) // stride + 1
    xp = jnp.pad(x_nhwc, ((0, 0), (1, 1), (1, 1), (0, 0)))
    cols = []
    for dh in range(3):
        for dw in range(3):
            lh = dh + stride * (Ho - 1) + 1
            lw = dw + stride * (Wo - 1) + 1
            cols.append(xp[:, dh:lh:stride, dw:lw:stride, :])  # (B, Ho, Wo, C)
    patches = jnp.concatenate(cols, axis=-1)                    # (B, Ho, Wo, 9C)
    return patches.reshape(B * Ho * Wo, 9 * C), (B, Ho, Wo)


# ----------------------------------------------------------------------------
# Pallas kernels
# ----------------------------------------------------------------------------
def _linear_kernel(x_ref, w_ref, b_ref, o_ref, *, apply_relu):
    # y = x @ W + b (f32 MXU accumulation), optional ReLU, cast on store.
    acc = jnp.dot(x_ref[...], w_ref[...], preferred_element_type=jnp.float32)
    acc = acc + b_ref[...]
    if apply_relu:
        acc = jnp.maximum(acc, 0.0)
    o_ref[...] = acc.astype(o_ref.dtype)


def _ncp_kernel(x_ref, w1_ref, b1_ref, w2_ref, b2_ref, w3_ref, b3_ref, o_ref, *,
                compute_dtype):
    # Fused fc1+ReLU -> fc2+ReLU -> fc3. MXU sees compute_dtype operands, accumulates
    # f32; bias add / ReLU stay in f32. Intermediates never leave VMEM.
    h = jnp.dot(x_ref[...], w1_ref[...], preferred_element_type=jnp.float32)
    h = jnp.maximum(h + b1_ref[...], 0.0)
    h = jnp.dot(h.astype(compute_dtype), w2_ref[...],
                preferred_element_type=jnp.float32)
    h = jnp.maximum(h + b2_ref[...], 0.0)
    o = jnp.dot(h.astype(compute_dtype), w3_ref[...],
                preferred_element_type=jnp.float32) + b3_ref[...]
    o_ref[...] = o.astype(o_ref.dtype)


# ----------------------------------------------------------------------------
# Pallas wrappers
# ----------------------------------------------------------------------------
def _linear_relu_pallas(x, w, b, *, apply_relu, out_dtype, block_m):
    """x: (M, K); w: (K, N); b: (1, N) f32. Tiled over M only (weights resident)."""
    M, K = x.shape
    _, N = w.shape
    bm = _round_up(min(block_m, M), 16)          # 16: bf16 sublane packing
    Mp = _round_up(M, bm)
    x = _pad_dim(x, 0, Mp)
    grid = (Mp // bm,)

    out = pl.pallas_call(
        functools.partial(_linear_kernel, apply_relu=apply_relu),
        out_shape=jax.ShapeDtypeStruct((Mp, N), out_dtype),
        grid_spec=pl.GridSpec(
            grid=grid,
            in_specs=[
                pl.BlockSpec((bm, K), lambda i: (i, 0)),   # activation tile
                pl.BlockSpec((K, N), lambda i: (0, 0)),    # weight (resident)
                pl.BlockSpec((1, N), lambda i: (0, 0)),    # bias (resident)
            ],
            out_specs=pl.BlockSpec((bm, N), lambda i: (i, 0)),
        ),
        compiler_params=pltpu.CompilerParams(
            dimension_semantics=("parallel",)),
    )(x, w, b)
    return out[:M] if Mp != M else out


def _ncp_pallas(flat_nhwc, params, conv_chw, compute_dtype, block_batch):
    """Fused 3-layer MLP.

    flat_nhwc: (M, K) activations flattened in NHWC order, already compute_dtype.
    conv_chw:  (C, Ho, Wo) of the last conv output, used to permute fc1 weight
               columns from PyTorch NCHW-flatten order to our NHWC-flatten order
               (batch-independent layout fix instead of transposing activations).
    """
    M = flat_nhwc.shape[0]
    C, Ho, Wo = conv_chw
    hid = params["fc1_w"].shape[0]
    out_dim = params["fc3_w"].shape[0]

    # Reorder fc1 columns: [o, c*Ho*Wo + i*Wo + j] -> [o, i*Wo*C + j*C + c].
    w1 = params["fc1_w"].reshape(hid, C, Ho, Wo)
    w1 = jnp.transpose(w1, (0, 2, 3, 1)).reshape(hid, C * Ho * Wo).T   # (K, hid)
    w2 = params["fc2_w"].T                                             # (hid, hid)
    w3 = params["fc3_w"].T                                             # (hid, out)
    K = w1.shape[0]

    # Lane-dense padding (multiples of 128) for K, hidden and the output slab.
    Kp = _round_up(K, 128)
    Hp = _round_up(hid, 128)
    Np = _round_up(out_dim, 128)

    x = _pad_dim(flat_nhwc, 1, Kp)
    w1p = _pad_dim(_pad_dim(w1, 0, Kp), 1, Hp).astype(compute_dtype)
    w2p = _pad_dim(_pad_dim(w2, 0, Hp), 1, Hp).astype(compute_dtype)
    w3p = _pad_dim(_pad_dim(w3, 0, Hp), 1, Np).astype(compute_dtype)
    b1p = _pad_dim(params["fc1_b"].reshape(1, -1).astype(jnp.float32), 1, Hp)
    b2p = _pad_dim(params["fc2_b"].reshape(1, -1).astype(jnp.float32), 1, Hp)
    b3p = _pad_dim(params["fc3_b"].reshape(1, -1).astype(jnp.float32), 1, Np)

    bm = _round_up(min(block_batch, M), 16)
    Mp = _round_up(M, bm)
    x = _pad_dim(x, 0, Mp)
    grid = (Mp // bm,)

    out = pl.pallas_call(
        functools.partial(_ncp_kernel, compute_dtype=compute_dtype),
        out_shape=jax.ShapeDtypeStruct((Mp, Np), jnp.float32),
        grid_spec=pl.GridSpec(
            grid=grid,
            in_specs=[
                pl.BlockSpec((bm, Kp), lambda i: (i, 0)),   # x tile
                pl.BlockSpec((Kp, Hp), lambda i: (0, 0)),   # w1 (resident)
                pl.BlockSpec((1, Hp), lambda i: (0, 0)),    # b1
                pl.BlockSpec((Hp, Hp), lambda i: (0, 0)),   # w2 (resident)
                pl.BlockSpec((1, Hp), lambda i: (0, 0)),    # b2
                pl.BlockSpec((Hp, Np), lambda i: (0, 0)),   # w3 (resident)
                pl.BlockSpec((1, Np), lambda i: (0, 0)),    # b3
            ],
            out_specs=pl.BlockSpec((bm, Np), lambda i: (i, 0)),
        ),
        compiler_params=pltpu.CompilerParams(
            dimension_semantics=("parallel",)),
    )(x, w1p, b1p, w2p, b2p, w3p, b3p)
    return out[:M, :out_dim]


# ----------------------------------------------------------------------------
# Full LNN forward
# ----------------------------------------------------------------------------
@functools.partial(jax.jit, static_argnames=("use_bf16", "conv_block_m", "block_batch"))
def lnn_forward(x_nchw, params, *, use_bf16=True, conv_block_m=256, block_batch=256):
    """LNN forward. x_nchw: (B, C, H, W). params use PyTorch layouts:
    conv*_w (Cout, Cin, 3, 3), conv*_b (Cout,), fc*_w (out, in), fc*_b (out,)."""
    cd = jnp.bfloat16 if use_bf16 else jnp.float32
    h = jnp.transpose(x_nchw, (0, 2, 3, 1)).astype(cd)       # -> NHWC

    for idx, stride in ((1, 1), (2, 2), (3, 2)):
        w = params[f"conv{idx}_w"]
        b = params[f"conv{idx}_b"]
        patches, (B, Ho, Wo) = _im2col_3x3(h, stride)         # (M, 9*Cin)
        wm = jnp.transpose(w, (2, 3, 1, 0)).reshape(-1, w.shape[0])  # (9*Cin, Cout)
        Kp = _round_up(patches.shape[1], 16)                  # sublane-friendly K
        patches = _pad_dim(patches, 1, Kp)
        wm = _pad_dim(wm, 0, Kp)
        conv_out = _linear_relu_pallas(
            patches, wm.astype(cd), b.reshape(1, -1).astype(jnp.float32),
            apply_relu=True, out_dtype=cd, block_m=conv_block_m)
        h = conv_out.reshape(B, Ho, Wo, -1)

    # Flatten in NHWC order; the fc1 weight columns are permuted inside _ncp_pallas
    # (one batch-independent layout fix instead of transposing activations).
    B, Ho, Wo, C = h.shape
    flat = h.reshape(B, Ho * Wo * C)
    return _ncp_pallas(flat, params, (C, Ho, Wo), cd, block_batch)


# ----------------------------------------------------------------------------
# Parameter init (deterministic, PyTorch-style uniform bounds)
# ----------------------------------------------------------------------------
def init_lnn_params(key, in_channels=3, num_classes=10, img_size=32, hidden_size=128):
    def conv_init(k, cout, cin):
        kw, kb = jax.random.split(k)
        bound = 1.0 / jnp.sqrt(jnp.float32(cin * 9))
        w = jax.random.uniform(kw, (cout, cin, 3, 3), jnp.float32, -bound, bound)
        b = jax.random.uniform(kb, (cout,), jnp.float32, -bound, bound)
        return w, b

    def linear_init(k, fout, fin):
        kw, kb = jax.random.split(k)
        bound = 1.0 / jnp.sqrt(jnp.float32(fin))
        w = jax.random.uniform(kw, (fout, fin), jnp.float32, -bound, bound)
        b = jax.random.uniform(kb, (fout,), jnp.float32, -bound, bound)
        return w, b

    keys = jax.random.split(key, 6)
    size = img_size
    for _ in range(2):                       # two stride-2 convs
        size = (size + 2 - 3) // 2 + 1
    ncp_in = 64 * size * size

    p = {}
    p["conv1_w"], p["conv1_b"] = conv_init(keys[0], 16, in_channels)
    p["conv2_w"], p["conv2_b"] = conv_init(keys[1], 32, 16)
    p["conv3_w"], p["conv3_b"] = conv_init(keys[2], 64, 32)
    p["fc1_w"], p["fc1_b"] = linear_init(keys[3], hidden_size, ncp_in)
    p["fc2_w"], p["fc2_b"] = linear_init(keys[4], hidden_size, hidden_size)
    p["fc3_w"], p["fc3_b"] = linear_init(keys[5], num_classes, hidden_size)
    return p


# ----------------------------------------------------------------------------
# Pure-JAX reference (same bf16 operand / f32 accumulation numerics, PyTorch order)
# ----------------------------------------------------------------------------
def lnn_reference(x_nchw, params, use_bf16=True):
    cd = jnp.bfloat16 if use_bf16 else jnp.float32
    h = x_nchw.astype(cd)
    for idx, stride in ((1, 1), (2, 2), (3, 2)):
        w = params[f"conv{idx}_w"].astype(cd)
        b = params[f"conv{idx}_b"].astype(jnp.float32)
        out = lax.conv_general_dilated(
            h, w, window_strides=(stride, stride), padding=((1, 1), (1, 1)),
            dimension_numbers=("NCHW", "OIHW", "NCHW"),
            preferred_element_type=jnp.float32)
        h = jnp.maximum(out + b.reshape(1, -1, 1, 1), 0.0).astype(cd)
    flat = h.reshape(h.shape[0], -1)          # PyTorch NCHW flatten order

    def lin(z, wk, bk):
        return jnp.dot(z.astype(cd), params[wk].T.astype(cd),
                       preferred_element_type=jnp.float32) \
            + params[bk].astype(jnp.float32)

    z = jnp.maximum(lin(flat, "fc1_w", "fc1_b"), 0.0)
    z = jnp.maximum(lin(z, "fc2_w", "fc2_b"), 0.0)
    return lin(z, "fc3_w", "fc3_b")


if __name__ == "__main__":
    # Small demo shapes consistent with the module defaults:
    # in_channels=3, num_classes=10, img_size=32, hidden_size=128, batch=4.
    batch, in_ch, img_size, hidden, num_cls = 4, 3, 32, 128, 10

    key = jax.random.PRNGKey(0)
    kx, kp = jax.random.split(key)
    x = jax.random.normal(kx, (batch, in_ch, img_size, img_size), jnp.float32)
    params = init_lnn_params(kp, in_ch, num_cls, img_size, hidden)

    out = lnn_forward(x, params)             # bf16 operands, f32 accumulation
    out = jax.block_until_ready(out)
    assert out.shape == (batch, num_cls)
    assert bool(jnp.all(jnp.isfinite(out)))

    ref = lnn_reference(x, params, use_bf16=True)
    max_err = float(jnp.max(jnp.abs(out - ref)))
    assert jnp.allclose(out, ref, atol=2e-2, rtol=2e-2), f"max abs err {max_err}"

    print("KERNEL_OK")
</pallas_src>

<mosaic_0001>
module attributes {stable_mosaic.version = 11 : i64} {
  func.func @_linear_kernel(%arg0: i32, %arg1: memref<256x32xbf16, #tpu.memory_space<vmem>>, %arg2: memref<32x16xbf16, #tpu.memory_space<vmem>>, %arg3: memref<1x16xf32, #tpu.memory_space<vmem>>, %arg4: memref<256x16xbf16, #tpu.memory_space<vmem>>) attributes {dimension_semantics = [#tpu.dimension_semantics<parallel>], iteration_bounds = array<i64: 16>, scalar_prefetch = 0 : i64, scratch_operands = 0 : i64, tpu.core_type = #tpu.core_type<tc>, window_params = [{transform_indices = @transform_0, window_bounds = array<i64: 256, 32>}, {pipeline_mode = #tpu.pipeline_mode<synchronous>, transform_indices = @transform_1, window_bounds = array<i64: 32, 16>}, {pipeline_mode = #tpu.pipeline_mode<synchronous>, transform_indices = @transform_2, window_bounds = array<i64: 1, 16>}, {transform_indices = @transform_3, window_bounds = array<i64: 256, 16>}]} {
    %c0 = arith.constant 0 : index
    %c0_0 = arith.constant 0 : index
    %0 = vector.load %arg1[%c0, %c0_0] : memref<256x32xbf16, #tpu.memory_space<vmem>>, vector<256x32xbf16>
    %c0_1 = arith.constant 0 : index
    %c0_2 = arith.constant 0 : index
    %1 = vector.load %arg2[%c0_1, %c0_2] : memref<32x16xbf16, #tpu.memory_space<vmem>>, vector<32x16xbf16>
    %cst = arith.constant dense<0.000000e+00> : vector<256x16xf32>
    %2 = tpu.matmul %0, %1, %cst {dimension_numbers = #tpu.dot_dimension_numbers<[1], [0], [0], [1], [0, 0, 1, 1], [], []>} : vector<256x32xbf16>, vector<32x16xbf16>, vector<256x16xf32> -> vector<256x16xf32>
    %c0_3 = arith.constant 0 : index
    %c0_4 = arith.constant 0 : index
    %3 = vector.load %arg3[%c0_3, %c0_4] : memref<1x16xf32, #tpu.memory_space<vmem>>, vector<1x16xf32>
    %4 = vector.broadcast %3 : vector<1x16xf32> to vector<256x16xf32>
    %5 = arith.addf %2, %4 : vector<256x16xf32>
    %cst_5 = arith.constant 0.000000e+00 : f32
    %6 = vector.broadcast %cst_5 : f32 to vector<256x16xf32>
    %7 = arith.maximumf %5, %6 : vector<256x16xf32>
    %8 = arith.truncf %7 : vector<256x16xf32> to vector<256x16xbf16>
    %c0_6 = arith.constant 0 : index
    %c0_7 = arith.constant 0 : index
    %9 = vector.load %arg4[%c0_6, %c0_7] : memref<256x16xbf16, #tpu.memory_space<vmem>>, vector<256x16xbf16>
    tpu.vector_store %arg4[%c0_6, %c0_7], %8 {strides = array<i32>} : memref<256x16xbf16, #tpu.memory_space<vmem>>, vector<256x16xbf16>,
    return
  }
  func.func @transform_0(%arg0: i32) -> (i32, i32) {
    %c0_i32 = arith.constant 0 : i32
    %c0_i32_0 = arith.constant 0 : i32
    return %arg0, %c0_i32 : i32, i32
  }
  func.func @transform_1(%arg0: i32) -> (i32, i32) {
    %c0_i32 = arith.constant 0 : i32
    %c0_i32_0 = arith.constant 0 : i32
    %c0_i32_1 = arith.constant 0 : i32
    return %c0_i32, %c0_i32_0 : i32, i32
  }
  func.func @transform_2(%arg0: i32) -> (i32, i32) {
    %c0_i32 = arith.constant 0 : i32
    %c0_i32_0 = arith.constant 0 : i32
    %c0_i32_1 = arith.constant 0 : i32
    return %c0_i32, %c0_i32_0 : i32, i32
  }
  func.func @transform_3(%arg0: i32) -> (i32, i32) {
    %c0_i32 = arith.constant 0 : i32
    %c0_i32_0 = arith.constant 0 : i32
    return %arg0, %c0_i32 : i32, i32
  }
}

module attributes {stable_mosaic.version = 11 : i64} {
  func.func @_linear_kernel(%arg0: i32, %arg1: memref<256x144xbf16, #tpu.memory_space<vmem>>, %arg2: memref<144x32xbf16, #tpu.memory_space<vmem>>, %arg3: memref<1x32xf32, #tpu.memory_space<vmem>>, %arg4: memref<256x32xbf16, #tpu.memory_space<vmem>>) attributes {dimension_semantics = [#tpu.dimension_semantics<parallel>], iteration_bounds = array<i64: 4>, scalar_prefetch = 0 : i64, scratch_operands = 0 : i64, tpu.core_type = #tpu.core_type<tc>, window_params = [{transform_indices = @transform_0, window_bounds = array<i64: 256, 144>}, {pipeline_mode = #tpu.pipeline_mode<synchronous>, transform_indices = @transform_1, window_bounds = array<i64: 144, 32>}, {pipeline_mode = #tpu.pipeline_mode<synchronous>, transform_indices = @transform_2, window_bounds = array<i64: 1, 32>}, {transform_indices = @transform_3, window_bounds = array<i64: 256, 32>}]} {
    %c0 = arith.constant 0 : index
    %c0_0 = arith.constant 0 : index
    %0 = vector.load %arg1[%c0, %c0_0] : memref<256x144xbf16, #tpu.memory_space<vmem>>, vector<256x144xbf16>
    %c0_1 = arith.constant 0 : index
    %c0_2 = arith.constant 0 : index
    %1 = vector.load %arg2[%c0_1, %c0_2] : memref<144x32xbf16, #tpu.memory_space<vmem>>, vector<144x32xbf16>
    %cst = arith.constant dense<0.000000e+00> : vector<256x32xf32>
    %2 = tpu.matmul %0, %1, %cst {dimension_numbers = #tpu.dot_dimension_numbers<[1], [0], [0], [1], [0, 0, 1, 1], [], []>} : vector<256x144xbf16>, vector<144x32xbf16>, vector<256x32xf32> -> vector<256x32xf32>
    %c0_3 = arith.constant 0 : index
    %c0_4 = arith.constant 0 : index
    %3 = vector.load %arg3[%c0_3, %c0_4] : memref<1x32xf32, #tpu.memory_space<vmem>>, vector<1x32xf32>
    %4 = vector.broadcast %3 : vector<1x32xf32> to vector<256x32xf32>
    %5 = arith.addf %2, %4 : vector<256x32xf32>
    %cst_5 = arith.constant 0.000000e+00 : f32
    %6 = vector.broadcast %cst_5 : f32 to vector<256x32xf32>
    %7 = arith.maximumf %5, %6 : vector<256x32xf32>
    %8 = arith.truncf %7 : vector<256x32xf32> to vector<256x32xbf16>
    %c0_6 = arith.constant 0 : index
    %c0_7 = arith.constant 0 : index
    %9 = vector.load %arg4[%c0_6, %c0_7] : memref<256x32xbf16, #tpu.memory_space<vmem>>, vector<256x32xbf16>
    tpu.vector_store %arg4[%c0_6, %c0_7], %8 {strides = array<i32>} : memref<256x32xbf16, #tpu.memory_space<vmem>>, vector<256x32xbf16>,
    return
  }
  func.func @transform_0(%arg0: i32) -> (i32, i32) {
    %c0_i32 = arith.constant 0 : i32
    %c0_i32_0 = arith.constant 0 : i32
    return %arg0, %c0_i32 : i32, i32
  }
  func.func @transform_1(%arg0: i32) -> (i32, i32) {
    %c0_i32 = arith.constant 0 : i32
    %c0_i32_0 = arith.constant 0 : i32
    %c0_i32_1 = arith.constant 0 : i32
    return %c0_i32, %c0_i32_0 : i32, i32
  }
  func.func @transform_2(%arg0: i32) -> (i32, i32) {
    %c0_i32 = arith.constant 0 : i32
    %c0_i32_0 = arith.constant 0 : i32
    %c0_i32_1 = arith.constant 0 : i32
    return %c0_i32, %c0_i32_0 : i32, i32
  }
  func.func @transform_3(%arg0: i32) -> (i32, i32) {
    %c0_i32 = arith.constant 0 : i32
    %c0_i32_0 = arith.constant 0 : i32
    return %arg0, %c0_i32 : i32, i32
  }
}

module attributes {stable_mosaic.version = 11 : i64} {
  func.func @_linear_kernel(%arg0: i32, %arg1: memref<256x288xbf16, #tpu.memory_space<vmem>>, %arg2: memref<288x64xbf16, #tpu.memory_space<vmem>>, %arg3: memref<1x64xf32, #tpu.memory_space<vmem>>, %arg4: memref<256x64xbf16, #tpu.memory_space<vmem>>) attributes {dimension_semantics = [#tpu.dimension_semantics<parallel>], iteration_bounds = array<i64: 1>, scalar_prefetch = 0 : i64, scratch_operands = 0 : i64, tpu.core_type = #tpu.core_type<tc>, window_params = [{transform_indices = @transform_0, window_bounds = array<i64: 256, 288>}, {pipeline_mode = #tpu.pipeline_mode<synchronous>, transform_indices = @transform_1, window_bounds = array<i64: 288, 64>}, {pipeline_mode = #tpu.pipeline_mode<synchronous>, transform_indices = @transform_2, window_bounds = array<i64: 1, 64>}, {transform_indices = @transform_3, window_bounds = array<i64: 256, 64>}]} {
    %c0 = arith.constant 0 : index
    %c0_0 = arith.constant 0 : index
    %0 = vector.load %arg1[%c0, %c0_0] : memref<256x288xbf16, #tpu.memory_space<vmem>>, vector<256x288xbf16>
    %c0_1 = arith.constant 0 : index
    %c0_2 = arith.constant 0 : index
    %1 = vector.load %arg2[%c0_1, %c0_2] : memref<288x64xbf16, #tpu.memory_space<vmem>>, vector<288x64xbf16>
    %cst = arith.constant dense<0.000000e+00> : vector<256x64xf32>
    %2 = tpu.matmul %0, %1, %cst {dimension_numbers = #tpu.dot_dimension_numbers<[1], [0], [0], [1], [0, 0, 1, 1], [], []>} : vector<256x288xbf16>, vector<288x64xbf16>, vector<256x64xf32> -> vector<256x64xf32>
    %c0_3 = arith.constant 0 : index
    %c0_4 = arith.constant 0 : index
    %3 = vector.load %arg3[%c0_3, %c0_4] : memref<1x64xf32, #tpu.memory_space<vmem>>, vector<1x64xf32>
    %4 = vector.broadcast %3 : vector<1x64xf32> to vector<256x64xf32>
    %5 = arith.addf %2, %4 : vector<256x64xf32>
    %cst_5 = arith.constant 0.000000e+00 : f32
    %6 = vector.broadcast %cst_5 : f32 to vector<256x64xf32>
    %7 = arith.maximumf %5, %6 : vector<256x64xf32>
    %8 = arith.truncf %7 : vector<256x64xf32> to vector<256x64xbf16>
    %c0_6 = arith.constant 0 : index
    %c0_7 = arith.constant 0 : index
    %9 = vector.load %arg4[%c0_6, %c0_7] : memref<256x64xbf16, #tpu.memory_space<vmem>>, vector<256x64xbf16>
    tpu.vector_store %arg4[%c0_6, %c0_7], %8 {strides = array<i32>} : memref<256x64xbf16, #tpu.memory_space<vmem>>, vector<256x64xbf16>,
    return
  }
  func.func @transform_0(%arg0: i32) -> (i32, i32) {
    %c0_i32 = arith.constant 0 : i32
    %c0_i32_0 = arith.constant 0 : i32
    return %arg0, %c0_i32 : i32, i32
  }
  func.func @transform_1(%arg0: i32) -> (i32, i32) {
    %c0_i32 = arith.constant 0 : i32
    %c0_i32_0 = arith.constant 0 : i32
    %c0_i32_1 = arith.constant 0 : i32
    return %c0_i32, %c0_i32_0 : i32, i32
  }
  func.func @transform_2(%arg0: i32) -> (i32, i32) {
    %c0_i32 = arith.constant 0 : i32
    %c0_i32_0 = arith.constant 0 : i32
    %c0_i32_1 = arith.constant 0 : i32
    return %c0_i32, %c0_i32_0 : i32, i32
  }
  func.func @transform_3(%arg0: i32) -> (i32, i32) {
    %c0_i32 = arith.constant 0 : i32
    %c0_i32_0 = arith.constant 0 : i32
    return %arg0, %c0_i32 : i32, i32
  }
}

module attributes {stable_mosaic.version = 11 : i64} {
  func.func @_ncp_kernel(%arg0: i32, %arg1: memref<16x4096xbf16, #tpu.memory_space<vmem>>, %arg2: memref<4096x128xbf16, #tpu.memory_space<vmem>>, %arg3: memref<1x128xf32, #tpu.memory_space<vmem>>, %arg4: memref<128x128xbf16, #tpu.memory_space<vmem>>, %arg5: memref<1x128xf32, #tpu.memory_space<vmem>>, %arg6: memref<128x128xbf16, #tpu.memory_space<vmem>>, %arg7: memref<1x128xf32, #tpu.memory_space<vmem>>, %arg8: memref<16x128xf32, #tpu.memory_space<vmem>>) attributes {dimension_semantics = [#tpu.dimension_semantics<parallel>], iteration_bounds = array<i64: 1>, scalar_prefetch = 0 : i64, scratch_operands = 0 : i64, tpu.core_type = #tpu.core_type<tc>, window_params = [{transform_indices = @transform_0, window_bounds = array<i64: 16, 4096>}, {pipeline_mode = #tpu.pipeline_mode<synchronous>, transform_indices = @transform_1, window_bounds = array<i64: 4096, 128>}, {pipeline_mode = #tpu.pipeline_mode<synchronous>, transform_indices = @transform_2, window_bounds = array<i64: 1, 128>}, {pipeline_mode = #tpu.pipeline_mode<synchronous>, transform_indices = @transform_3, window_bounds = array<i64: 128, 128>}, {pipeline_mode = #tpu.pipeline_mode<synchronous>, transform_indices = @transform_4, window_bounds = array<i64: 1, 128>}, {pipeline_mode = #tpu.pipeline_mode<synchronous>, transform_indices = @transform_5, window_bounds = array<i64: 128, 128>}, {pipeline_mode = #tpu.pipeline_mode<synchronous>, transform_indices = @transform_6, window_bounds = array<i64: 1, 128>}, {transform_indices = @transform_7, window_bounds = array<i64: 16, 128>}]} {
    %c0 = arith.constant 0 : index
    %c0_0 = arith.constant 0 : index
    %0 = vector.load %arg1[%c0, %c0_0] : memref<16x4096xbf16, #tpu.memory_space<vmem>>, vector<16x4096xbf16>
    %c0_1 = arith.constant 0 : index
    %c0_2 = arith.constant 0 : index
    %1 = vector.load %arg2[%c0_1, %c0_2] : memref<4096x128xbf16, #tpu.memory_space<vmem>>, vector<4096x128xbf16>
    %cst = arith.constant dense<0.000000e+00> : vector<16x128xf32>
    %2 = tpu.matmul %0, %1, %cst {dimension_numbers = #tpu.dot_dimension_numbers<[1], [0], [0], [1], [0, 0, 1, 1], [], []>} : vector<16x4096xbf16>, vector<4096x128xbf16>, vector<16x128xf32> -> vector<16x128xf32>
    %c0_3 = arith.constant 0 : index
    %c0_4 = arith.constant 0 : index
    %3 = vector.load %arg3[%c0_3, %c0_4] : memref<1x128xf32, #tpu.memory_space<vmem>>, vector<1x128xf32>
    %4 = vector.broadcast %3 : vector<1x128xf32> to vector<16x128xf32>
    %5 = arith.addf %2, %4 : vector<16x128xf32>
    %cst_5 = arith.constant 0.000000e+00 : f32
    %6 = vector.broadcast %cst_5 : f32 to vector<16x128xf32>
    %7 = arith.maximumf %5, %6 : vector<16x128xf32>
    %8 = arith.truncf %7 : vector<16x128xf32> to vector<16x128xbf16>
    %c0_6 = arith.constant 0 : index
    %c0_7 = arith.constant 0 : index
    %9 = vector.load %arg4[%c0_6, %c0_7] : memref<128x128xbf16, #tpu.memory_space<vmem>>, vector<128x128xbf16>
    %cst_8 = arith.constant dense<0.000000e+00> : vector<16x128xf32>
    %10 = tpu.matmul %8, %9, %cst_8 {dimension_numbers = #tpu.dot_dimension_numbers<[1], [0], [0], [1], [0, 0, 1, 1], [], []>} : vector<16x128xbf16>, vector<128x128xbf16>, vector<16x128xf32> -> vector<16x128xf32>
    %c0_9 = arith.constant 0 : index
    %c0_10 = arith.constant 0 : index
    %11 = vector.load %arg5[%c0_9, %c0_10] : memref<1x128xf32, #tpu.memory_space<vmem>>, vector<1x128xf32>
    %12 = vector.broadcast %11 : vector<1x128xf32> to vector<16x128xf32>
    %13 = arith.addf %10, %12 : vector<16x128xf32>
    %cst_11 = arith.constant 0.000000e+00 : f32
    %14 = vector.broadcast %cst_11 : f32 to vector<16x128xf32>
    %15 = arith.maximumf %13, %14 : vector<16x128xf32>
    %16 = arith.truncf %15 : vector<16x128xf32> to vector<16x128xbf16>
    %c0_12 = arith.constant 0 : index
    %c0_13 = arith.constant 0 : index
    %17 = vector.load %arg6[%c0_12, %c0_13] : memref<128x128xbf16, #tpu.memory_space<vmem>>, vector<128x128xbf16>
    %cst_14 = arith.constant dense<0.000000e+00> : vector<16x128xf32>
    %18 = tpu.matmul %16, %17, %cst_14 {dimension_numbers = #tpu.dot_dimension_numbers<[1], [0], [0], [1], [0, 0, 1, 1], [], []>} : vector<16x128xbf16>, vector<128x128xbf16>, vector<16x128xf32> -> vector<16x128xf32>
    %c0_15 = arith.constant 0 : index
    %c0_16 = arith.constant 0 : index
    %19 = vector.load %arg7[%c0_15, %c0_16] : memref<1x128xf32, #tpu.memory_space<vmem>>, vector<1x128xf32>
    %20 = vector.broadcast %19 : vector<1x128xf32> to vector<16x128xf32>
    %21 = arith.addf %18, %20 : vector<16x128xf32>
    %c0_17 = arith.constant 0 : index
    %c0_18 = arith.constant 0 : index
    %22 = vector.load %arg8[%c0_17, %c0_18] : memref<16x128xf32, #tpu.memory_space<vmem>>, vector<16x128xf32>
    tpu.vector_store %arg8[%c0_17, %c0_18], %21 {strides = array<i32>} : memref<16x128xf32, #tpu.memory_space<vmem>>, vector<16x128xf32>,
    return
  }
  func.func @transform_0(%arg0: i32) -> (i32, i32) {
    %c0_i32 = arith.constant 0 : i32
    %c0_i32_0 = arith.constant 0 : i32
    return %arg0, %c0_i32 : i32, i32
  }
  func.func @transform_1(%arg0: i32) -> (i32, i32) {
    %c0_i32 = arith.constant 0 : i32
    %c0_i32_0 = arith.constant 0 : i32
    %c0_i32_1 = arith.constant 0 : i32
    return %c0_i32, %c0_i32_0 : i32, i32
  }
  func.func @transform_2(%arg0: i32) -> (i32, i32) {
    %c0_i32 = arith.constant 0 : i32
    %c0_i32_0 = arith.constant 0 : i32
    %c0_i32_1 = arith.constant 0 : i32
    return %c0_i32, %c0_i32_0 : i32, i32
  }
  func.func @transform_3(%arg0: i32) -> (i32, i32) {
    %c0_i32 = arith.constant 0 : i32
    %c0_i32_0 = arith.constant 0 : i32
    %c0_i32_1 = arith.constant 0 : i32
    return %c0_i32, %c0_i32_0 : i32, i32
  }
  func.func @transform_4(%arg0: i32) -> (i32, i32) {
    %c0_i32 = arith.constant 0 : i32
    %c0_i32_0 = arith.constant 0 : i32
    %c0_i32_1 = arith.constant 0 : i32
    return %c0_i32, %c0_i32_0 : i32, i32
  }
  func.func @transform_5(%arg0: i32) -> (i32, i32) {
    %c0_i32 = arith.constant 0 : i32
    %c0_i32_0 = arith.constant 0 : i32
    %c0_i32_1 = arith.constant 0 : i32
    return %c0_i32, %c0_i32_0 : i32, i32
  }
  func.func @transform_6(%arg0: i32) -> (i32, i32) {
    %c0_i32 = arith.constant 0 : i32
    %c0_i32_0 = arith.constant 0 : i32
    %c0_i32_1 = arith.constant 0 : i32
    return %c0_i32, %c0_i32_0 : i32, i32
  }
  func.func @transform_7(%arg0: i32) -> (i32, i32) {
    %c0_i32 = arith.constant 0 : i32
    %c0_i32_0 = arith.constant 0 : i32
    return %arg0, %c0_i32 : i32, i32
  }
}

</mosaic_0001>

<llo_original>
// kernel: lnn_forward.4
$region0: #{lnn_forward.4}
  #allocation0 [shape = 'u32[]', space=smem, size = 0x4, offset = 0x4, fixed_abs, tag = 'smem constant byte address 0x4 - core index']
  #allocation1 [shape = 'u32[144,128]{1,0:T(1,128)}', space=vmem, size = 0x12000, scoped, tag = 'internal scratch']
  %s0 = inlined_call_operand.vmem [shape: bf16[4096,32], index: 0, kind: input, shape index: {}]
  %s1 = inlined_call_operand.vmem [shape: bf16[32,16], index: 1, kind: input, shape index: {}]
  %s2 = inlined_call_operand.vmem [shape: f32[1,16], index: 2, kind: input, shape index: {}]
  %s3 = inlined_call_operand.vmem [shape: bf16[4096,16], index: 3, kind: output, shape index: {}]
  %s4 = sld [smem:[#allocation0]]
  $region45: #{lnn_forward.4} parent=0
    _
  %s6 = ssub.s32 1, %s4
  %s7 = scalar_select 0, %s6, %s4
  loop: start=0, step=1, limit=18
  $region2: #{lnn_forward.4} parent=0 // loop_pre_header
    _
  $region3: #{lnn_forward.4} parent=0 // loop_header
    %s9 = sphi 0, %s13
    %p10 = scmp.ge.s32.totalorder %s9, 18
    %s19 = sphi 0, %s21
    %s22 = sphi 0, %s19
    %s23 = sphi 0, %s22
    %s39 = sphi 0, %s23
    %s43 = sphi 0, %s43
    %s45 = sphi 0, %s43
    %s46 = sphi 0, %s45
    %s60 = sphi 0, %s46
    %s64 = sphi 0, %s64
    %s66 = sphi 0, %s64
    %s67 = sphi 0, %s66
    %s81 = sphi 0, %s67
    %s87 = sphi 0, %s89
    %s90 = sphi 0, %s87
    %s91 = sphi 0, %s90
    %s107 = sphi 0, %s91
  $region4: #{lnn_forward.4} parent=0 // loop_header_branch
    %12 = sbr.rel (%p10) target = $region8
  $region5: #{lnn_forward.4} parent=0 // loop_body
    %s14 = ssub.s32 %s9, 1
    %s15 = ssub.s32 %s9, 2
    %s16 = sadd.s32 %s9, 1
    %s17 = ssub.s32 %s9, %s16
    %p18 = scmp.eq.s32.totalorder %s17, 0
    %s20 = sadd.s32 %s19, 1
    %s21 = scalar_select %p18, %s19, %s20
    %p24 = pneg %p18
    %p25 = scmp.eq.s32.totalorder %s9, 15
    %p26 = por %p24, %p25
    %p27 = scmp.ne.s32.totalorder %s19, %s22
    %p28 = scmp.eq.s32.totalorder %s9, 0
    %p29 = por %p27, %p28
    %p30 = scmp.ne.s32.totalorder %s19, %s22
    %p31 = scmp.eq.s32.totalorder %s14, 15
    %p32 = por %p30, %p31
    %p33 = scmp.ne.s32.totalorder %s22, %s23
    %p34 = scmp.eq.s32.totalorder %s14, 0
    %p35 = por %p33, %p34
    %p36 = scmp.ne.s32.totalorder %s22, %s23
    %p37 = scmp.eq.s32.totalorder %s15, 15
    %p38 = por %p36, %p37
    %p40 = scmp.ne.s32.totalorder %s23, %s39
    %p41 = scmp.eq.s32.totalorder %s15, 0
    %p42 = por %p40, %p41
    %s44 = sadd.s32 %s43, 1
    %p47 = scmp.eq.s32.totalorder %s9, 15
    %p48 = scmp.ne.s32.totalorder %s43, %s45
    %p49 = scmp.eq.s32.totalorder %s9, 0
    %p50 = por %p48, %p49
    %p51 = scmp.ne.s32.totalorder %s43, %s45
    %p52 = scmp.eq.s32.totalorder %s14, 15
    %p53 = por %p51, %p52
    %p54 = scmp.ne.s32.totalorder %s45, %s46
    %p55 = scmp.eq.s32.totalorder %s14, 0
    %p56 = por %p54, %p55
    %p57 = scmp.ne.s32.totalorder %s45, %s46
    %p58 = scmp.eq.s32.totalorder %s15, 15
    %p59 = por %p57, %p58
    %p61 = scmp.ne.s32.totalorder %s46, %s60
    %p62 = scmp.eq.s32.totalorder %s15, 0
    %p63 = por %p61, %p62
    %s65 = sadd.s32 %s64, 1
    %p68 = scmp.eq.s32.totalorder %s9, 15
    %p69 = scmp.ne.s32.totalorder %s64, %s66
    %p70 = scmp.eq.s32.totalorder %s9, 0
    %p71 = por %p69, %p70
    %p72 = scmp.ne.s32.totalorder %s64, %s66
    %p73 = scmp.eq.s32.totalorder %s14, 15
    %p74 = por %p72, %p73
    %p75 = scmp.ne.s32.totalorder %s66, %s67
    %p76 = scmp.eq.s32.totalorder %s14, 0
    %p77 = por %p75, %p76
    %p78 = scmp.ne.s32.totalorder %s66, %s67
    %p79 = scmp.eq.s32.totalorder %s15, 15
    %p80 = por %p78, %p79
    %p82 = scmp.ne.s32.totalorder %s67, %s81
    %p83 = scmp.eq.s32.totalorder %s15, 0
    %p84 = por %p82, %p83
    %s85 = ssub.s32 %s9, %s16
    %p86 = scmp.eq.s32.totalorder %s85, 0
    %s88 = sadd.s32 %s87, 1
    %s89 = scalar_select %p86, %s87, %s88
    %p92 = pneg %p86
    %p93 = scmp.eq.s32.totalorder %s9, 15
    %p94 = por %p92, %p93
    %p95 = scmp.ne.s32.totalorder %s87, %s90
    %p96 = scmp.eq.s32.totalorder %s9, 0
    %p97 = por %p95, %p96
    %p98 = scmp.ne.s32.totalorder %s87, %s90
    %p99 = scmp.eq.s32.totalorder %s14, 15
    %p100 = por %p98, %p99
    %p101 = scmp.ne.s32.totalorder %s90, %s91
    %p102 = scmp.eq.s32.totalorder %s14, 0
    %p103 = por %p101, %p102
    %p104 = scmp.ne.s32.totalorder %s90, %s91
    %p105 = scmp.eq.s32.totalorder %s15, 15
    %p106 = por %p104, %p105
    %p108 = scmp.ne.s32.totalorder %s91, %s107
    %p109 = scmp.eq.s32.totalorder %s15, 0
    %p110 = por %p108, %p109
    %p111 = scmp.le.s32.totalorder 1, %s9
    %p112 = scmp.lt.s32.totalorder %s9, 17
    %p113 = pnand %p111, %p112
    %p114 = pneg %p113
    // Predicated region
    $region9: #{lnn_forward.4} parent=5 // pred_check
      _
    $region10: #{lnn_forward.4} parent=5 // pred_check_branch
      %116 = sbr.rel (%p113) target = $region12
    $region11: #{lnn_forward.4} parent=5 // pred_region
      %s117 = ssub.s32 %s9, 1
      // Predicated region
      $region13: #{lnn_forward.4} parent=11 // pred_check
        %p118 = pneg %p56
      $region14: #{lnn_forward.4} parent=11 // pred_check_branch
        %120 = sbr.rel (%p118) target = $region16
      $region15: #{lnn_forward.4} parent=11 // pred_region
        _
      $region16: #{lnn_forward.4} parent=11 // pred_fallthru
        _
      // Predicated region
      $region17: #{lnn_forward.4} parent=11 // pred_check
        %p121 = pneg %p77
      $region18: #{lnn_forward.4} parent=11 // pred_check_branch
        %123 = sbr.rel (%p121) target = $region20
      $region19: #{lnn_forward.4} parent=11 // pred_region
        _
      $region20: #{lnn_forward.4} parent=11 // pred_fallthru
        _
    $region12: #{lnn_forward.4} parent=5 // pred_fallthru
      _
    %p124 = scmp.lt.s32.totalorder %s9, 16
    // Predicated region
    $region21: #{lnn_forward.4} parent=5 // pred_check
      %p125 = pneg %p124
    $region22: #{lnn_forward.4} parent=5 // pred_check_branch
      %127 = sbr.rel (%p125) target = $region24
    $region23: #{lnn_forward.4} parent=5 // pred_region
      // Predicated region
      $region25: #{lnn_forward.4} parent=23 // pred_check
        %p128 = pneg %p29
      $region26: #{lnn_forward.4} parent=23 // pred_check_branch
        %130 = sbr.rel (%p128) target = $region28
      $region27: #{lnn_forward.4} parent=23 // pred_region
        %s131 = smul.u32 32, %s9
        %p132 = scmp.lt.s32.totalorder %s131, 511
        %s133 = scalar_select %p132, %s131, 511
        %s134 = smul.addr %s133, 4
        %s135 = scalar_lea.vmem %s0, %s134
        %s136 = smul.u32 32, %s9
      $region28: #{lnn_forward.4} parent=23 // pred_fallthru
        _
    $region24: #{lnn_forward.4} parent=5 // pred_fallthru
      _
    %p137 = scmp.le.s32.totalorder 1, %s9
    %p138 = scmp.lt.s32.totalorder %s9, 17
    %p139 = pnand %p137, %p138
    %p140 = pneg %p139
    // Predicated region
    $region29: #{lnn_forward.4} parent=5 // pred_check
      _
    $region30: #{lnn_forward.4} parent=5 // pred_check_branch
      %142 = sbr.rel (%p139) target = $region32
    $region31: #{lnn_forward.4} parent=5 // pred_region
      %s143 = ssub.s32 %s9, 1
      %s144 = smul.u32 32, %s14
      %p145 = scmp.lt.s32.totalorder %s144, 511
      %s146 = scalar_select %p145, %s144, 511
      %s147 = smul.addr %s146, 4
      %s148 = scalar_lea.vmem %s0, %s147
      %p149 = pneg %p35
      %p150 = pneg %p32
      %p151 = pneg %p56
      %p152 = pneg %p53
      %p153 = pneg %p77
      %p154 = pneg %p74
      %p155 = pneg %p103
      %p156 = pneg %p100
      %s157 = smul.u32 32, %s14
      %p158 = scmp.lt.s32.totalorder %s157, 511
      %s159 = scalar_select %p158, %s157, 511
      %s160 = smul.addr %s159, 4
      %s161 = scalar_lea.vmem %s3, %s160
      %s162 = smul.u32 32, %s14
      %p163 = scmp.lt.s32.totalorder %s162, 511
      %s164 = scalar_select %p163, %s162, 511
      %s165 = smul.addr %s164, 4
      %s166 = scalar_lea.vmem %s0, %s165
      %s167 = smul.u32 32, %s14
      %s168 = smul.u32 32, %s14
      %p169 = scmp.lt.s32.totalorder %s168, 511
      %s170 = scalar_select %p169, %s168, 511
      %s171 = smul.addr %s170, 4
      %s172 = scalar_lea.vmem %s3, %s171
      %s173 = smul.u32 32, %s14
      %v175 = vld [vmem:[%s166] sm:$0xf]
      %v176 = vld [vmem:[%s166 + $0x4] sm:$0xf]
      %v177 = vld [vmem:[%s166 + $0x8] sm:$0xf]
      %v178 = vld [vmem:[%s166 + $0xc] sm:$0xf]
      %v179 = vld [vmem:[%s166 + $0x10] sm:$0xf]
      %v180 = vld [vmem:[%s166 + $0x14] sm:$0xf]
      %v181 = vld [vmem:[%s166 + $0x18] sm:$0xf]
      %v182 = vld [vmem:[%s166 + $0x1c] sm:$0xf]
      %v183 = vld [vmem:[%s166 + $0x20] sm:$0xf]
      %v184 = vld [vmem:[%s166 + $0x24] sm:$0xf]
      %v185 = vld [vmem:[%s166 + $0x28] sm:$0xf]
      %v186 = vld [vmem:[%s166 + $0x2c] sm:$0xf]
      %v187 = vld [vmem:[%s166 + $0x30] sm:$0xf]
      %v188 = vld [vmem:[%s166 + $0x34] sm:$0xf]
      %v189 = vld [vmem:[%s166 + $0x38] sm:$0xf]
      %v190 = vld [vmem:[%s166 + $0x3c] sm:$0xf]
      %v191 = vld [vmem:[%s166 + $0x40] sm:$0xf]
      %v192 = vld [vmem:[%s166 + $0x44] sm:$0xf]
      %v193 = vld [vmem:[%s166 + $0x48] sm:$0xf]
      %v194 = vld [vmem:[%s166 + $0x4c] sm:$0xf]
      %v195 = vld [vmem:[%s166 + $0x50] sm:$0xf]
      %v196 = vld [vmem:[%s166 + $0x54] sm:$0xf]
      %v197 = vld [vmem:[%s166 + $0x58] sm:$0xf]
      %v198 = vld [vmem:[%s166 + $0x5c] sm:$0xf]
      %v199 = vld [vmem:[%s166 + $0x60] sm:$0xf]
      %v200 = vld [vmem:[%s166 + $0x64] sm:$0xf]
      %v201 = vld [vmem:[%s166 + $0x68] sm:$0xf]
      %v202 = vld [vmem:[%s166 + $0x6c] sm:$0xf]
      %v203 = vld [vmem:[%s166 + $0x70] sm:$0xf]
      %v204 = vld [vmem:[%s166 + $0x74] sm:$0xf]
      %v205 = vld [vmem:[%s166 + $0x78] sm:$0xf]
      %v206 = vld [vmem:[%s166 + $0x7c] sm:$0xf]
      %v207 = vld [vmem:[%s1] sm:$0xf]
      %v208 = vld [vmem:[%s1 + $0x4] sm:$0xf]
      %v209 = vld [vmem:[%s1 + $0x8] sm:$0xf]
      %v210 = vld [vmem:[%s1 + $0xc] sm:$0xf]
      %v211 = vld [vmem:[%s2] sm:$0x1]
      %v213 = vlaneseq
      %v214 = vshrl.u32 %v213, 7
      %v215 = vsub.s32 0, %v214
      %v216 = vrot.slane %v211, %v215
      %v250 = vunpack.c.l.b16 %v175
      %v251 = vunpack.c.l.b16 %v176
      %v252 = vunpack.c.l.b16 %v177
      %v253 = vunpack.c.l.b16 %v178
      %v254 = vunpack.c.l.b16 %v179
      %v255 = vunpack.c.l.b16 %v180
      %v256 = vunpack.c.l.b16 %v181
      %v257 = vunpack.c.l.b16 %v182
      %v258 = vunpack.c.l.b16 %v183
      %v259 = vunpack.c.l.b16 %v184
      %v260 = vunpack.c.l.b16 %v185
      %v261 = vunpack.c.l.b16 %v186
      %v262 = vunpack.c.l.b16 %v187
      %v263 = vunpack.c.l.b16 %v188
      %v264 = vunpack.c.l.b16 %v189
      %v265 = vunpack.c.l.b16 %v190
      %v266 = vunpack.c.l.b16 %v191
      %v267 = vunpack.c.l.b16 %v192
      %v268 = vunpack.c.l.b16 %v193
      %v269 = vunpack.c.l.b16 %v194
      %v270 = vunpack.c.l.b16 %v195
      %v271 = vunpack.c.l.b16 %v196
      %v272 = vunpack.c.l.b16 %v197
      %v273 = vunpack.c.l.b16 %v198
      %v274 = vunpack.c.l.b16 %v199
      %v275 = vunpack.c.l.b16 %v200
      %v276 = vunpack.c.l.b16 %v201
      %v277 = vunpack.c.l.b16 %v202
      %v278 = vunpack.c.l.b16 %v203
      %v279 = vunpack.c.l.b16 %v204
      %v280 = vunpack.c.l.b16 %v205
      %v281 = vunpack.c.l.b16 %v206
      %v282 = vpack.c.b16 %v251, %v250
      %v283 = vpack.c.b16 %v253, %v252
      %v284 = vpack.c.b16 %v255, %v254
      %v285 = vpack.c.b16 %v257, %v256
      %v286 = vpack.c.b16 %v259, %v258
      %v287 = vpack.c.b16 %v261, %v260
      %v288 = vpack.c.b16 %v263, %v262
      %v289 = vpack.c.b16 %v265, %v264
      %v290 = vpack.c.b16 %v267, %v266
      %v291 = vpack.c.b16 %v269, %v268
      %v292 = vpack.c.b16 %v271, %v270
      %v293 = vpack.c.b16 %v273, %v272
      %v294 = vpack.c.b16 %v275, %v274
      %v295 = vpack.c.b16 %v277, %v276
      %v296 = vpack.c.b16 %v279, %v278
      %v297 = vpack.c.b16 %v281, %v280
      %v302 = vunpack.c.l.b16 %v207
      %v303 = vunpack.c.l.b16 %v208
      %v304 = vunpack.c.l.b16 %v209
      %v305 = vunpack.c.l.b16 %v210
      %v306 = vpack.c.b16 %v303, %v302
      %v307 = vpack.c.b16 %v305, %v304
      %vm310 = vcmask 261120
      %v312 = vsel %vm310, %v282, 0
      %v315 = vsel %vm310, %v283, 0
      %v318 = vsel %vm310, %v284, 0
      %v321 = vsel %vm310, %v285, 0
      %v324 = vsel %vm310, %v286, 0
      %v327 = vsel %vm310, %v287, 0
      %v330 = vsel %vm310, %v288, 0
      %v333 = vsel %vm310, %v289, 0
      %v336 = vsel %vm310, %v290, 0
      %v339 = vsel %vm310, %v291, 0
      %v342 = vsel %vm310, %v292, 0
      %v345 = vsel %vm310, %v293, 0
      %v348 = vsel %vm310, %v294, 0
      %v351 = vsel %vm310, %v295, 0
      %v354 = vsel %vm310, %v296, 0
      %v357 = vsel %vm310, %v297, 0
      %359 = vmatprep.subr.bf16.mxu0 0
      %360 = vmatpush1.bf16.msra.mxu0 0
      %361 = vmatprep.subr.bf16.mxu0 0
      %362 = vmatpush1.bf16.msra.mxu0 0
      %363 = vmatprep.subr.bf16.mxu0 0
      %364 = vmatpush1.bf16.msra.mxu0 0
      %365 = vmatprep.subr.bf16.mxu0 0
      %366 = vmatpush1.bf16.msra.mxu0 0
      %367 = vmatprep.subr.bf16.mxu0 0
      %368 = vmatpush1.bf16.msra.mxu0 0
      %369 = vmatprep.subr.bf16.mxu0 0
      %370 = vmatpush1.bf16.msra.mxu0 0
      %371 = vmatprep.subr.bf16.mxu0 0
      %372 = vmatpush1.bf16.msra.mxu0 %v307
      %373 = vmatprep.subr.bf16.mxu0 0
      %374 = vmatpush1.bf16.msra.mxu0 %v306
      %375 = vmatprep.subr.bf16.mxu0 0
      %376 = vmatpush2.bf16.msra.mxu0 0
      %377 = vmatprep.subr.bf16.mxu0 0
      %378 = vmatpush2.bf16.msra.mxu0 0
      %379 = vmatprep.subr.bf16.mxu0 0
      %380 = vmatpush2.bf16.msra.mxu0 0
      %381 = vmatprep.subr.bf16.mxu0 0
      %382 = vmatpush2.bf16.msra.mxu0 0
      %383 = vmatprep.subr.bf16.mxu0 0
      %384 = vmatpush2.bf16.msra.mxu0 0
      %385 = vmatprep.subr.bf16.mxu0 0
      %386 = vmatpush2.bf16.msra.mxu0 0
      %387 = vmatprep.subr.bf16.mxu0 0
      %388 = vmatpush2.bf16.msra.mxu0 0
      %389 = vmatprep.subr.bf16.mxu0 0
      %390 = vmatpush2.bf16.msra.mxu0 0
      %391 = vmatprep.mubr.bf16.mxu0 0
      %392 = vmatmul.mubr.bf16.gmra.mxu0 %v312
      %v393 = vpop.f32.mrf.mxu0
      %v394 = vadd.f32 %v216, %v393
      %v395 = vpop.f32.mrf.mxu0
      %v396 = vpop.f32.mrf.mxu0
      %v397 = vadd.f32 %v216, %v396
      %v398 = vpop.f32.mrf.mxu0
      %399 = vmatprep.mubr.bf16.mxu0 0
      %400 = vmatmul.mubr.bf16.gmra.mxu0 %v315
      %v401 = vpop.f32.mrf.mxu0
      %v402 = vadd.f32 %v216, %v401
      %v403 = vpop.f32.mrf.mxu0
      %v404 = vpop.f32.mrf.mxu0
      %v405 = vadd.f32 %v216, %v404
      %v406 = vpop.f32.mrf.mxu0
      %407 = vmatprep.mubr.bf16.mxu0 0
      %408 = vmatmul.mubr.bf16.gmra.mxu0 %v318
      %v409 = vpop.f32.mrf.mxu0
      %v410 = vadd.f32 %v216, %v409
      %v411 = vpop.f32.mrf.mxu0
      %v412 = vpop.f32.mrf.mxu0
      %v413 = vadd.f32 %v216, %v412
      %v414 = vpop.f32.mrf.mxu0
      %415 = vmatprep.mubr.bf16.mxu0 0
      %416 = vmatmul.mubr.bf16.gmra.mxu0 %v321
      %v417 = vpop.f32.mrf.mxu0
      %v418 = vadd.f32 %v216, %v417
      %v419 = vpop.f32.mrf.mxu0
      %v420 = vpop.f32.mrf.mxu0
      %v421 = vadd.f32 %v216, %v420
      %v422 = vpop.f32.mrf.mxu0
      %423 = vmatprep.mubr.bf16.mxu0 0
      %424 = vmatmul.mubr.bf16.gmra.mxu0 %v324
      %v425 = vpop.f32.mrf.mxu0
      %v426 = vadd.f32 %v216, %v425
      %v427 = vpop.f32.mrf.mxu0
      %v428 = vpop.f32.mrf.mxu0
      %v429 = vadd.f32 %v216, %v428
      %v430 = vpop.f32.mrf.mxu0
      %431 = vmatprep.mubr.bf16.mxu0 0
      %432 = vmatmul.mubr.bf16.gmra.mxu0 %v327
      %v433 = vpop.f32.mrf.mxu0
      %v434 = vadd.f32 %v216, %v433
      %v435 = vpop.f32.mrf.mxu0
      %v436 = vpop.f32.mrf.mxu0
      %v437 = vadd.f32 %v216, %v436
      %v438 = vpop.f32.mrf.mxu0
      %439 = vmatprep.mubr.bf16.mxu0 0
      %440 = vmatmul.mubr.bf16.gmra.mxu0 %v330
      %v441 = vpop.f32.mrf.mxu0
      %v442 = vadd.f32 %v216, %v441
      %v443 = vpop.f32.mrf.mxu0
      %v444 = vpop.f32.mrf.mxu0
      %v445 = vadd.f32 %v216, %v444
      %v446 = vpop.f32.mrf.mxu0
      %447 = vmatprep.mubr.bf16.mxu0 0
      %448 = vmatmul.mubr.bf16.gmra.mxu0 %v333
      %v449 = vpop.f32.mrf.mxu0
      %v450 = vadd.f32 %v216, %v449
      %v451 = vpop.f32.mrf.mxu0
      %v452 = vpop.f32.mrf.mxu0
      %v453 = vadd.f32 %v216, %v452
      %v454 = vpop.f32.mrf.mxu0
      %455 = vmatprep.mubr.bf16.mxu0 0
      %456 = vmatmul.mubr.bf16.gmra.mxu0 %v336
      %v457 = vpop.f32.mrf.mxu0
      %v458 = vadd.f32 %v216, %v457
      %v459 = vpop.f32.mrf.mxu0
      %v460 = vpop.f32.mrf.mxu0
      %v461 = vadd.f32 %v216, %v460
      %v462 = vpop.f32.mrf.mxu0
      %463 = vmatprep.mubr.bf16.mxu0 0
      %464 = vmatmul.mubr.bf16.gmra.mxu0 %v339
      %v465 = vpop.f32.mrf.mxu0
      %v466 = vadd.f32 %v216, %v465
      %v467 = vpop.f32.mrf.mxu0
      %v468 = vpop.f32.mrf.mxu0
      %v469 = vadd.f32 %v216, %v468
      %v470 = vpop.f32.mrf.mxu0
      %471 = vmatprep.mubr.bf16.mxu0 0
      %472 = vmatmul.mubr.bf16.gmra.mxu0 %v342
      %v473 = vpop.f32.mrf.mxu0
      %v474 = vadd.f32 %v216, %v473
      %v475 = vpop.f32.mrf.mxu0
      %v476 = vpop.f32.mrf.mxu0
      %v477 = vadd.f32 %v216, %v476
      %v478 = vpop.f32.mrf.mxu0
      %479 = vmatprep.mubr.bf16.mxu0 0
      %480 = vmatmul.mubr.bf16.gmra.mxu0 %v345
      %v481 = vpop.f32.mrf.mxu0
      %v482 = vadd.f32 %v216, %v481
      %v483 = vpop.f32.mrf.mxu0
      %v484 = vpop.f32.mrf.mxu0
      %v485 = vadd.f32 %v216, %v484
      %v486 = vpop.f32.mrf.mxu0
      %487 = vmatprep.mubr.bf16.mxu0 0
      %488 = vmatmul.mubr.bf16.gmra.mxu0 %v348
      %v489 = vpop.f32.mrf.mxu0
      %v490 = vadd.f32 %v216, %v489
      %v491 = vpop.f32.mrf.mxu0
      %v492 = vpop.f32.mrf.mxu0
      %v493 = vadd.f32 %v216, %v492
      %v494 = vpop.f32.mrf.mxu0
      %495 = vmatprep.mubr.bf16.mxu0 0
      %496 = vmatmul.mubr.bf16.gmra.mxu0 %v351
      %v497 = vpop.f32.mrf.mxu0
      %v498 = vadd.f32 %v216, %v497
      %v499 = vpop.f32.mrf.mxu0
      %v500 = vpop.f32.mrf.mxu0
      %v501 = vadd.f32 %v216, %v500
      %v502 = vpop.f32.mrf.mxu0
      %503 = vmatprep.mubr.bf16.mxu0 0
      %504 = vmatmul.mubr.bf16.gmra.mxu0 %v354
      %v505 = vpop.f32.mrf.mxu0
      %v506 = vadd.f32 %v216, %v505
      %v507 = vpop.f32.mrf.mxu0
      %v508 = vpop.f32.mrf.mxu0
      %v509 = vadd.f32 %v216, %v508
      %v510 = vpop.f32.mrf.mxu0
      %511 = vmatprep.mubr.bf16.mxu0 0
      %512 = vmatmul.mubr.bf16.gmra.mxu0 %v357
      %v513 = vpop.f32.mrf.mxu0
      %v514 = vadd.f32 %v216, %v513
      %v515 = vpop.f32.mrf.mxu0
      %v516 = vpop.f32.mrf.mxu0
      %v517 = vadd.f32 %v216, %v516
      %v518 = vpop.f32.mrf.mxu0
      %519 = vdwg.mxu0
      %v520 = vmax.f32 %v394, 0.0
      %v521 = vmax.f32 %v397, 0.0
      %v522 = vmax.f32 %v402, 0.0
      %v523 = vmax.f32 %v405, 0.0
      %v524 = vmax.f32 %v410, 0.0
      %v525 = vmax.f32 %v413, 0.0
      %v526 = vmax.f32 %v418, 0.0
      %v527 = vmax.f32 %v421, 0.0
      %v528 = vmax.f32 %v426, 0.0
      %v529 = vmax.f32 %v429, 0.0
      %v530 = vmax.f32 %v434, 0.0
      %v531 = vmax.f32 %v437, 0.0
      %v532 = vmax.f32 %v442, 0.0
      %v533 = vmax.f32 %v445, 0.0
      %v534 = vmax.f32 %v450, 0.0
      %v535 = vmax.f32 %v453, 0.0
      %v536 = vmax.f32 %v458, 0.0
      %v537 = vmax.f32 %v461, 0.0
      %v538 = vmax.f32 %v466, 0.0
      %v539 = vmax.f32 %v469, 0.0
      %v540 = vmax.f32 %v474, 0.0
      %v541 = vmax.f32 %v477, 0.0
      %v542 = vmax.f32 %v482, 0.0
      %v543 = vmax.f32 %v485, 0.0
      %v544 = vmax.f32 %v490, 0.0
      %v545 = vmax.f32 %v493, 0.0
      %v546 = vmax.f32 %v498, 0.0
      %v547 = vmax.f32 %v501, 0.0
      %v548 = vmax.f32 %v506, 0.0
      %v549 = vmax.f32 %v509, 0.0
      %v550 = vmax.f32 %v514, 0.0
      %v551 = vmax.f32 %v517, 0.0
      %v552 = vpack.c.bf16 %v521, %v520
      %v553 = vpack.c.bf16 %v523, %v522
      %v554 = vpack.c.bf16 %v525, %v524
      %v555 = vpack.c.bf16 %v527, %v526
      %v556 = vpack.c.bf16 %v529, %v528
      %v557 = vpack.c.bf16 %v531, %v530
      %v558 = vpack.c.bf16 %v533, %v532
      %v559 = vpack.c.bf16 %v535, %v534
      %v560 = vpack.c.bf16 %v537, %v536
      %v561 = vpack.c.bf16 %v539, %v538
      %v562 = vpack.c.bf16 %v541, %v540
      %v563 = vpack.c.bf16 %v543, %v542
      %v564 = vpack.c.bf16 %v545, %v544
      %v565 = vpack.c.bf16 %v547, %v546
      %v566 = vpack.c.bf16 %v549, %v548
      %v567 = vpack.c.bf16 %v551, %v550
      %v584 = vunpack.c.l.b16 %v552
      %v585 = vunpack.c.h.b16 %v552
      %v586 = vunpack.c.l.b16 %v553
      %v587 = vunpack.c.h.b16 %v553
      %v588 = vunpack.c.l.b16 %v554
      %v589 = vunpack.c.h.b16 %v554
      %v590 = vunpack.c.l.b16 %v555
      %v591 = vunpack.c.h.b16 %v555
      %v592 = vunpack.c.l.b16 %v556
      %v593 = vunpack.c.h.b16 %v556
      %v594 = vunpack.c.l.b16 %v557
      %v595 = vunpack.c.h.b16 %v557
      %v596 = vunpack.c.l.b16 %v558
      %v597 = vunpack.c.h.b16 %v558
      %v598 = vunpack.c.l.b16 %v559
      %v599 = vunpack.c.h.b16 %v559
      %v600 = vunpack.c.l.b16 %v560
      %v601 = vunpack.c.h.b16 %v560
      %v602 = vunpack.c.l.b16 %v561
      %v603 = vunpack.c.h.b16 %v561
      %v604 = vunpack.c.l.b16 %v562
      %v605 = vunpack.c.h.b16 %v562
      %v606 = vunpack.c.l.b16 %v563
      %v607 = vunpack.c.h.b16 %v563
      %v608 = vunpack.c.l.b16 %v564
      %v609 = vunpack.c.h.b16 %v564
      %v610 = vunpack.c.l.b16 %v565
      %v611 = vunpack.c.h.b16 %v565
      %v612 = vunpack.c.l.b16 %v566
      %v613 = vunpack.c.h.b16 %v566
      %v614 = vunpack.c.l.b16 %v567
      %v615 = vunpack.c.h.b16 %v567
      %v616 = vpack.c.b16 %v584, %v584
      %v617 = vpack.c.b16 %v585, %v585
      %v618 = vpack.c.b16 %v586, %v586
      %v619 = vpack.c.b16 %v587, %v587
      %v620 = vpack.c.b16 %v588, %v588
      %v621 = vpack.c.b16 %v589, %v589
      %v622 = vpack.c.b16 %v590, %v590
      %v623 = vpack.c.b16 %v591, %v591
      %v624 = vpack.c.b16 %v592, %v592
      %v625 = vpack.c.b16 %v593, %v593
      %v626 = vpack.c.b16 %v594, %v594
      %v627 = vpack.c.b16 %v595, %v595
      %v628 = vpack.c.b16 %v596, %v596
      %v629 = vpack.c.b16 %v597, %v597
      %v630 = vpack.c.b16 %v598, %v598
      %v631 = vpack.c.b16 %v599, %v599
      %v632 = vpack.c.b16 %v600, %v600
      %v633 = vpack.c.b16 %v601, %v601
      %v634 = vpack.c.b16 %v602, %v602
      %v635 = vpack.c.b16 %v603, %v603
      %v636 = vpack.c.b16 %v604, %v604
      %v637 = vpack.c.b16 %v605, %v605
      %v638 = vpack.c.b16 %v606, %v606
      %v639 = vpack.c.b16 %v607, %v607
      %v640 = vpack.c.b16 %v608, %v608
      %v641 = vpack.c.b16 %v609, %v609
      %v642 = vpack.c.b16 %v610, %v610
      %v643 = vpack.c.b16 %v611, %v611
      %v644 = vpack.c.b16 %v612, %v612
      %v645 = vpack.c.b16 %v613, %v613
      %v646 = vpack.c.b16 %v614, %v614
      %v647 = vpack.c.b16 %v615, %v615
      %vm680 = vcmask 125952
      %681 = vst.msk [vmem:[%s172] sm:$0xf] %vm680, %v616
      %682 = vst.msk [vmem:[%s172 + $0x4] sm:$0xf] %vm680, %v617
      %683 = vst.msk [vmem:[%s172 + $0x8] sm:$0xf] %vm680, %v618
      %684 = vst.msk [vmem:[%s172 + $0xc] sm:$0xf] %vm680, %v619
      %685 = vst.msk [vmem:[%s172 + $0x10] sm:$0xf] %vm680, %v620
      %686 = vst.msk [vmem:[%s172 + $0x14] sm:$0xf] %vm680, %v621
      %687 = vst.msk [vmem:[%s172 + $0x18] sm:$0xf] %vm680, %v622
      %688 = vst.msk [vmem:[%s172 + $0x1c] sm:$0xf] %vm680, %v623
      %689 = vst.msk [vmem:[%s172 + $0x20] sm:$0xf] %vm680, %v624
      %690 = vst.msk [vmem:[%s172 + $0x24] sm:$0xf] %vm680, %v625
      %691 = vst.msk [vmem:[%s172 + $0x28] sm:$0xf] %vm680, %v626
      %692 = vst.msk [vmem:[%s172 + $0x2c] sm:$0xf] %vm680, %v627
      %693 = vst.msk [vmem:[%s172 + $0x30] sm:$0xf] %vm680, %v628
      %694 = vst.msk [vmem:[%s172 + $0x34] sm:$0xf] %vm680, %v629
      %695 = vst.msk [vmem:[%s172 + $0x38] sm:$0xf] %vm680, %v630
      %696 = vst.msk [vmem:[%s172 + $0x3c] sm:$0xf] %vm680, %v631
      %697 = vst.msk [vmem:[%s172 + $0x40] sm:$0xf] %vm680, %v632
      %698 = vst.msk [vmem:[%s172 + $0x44] sm:$0xf] %vm680, %v633
      %699 = vst.msk [vmem:[%s172 + $0x48] sm:$0xf] %vm680, %v634
      %700 = vst.msk [vmem:[%s172 + $0x4c] sm:$0xf] %vm680, %v635
      %701 = vst.msk [vmem:[%s172 + $0x50] sm:$0xf] %vm680, %v636
      %702 = vst.msk [vmem:[%s172 + $0x54] sm:$0xf] %vm680, %v637
      %703 = vst.msk [vmem:[%s172 + $0x58] sm:$0xf] %vm680, %v638
      %704 = vst.msk [vmem:[%s172 + $0x5c] sm:$0xf] %vm680, %v639
      %705 = vst.msk [vmem:[%s172 + $0x60] sm:$0xf] %vm680, %v640
      %706 = vst.msk [vmem:[%s172 + $0x64] sm:$0xf] %vm680, %v641
      %707 = vst.msk [vmem:[%s172 + $0x68] sm:$0xf] %vm680, %v642
      %708 = vst.msk [vmem:[%s172 + $0x6c] sm:$0xf] %vm680, %v643
      %709 = vst.msk [vmem:[%s172 + $0x70] sm:$0xf] %vm680, %v644
      %710 = vst.msk [vmem:[%s172 + $0x74] sm:$0xf] %vm680, %v645
      %711 = vst.msk [vmem:[%s172 + $0x78] sm:$0xf] %vm680, %v646
      %712 = vst.msk [vmem:[%s172 + $0x7c] sm:$0xf] %vm680, %v647
      %s713 = smul.u32 32, %s14
      %p714 = scmp.lt.s32.totalorder %s713, 511
      %s715 = scalar_select %p714, %s713, 511
      %s716 = smul.addr %s715, 4
      %s717 = scalar_lea.vmem %s3, %s716
      // Predicated region
      $region33: #{lnn_forward.4} parent=31 // pred_check
        %p718 = pneg %p100
      $region34: #{lnn_forward.4} parent=31 // pred_check_branch
        %720 = sbr.rel (%p718) target = $region36
      $region35: #{lnn_forward.4} parent=31 // pred_region
        %s721 = smul.u32 32, %s14
      $region36: #{lnn_forward.4} parent=31 // pred_fallthru
        _
    $region32: #{lnn_forward.4} parent=5 // pred_fallthru
      _
    %p722 = scmp.le.s32.totalorder 2, %s9
    // Predicated region
    $region37: #{lnn_forward.4} parent=5 // pred_check
      %p723 = pneg %p722
    $region38: #{lnn_forward.4} parent=5 // pred_check_branch
      %725 = sbr.rel (%p723) target = $region40
    $region39: #{lnn_forward.4} parent=5 // pred_region
      %s726 = ssub.s32 %s9, 2
      // Predicated region
      $region41: #{lnn_forward.4} parent=39 // pred_check
        %p727 = pneg %p106
      $region42: #{lnn_forward.4} parent=39 // pred_check_branch
        %729 = sbr.rel (%p727) target = $region44
      $region43: #{lnn_forward.4} parent=39 // pred_region
        %s730 = smul.u32 32, %s15
        %p731 = scmp.lt.s32.totalorder %s730, 511
        %s732 = scalar_select %p731, %s730, 511
        %s733 = smul.addr %s732, 4
        %s734 = scalar_lea.vmem %s3, %s733
      $region44: #{lnn_forward.4} parent=39 // pred_fallthru
        _
    $region40: #{lnn_forward.4} parent=5 // pred_fallthru
      _
  $region6: #{lnn_forward.4} parent=0 // loop_footer
    %s13 = sadd.s32 1, %s9
  $region7: #{lnn_forward.4} parent=0 // loop_footer_branch
    %8 = sbr.rel target = $region3
  $region8: #{lnn_forward.4} parent=0 // loop_exit
    _

// kernel: lnn_forward.5
$region0: #{lnn_forward.5}
  #allocation0 [shape = 'u32[]', space=smem, size = 0x4, offset = 0x4, fixed_abs, tag = 'smem constant byte address 0x4 - core index']
  #allocation1 [shape = 'u32[144,128]{1,0:T(1,128)}', space=vmem, size = 0x12000, scoped, tag = 'internal scratch']
  %s0 = inlined_call_operand.vmem [shape: bf16[1024,144], index: 0, kind: input, shape index: {}]
  %s1 = inlined_call_operand.vmem [shape: bf16[144,32], index: 1, kind: input, shape index: {}]
  %s2 = inlined_call_operand.vmem [shape: f32[1,32], index: 2, kind: input, shape index: {}]
  %s3 = inlined_call_operand.vmem [shape: bf16[1024,32], index: 3, kind: output, shape index: {}]
  %s4 = sld [smem:[#allocation0]]
  $region45: #{lnn_forward.5} parent=0
    _
  %s6 = ssub.s32 1, %s4
  %s7 = scalar_select 0, %s6, %s4
  loop: start=0, step=1, limit=6
  $region2: #{lnn_forward.5} parent=0 // loop_pre_header
    _
  $region3: #{lnn_forward.5} parent=0 // loop_header
    %s9 = sphi 0, %s13
    %p10 = scmp.ge.s32.totalorder %s9, 6
    %s19 = sphi 0, %s21
    %s22 = sphi 0, %s19
    %s23 = sphi 0, %s22
    %s39 = sphi 0, %s23
    %s43 = sphi 0, %s43
    %s45 = sphi 0, %s43
    %s46 = sphi 0, %s45
    %s60 = sphi 0, %s46
    %s64 = sphi 0, %s64
    %s66 = sphi 0, %s64
    %s67 = sphi 0, %s66
    %s81 = sphi 0, %s67
    %s87 = sphi 0, %s89
    %s90 = sphi 0, %s87
    %s91 = sphi 0, %s90
    %s107 = sphi 0, %s91
  $region4: #{lnn_forward.5} parent=0 // loop_header_branch
    %12 = sbr.rel (%p10) target = $region8
  $region5: #{lnn_forward.5} parent=0 // loop_body
    %s14 = ssub.s32 %s9, 1
    %s15 = ssub.s32 %s9, 2
    %s16 = sadd.s32 %s9, 1
    %s17 = ssub.s32 %s9, %s16
    %p18 = scmp.eq.s32.totalorder %s17, 0
    %s20 = sadd.s32 %s19, 1
    %s21 = scalar_select %p18, %s19, %s20
    %p24 = pneg %p18
    %p25 = scmp.eq.s32.totalorder %s9, 3
    %p26 = por %p24, %p25
    %p27 = scmp.ne.s32.totalorder %s19, %s22
    %p28 = scmp.eq.s32.totalorder %s9, 0
    %p29 = por %p27, %p28
    %p30 = scmp.ne.s32.totalorder %s19, %s22
    %p31 = scmp.eq.s32.totalorder %s14, 3
    %p32 = por %p30, %p31
    %p33 = scmp.ne.s32.totalorder %s22, %s23
    %p34 = scmp.eq.s32.totalorder %s14, 0
    %p35 = por %p33, %p34
    %p36 = scmp.ne.s32.totalorder %s22, %s23
    %p37 = scmp.eq.s32.totalorder %s15, 3
    %p38 = por %p36, %p37
    %p40 = scmp.ne.s32.totalorder %s23, %s39
    %p41 = scmp.eq.s32.totalorder %s15, 0
    %p42 = por %p40, %p41
    %s44 = sadd.s32 %s43, 1
    %p47 = scmp.eq.s32.totalorder %s9, 3
    %p48 = scmp.ne.s32.totalorder %s43, %s45
    %p49 = scmp.eq.s32.totalorder %s9, 0
    %p50 = por %p48, %p49
    %p51 = scmp.ne.s32.totalorder %s43, %s45
    %p52 = scmp.eq.s32.totalorder %s14, 3
    %p53 = por %p51, %p52
    %p54 = scmp.ne.s32.totalorder %s45, %s46
    %p55 = scmp.eq.s32.totalorder %s14, 0
    %p56 = por %p54, %p55
    %p57 = scmp.ne.s32.totalorder %s45, %s46
    %p58 = scmp.eq.s32.totalorder %s15, 3
    %p59 = por %p57, %p58
    %p61 = scmp.ne.s32.totalorder %s46, %s60
    %p62 = scmp.eq.s32.totalorder %s15, 0
    %p63 = por %p61, %p62
    %s65 = sadd.s32 %s64, 1
    %p68 = scmp.eq.s32.totalorder %s9, 3
    %p69 = scmp.ne.s32.totalorder %s64, %s66
    %p70 = scmp.eq.s32.totalorder %s9, 0
    %p71 = por %p69, %p70
    %p72 = scmp.ne.s32.totalorder %s64, %s66
    %p73 = scmp.eq.s32.totalorder %s14, 3
    %p74 = por %p72, %p73
    %p75 = scmp.ne.s32.totalorder %s66, %s67
    %p76 = scmp.eq.s32.totalorder %s14, 0
    %p77 = por %p75, %p76
    %p78 = scmp.ne.s32.totalorder %s66, %s67
    %p79 = scmp.eq.s32.totalorder %s15, 3
    %p80 = por %p78, %p79
    %p82 = scmp.ne.s32.totalorder %s67, %s81
    %p83 = scmp.eq.s32.totalorder %s15, 0
    %p84 = por %p82, %p83
    %s85 = ssub.s32 %s9, %s16
    %p86 = scmp.eq.s32.totalorder %s85, 0
    %s88 = sadd.s32 %s87, 1
    %s89 = scalar_select %p86, %s87, %s88
    %p92 = pneg %p86
    %p93 = scmp.eq.s32.totalorder %s9, 3
    %p94 = por %p92, %p93
    %p95 = scmp.ne.s32.totalorder %s87, %s90
    %p96 = scmp.eq.s32.totalorder %s9, 0
    %p97 = por %p95, %p96
    %p98 = scmp.ne.s32.totalorder %s87, %s90
    %p99 = scmp.eq.s32.totalorder %s14, 3
    %p100 = por %p98, %p99
    %p101 = scmp.ne.s32.totalorder %s90, %s91
    %p102 = scmp.eq.s32.totalorder %s14, 0
    %p103 = por %p101, %p102
    %p104 = scmp.ne.s32.totalorder %s90, %s91
    %p105 = scmp.eq.s32.totalorder %s15, 3
    %p106 = por %p104, %p105
    %p108 = scmp.ne.s32.totalorder %s91, %s107
    %p109 = scmp.eq.s32.totalorder %s15, 0
    %p110 = por %p108, %p109
    %p111 = scmp.le.s32.totalorder 1, %s9
    %p112 = scmp.lt.s32.totalorder %s9, 5
    %p113 = pnand %p111, %p112
    %p114 = pneg %p113
    // Predicated region
    $region9: #{lnn_forward.5} parent=5 // pred_check
      _
    $region10: #{lnn_forward.5} parent=5 // pred_check_branch
      %116 = sbr.rel (%p113) target = $region12
    $region11: #{lnn_forward.5} parent=5 // pred_region
      %s117 = ssub.s32 %s9, 1
      // Predicated region
      $region13: #{lnn_forward.5} parent=11 // pred_check
        %p118 = pneg %p56
      $region14: #{lnn_forward.5} parent=11 // pred_check_branch
        %120 = sbr.rel (%p118) target = $region16
      $region15: #{lnn_forward.5} parent=11 // pred_region
        _
      $region16: #{lnn_forward.5} parent=11 // pred_fallthru
        _
      // Predicated region
      $region17: #{lnn_forward.5} parent=11 // pred_check
        %p121 = pneg %p77
      $region18: #{lnn_forward.5} parent=11 // pred_check_branch
        %123 = sbr.rel (%p121) target = $region20
      $region19: #{lnn_forward.5} parent=11 // pred_region
        _
      $region20: #{lnn_forward.5} parent=11 // pred_fallthru
        _
    $region12: #{lnn_forward.5} parent=5 // pred_fallthru
      _
    %p124 = scmp.lt.s32.totalorder %s9, 4
    // Predicated region
    $region21: #{lnn_forward.5} parent=5 // pred_check
      %p125 = pneg %p124
    $region22: #{lnn_forward.5} parent=5 // pred_check_branch
      %127 = sbr.rel (%p125) target = $region24
    $region23: #{lnn_forward.5} parent=5 // pred_region
      // Predicated region
      $region25: #{lnn_forward.5} parent=23 // pred_check
        %p128 = pneg %p29
      $region26: #{lnn_forward.5} parent=23 // pred_check_branch
        %130 = sbr.rel (%p128) target = $region28
      $region27: #{lnn_forward.5} parent=23 // pred_region
        %s131 = smul.u32 32, %s9
        %p132 = scmp.lt.s32.totalorder %s131, 127
        %s133 = scalar_select %p132, %s131, 127
        %s134 = smul.addr %s133, 2
        %s135 = smul.addr %s134, 4
        %s136 = scalar_lea.vmem %s0, %s135
        %s137 = smul.u32 32, %s9
      $region28: #{lnn_forward.5} parent=23 // pred_fallthru
        _
    $region24: #{lnn_forward.5} parent=5 // pred_fallthru
      _
    %p138 = scmp.le.s32.totalorder 1, %s9
    %p139 = scmp.lt.s32.totalorder %s9, 5
    %p140 = pnand %p138, %p139
    %p141 = pneg %p140
    // Predicated region
    $region29: #{lnn_forward.5} parent=5 // pred_check
      _
    $region30: #{lnn_forward.5} parent=5 // pred_check_branch
      %143 = sbr.rel (%p140) target = $region32
    $region31: #{lnn_forward.5} parent=5 // pred_region
      %s144 = ssub.s32 %s9, 1
      %s145 = smul.u32 32, %s14
      %p146 = scmp.lt.s32.totalorder %s145, 127
      %s147 = scalar_select %p146, %s145, 127
      %s148 = smul.addr %s147, 2
      %s149 = smul.addr %s148, 4
      %s150 = scalar_lea.vmem %s0, %s149
      %p151 = pneg %p35
      %p152 = pneg %p32
      %p153 = pneg %p56
      %p154 = pneg %p53
      %p155 = pneg %p77
      %p156 = pneg %p74
      %p157 = pneg %p103
      %p158 = pneg %p100
      %s159 = smul.u32 32, %s14
      %p160 = scmp.lt.s32.totalorder %s159, 127
      %s161 = scalar_select %p160, %s159, 127
      %s162 = smul.addr %s161, 4
      %s163 = scalar_lea.vmem %s3, %s162
      %s164 = smul.u32 32, %s14
      %p165 = scmp.lt.s32.totalorder %s164, 127
      %s166 = scalar_select %p165, %s164, 127
      %s167 = smul.addr %s166, 2
      %s168 = smul.addr %s167, 4
      %s169 = scalar_lea.vmem %s0, %s168
      %s170 = smul.u32 32, %s14
      %s171 = smul.u32 32, %s14
      %p172 = scmp.lt.s32.totalorder %s171, 127
      %s173 = scalar_select %p172, %s171, 127
      %s174 = smul.addr %s173, 4
      %s175 = scalar_lea.vmem %s3, %s174
      %s176 = smul.u32 32, %s14
      %v178 = vld [vmem:[%s169] sm:$0xff]
      %v179 = vld [vmem:[%s169 + $0x8] sm:$0xff]
      %v180 = vld [vmem:[%s169 + $0x10] sm:$0xff]
      %v181 = vld [vmem:[%s169 + $0x18] sm:$0xff]
      %v182 = vld [vmem:[%s169 + $0x20] sm:$0xff]
      %v183 = vld [vmem:[%s169 + $0x28] sm:$0xff]
      %v184 = vld [vmem:[%s169 + $0x30] sm:$0xff]
      %v185 = vld [vmem:[%s169 + $0x38] sm:$0xff]
      %v186 = vld [vmem:[%s169 + $0x40] sm:$0xff]
      %v187 = vld [vmem:[%s169 + $0x48] sm:$0xff]
      %v188 = vld [vmem:[%s169 + $0x50] sm:$0xff]
      %v189 = vld [vmem:[%s169 + $0x58] sm:$0xff]
      %v190 = vld [vmem:[%s169 + $0x60] sm:$0xff]
      %v191 = vld [vmem:[%s169 + $0x68] sm:$0xff]
      %v192 = vld [vmem:[%s169 + $0x70] sm:$0xff]
      %v193 = vld [vmem:[%s169 + $0x78] sm:$0xff]
      %v194 = vld [vmem:[%s169 + $0x80] sm:$0xff]
      %v195 = vld [vmem:[%s169 + $0x88] sm:$0xff]
      %v196 = vld [vmem:[%s169 + $0x90] sm:$0xff]
      %v197 = vld [vmem:[%s169 + $0x98] sm:$0xff]
      %v198 = vld [vmem:[%s169 + $0xa0] sm:$0xff]
      %v199 = vld [vmem:[%s169 + $0xa8] sm:$0xff]
      %v200 = vld [vmem:[%s169 + $0xb0] sm:$0xff]
      %v201 = vld [vmem:[%s169 + $0xb8] sm:$0xff]
      %v202 = vld [vmem:[%s169 + $0xc0] sm:$0xff]
      %v203 = vld [vmem:[%s169 + $0xc8] sm:$0xff]
      %v204 = vld [vmem:[%s169 + $0xd0] sm:$0xff]
      %v205 = vld [vmem:[%s169 + $0xd8] sm:$0xff]
      %v206 = vld [vmem:[%s169 + $0xe0] sm:$0xff]
      %v207 = vld [vmem:[%s169 + $0xe8] sm:$0xff]
      %v208 = vld [vmem:[%s169 + $0xf0] sm:$0xff]
      %v209 = vld [vmem:[%s169 + $0xf8] sm:$0xff]
      %v210 = vld [vmem:[%s1] sm:$0xf]
      %v211 = vld [vmem:[%s1 + $0x4] sm:$0xf]
      %v212 = vld [vmem:[%s1 + $0x8] sm:$0xf]
      %v213 = vld [vmem:[%s1 + $0xc] sm:$0xf]
      %v214 = vld [vmem:[%s1 + $0x10] sm:$0xf]
      %v215 = vld [vmem:[%s1 + $0x14] sm:$0xf]
      %v216 = vld [vmem:[%s1 + $0x18] sm:$0xf]
      %v217 = vld [vmem:[%s1 + $0x1c] sm:$0xf]
      %v218 = vld [vmem:[%s1 + $0x20] sm:$0xf]
      %v219 = vld [vmem:[%s1 + $0x24] sm:$0xf]
      %v220 = vld [vmem:[%s1 + $0x28] sm:$0xf]
      %v221 = vld [vmem:[%s1 + $0x2c] sm:$0xf]
      %v222 = vld [vmem:[%s1 + $0x30] sm:$0xf]
      %v223 = vld [vmem:[%s1 + $0x34] sm:$0xf]
      %v224 = vld [vmem:[%s1 + $0x38] sm:$0xf]
      %v225 = vld [vmem:[%s1 + $0x3c] sm:$0xf]
      %v226 = vld [vmem:[%s1 + $0x40] sm:$0xf]
      %v227 = vld [vmem:[%s1 + $0x44] sm:$0xf]
      %v228 = vld [vmem:[%s2] sm:$0x1]
      %v230 = vlaneseq
      %v231 = vshrl.u32 %v230, 7
      %v232 = vsub.s32 0, %v231
      %v233 = vrot.slane %v228, %v232
      %v267 = vunpack.c.l.b16 %v178
      %v268 = vunpack.c.h.b16 %v178
      %v269 = vunpack.c.l.b16 %v179
      %v270 = vunpack.c.h.b16 %v179
      %v271 = vunpack.c.l.b16 %v180
      %v272 = vunpack.c.h.b16 %v180
      %v273 = vunpack.c.l.b16 %v181
      %v274 = vunpack.c.h.b16 %v181
      %v275 = vunpack.c.l.b16 %v182
      %v276 = vunpack.c.h.b16 %v182
      %v277 = vunpack.c.l.b16 %v183
      %v278 = vunpack.c.h.b16 %v183
      %v279 = vunpack.c.l.b16 %v184
      %v280 = vunpack.c.h.b16 %v184
      %v281 = vunpack.c.l.b16 %v185
      %v282 = vunpack.c.h.b16 %v185
      %v283 = vunpack.c.l.b16 %v186
      %v284 = vunpack.c.h.b16 %v186
      %v285 = vunpack.c.l.b16 %v187
      %v286 = vunpack.c.h.b16 %v187
      %v287 = vunpack.c.l.b16 %v188
      %v288 = vunpack.c.h.b16 %v188
      %v289 = vunpack.c.l.b16 %v189
      %v290 = vunpack.c.h.b16 %v189
      %v291 = vunpack.c.l.b16 %v190
      %v292 = vunpack.c.h.b16 %v190
      %v293 = vunpack.c.l.b16 %v191
      %v294 = vunpack.c.h.b16 %v191
      %v295 = vunpack.c.l.b16 %v192
      %v296 = vunpack.c.h.b16 %v192
      %v297 = vunpack.c.l.b16 %v193
      %v298 = vunpack.c.h.b16 %v193
      %v299 = vunpack.c.l.b16 %v194
      %v300 = vunpack.c.h.b16 %v194
      %v301 = vunpack.c.l.b16 %v195
      %v302 = vunpack.c.h.b16 %v195
      %v303 = vunpack.c.l.b16 %v196
      %v304 = vunpack.c.h.b16 %v196
      %v305 = vunpack.c.l.b16 %v197
      %v306 = vunpack.c.h.b16 %v197
      %v307 = vunpack.c.l.b16 %v198
      %v308 = vunpack.c.h.b16 %v198
      %v309 = vunpack.c.l.b16 %v199
      %v310 = vunpack.c.h.b16 %v199
      %v311 = vunpack.c.l.b16 %v200
      %v312 = vunpack.c.h.b16 %v200
      %v313 = vunpack.c.l.b16 %v201
      %v314 = vunpack.c.h.b16 %v201
      %v315 = vunpack.c.l.b16 %v202
      %v316 = vunpack.c.h.b16 %v202
      %v317 = vunpack.c.l.b16 %v203
      %v318 = vunpack.c.h.b16 %v203
      %v319 = vunpack.c.l.b16 %v204
      %v320 = vunpack.c.h.b16 %v204
      %v321 = vunpack.c.l.b16 %v205
      %v322 = vunpack.c.h.b16 %v205
      %v323 = vunpack.c.l.b16 %v206
      %v324 = vunpack.c.h.b16 %v206
      %v325 = vunpack.c.l.b16 %v207
      %v326 = vunpack.c.h.b16 %v207
      %v327 = vunpack.c.l.b16 %v208
      %v328 = vunpack.c.h.b16 %v208
      %v329 = vunpack.c.l.b16 %v209
      %v330 = vunpack.c.h.b16 %v209
      %v331 = vpack.c.b16 %v269, %v267
      %v332 = vpack.c.b16 %v270, %v268
      %v333 = vpack.c.b16 %v273, %v271
      %v334 = vpack.c.b16 %v274, %v272
      %v335 = vpack.c.b16 %v277, %v275
      %v336 = vpack.c.b16 %v278, %v276
      %v337 = vpack.c.b16 %v281, %v279
      %v338 = vpack.c.b16 %v282, %v280
      %v339 = vpack.c.b16 %v285, %v283
      %v340 = vpack.c.b16 %v286, %v284
      %v341 = vpack.c.b16 %v289, %v287
      %v342 = vpack.c.b16 %v290, %v288
      %v343 = vpack.c.b16 %v293, %v291
      %v344 = vpack.c.b16 %v294, %v292
      %v345 = vpack.c.b16 %v297, %v295
      %v346 = vpack.c.b16 %v298, %v296
      %v347 = vpack.c.b16 %v301, %v299
      %v348 = vpack.c.b16 %v302, %v300
      %v349 = vpack.c.b16 %v305, %v303
      %v350 = vpack.c.b16 %v306, %v304
      %v351 = vpack.c.b16 %v309, %v307
      %v352 = vpack.c.b16 %v310, %v308
      %v353 = vpack.c.b16 %v313, %v311
      %v354 = vpack.c.b16 %v314, %v312
      %v355 = vpack.c.b16 %v317, %v315
      %v356 = vpack.c.b16 %v318, %v316
      %v357 = vpack.c.b16 %v321, %v319
      %v358 = vpack.c.b16 %v322, %v320
      %v359 = vpack.c.b16 %v325, %v323
      %v360 = vpack.c.b16 %v326, %v324
      %v361 = vpack.c.b16 %v329, %v327
      %v362 = vpack.c.b16 %v330, %v328
      %v397 = vunpack.c.l.b16 %v210
      %v398 = vunpack.c.l.b16 %v211
      %v399 = vunpack.c.l.b16 %v212
      %v400 = vunpack.c.l.b16 %v213
      %v401 = vunpack.c.l.b16 %v214
      %v402 = vunpack.c.l.b16 %v215
      %v403 = vunpack.c.l.b16 %v216
      %v404 = vunpack.c.l.b16 %v217
      %v405 = vunpack.c.l.b16 %v218
      %v406 = vunpack.c.l.b16 %v219
      %v407 = vunpack.c.l.b16 %v220
      %v408 = vunpack.c.l.b16 %v221
      %v409 = vunpack.c.l.b16 %v222
      %v410 = vunpack.c.l.b16 %v223
      %v411 = vunpack.c.l.b16 %v224
      %v412 = vunpack.c.l.b16 %v225
      %v413 = vunpack.c.l.b16 %v226
      %v414 = vunpack.c.l.b16 %v227
      %v415 = vpack.c.b16 %v398, %v397
      %v416 = vpack.c.b16 %v400, %v399
      %v417 = vpack.c.b16 %v402, %v401
      %v418 = vpack.c.b16 %v404, %v403
      %v419 = vpack.c.b16 %v406, %v405
      %v420 = vpack.c.b16 %v408, %v407
      %v421 = vpack.c.b16 %v410, %v409
      %v422 = vpack.c.b16 %v412, %v411
      %v423 = vpack.c.b16 %v414, %v413
      %vm433 = vcmask 130048
      %v435 = vsel %vm433, %v332, 0
      %v438 = vsel %vm433, %v334, 0
      %v441 = vsel %vm433, %v336, 0
      %v444 = vsel %vm433, %v338, 0
      %v447 = vsel %vm433, %v340, 0
      %v450 = vsel %vm433, %v342, 0
      %v453 = vsel %vm433, %v344, 0
      %v456 = vsel %vm433, %v346, 0
      %v459 = vsel %vm433, %v348, 0
      %v462 = vsel %vm433, %v350, 0
      %v465 = vsel %vm433, %v352, 0
      %v468 = vsel %vm433, %v354, 0
      %v471 = vsel %vm433, %v356, 0
      %v474 = vsel %vm433, %v358, 0
      %v477 = vsel %vm433, %v360, 0
      %v480 = vsel %vm433, %v362, 0
      %482 = vmatprep.subr.bf16.mxu0 0
      %483 = vmatpush1.bf16.msra.mxu0 %v422
      %484 = vmatprep.subr.bf16.mxu0 0
      %485 = vmatpush1.bf16.msra.mxu0 %v421
      %486 = vmatprep.subr.bf16.mxu0 0
      %487 = vmatpush1.bf16.msra.mxu0 %v420
      %488 = vmatprep.subr.bf16.mxu0 0
      %489 = vmatpush1.bf16.msra.mxu0 %v419
      %490 = vmatprep.subr.bf16.mxu0 0
      %491 = vmatpush1.bf16.msra.mxu0 %v418
      %492 = vmatprep.subr.bf16.mxu0 0
      %493 = vmatpush1.bf16.msra.mxu0 %v417
      %494 = vmatprep.subr.bf16.mxu0 0
      %495 = vmatpush1.bf16.msra.mxu0 %v416
      %496 = vmatprep.subr.bf16.mxu0 0
      %497 = vmatpush1.bf16.msra.mxu0 %v415
      %498 = vmatprep.subr.bf16.mxu0 0
      %499 = vmatpush2.bf16.msra.mxu0 0
      %500 = vmatprep.subr.bf16.mxu0 0
      %501 = vmatpush2.bf16.msra.mxu0 0
      %502 = vmatprep.subr.bf16.mxu0 0
      %503 = vmatpush2.bf16.msra.mxu0 0
      %504 = vmatprep.subr.bf16.mxu0 0
      %505 = vmatpush2.bf16.msra.mxu0 0
      %506 = vmatprep.subr.bf16.mxu0 0
      %507 = vmatpush2.bf16.msra.mxu0 0
      %508 = vmatprep.subr.bf16.mxu0 0
      %509 = vmatpush2.bf16.msra.mxu0 0
      %510 = vmatprep.subr.bf16.mxu0 0
      %511 = vmatpush2.bf16.msra.mxu0 0
      %512 = vmatprep.subr.bf16.mxu0 0
      %513 = vmatpush2.bf16.msra.mxu0 %v423
      %514 = vmatprep.mubr.bf16.mxu0 %v435
      %515 = vmatmul.mubr.bf16.gmra.mxu0 %v331
      %v516 = vpop.f32.mrf.mxu0
      %v517 = vadd.f32 %v233, %v516
      %v518 = vpop.f32.mrf.mxu0
      %v519 = vpop.f32.mrf.mxu0
      %v520 = vadd.f32 %v233, %v519
      %v521 = vpop.f32.mrf.mxu0
      %522 = vmatprep.mubr.bf16.mxu0 %v438
      %523 = vmatmul.mubr.bf16.gmra.mxu0 %v333
      %v524 = vpop.f32.mrf.mxu0
      %v525 = vadd.f32 %v233, %v524
      %v526 = vpop.f32.mrf.mxu0
      %v527 = vpop.f32.mrf.mxu0
      %v528 = vadd.f32 %v233, %v527
      %v529 = vpop.f32.mrf.mxu0
      %530 = vmatprep.mubr.bf16.mxu0 %v441
      %531 = vmatmul.mubr.bf16.gmra.mxu0 %v335
      %v532 = vpop.f32.mrf.mxu0
      %v533 = vadd.f32 %v233, %v532
      %v534 = vpop.f32.mrf.mxu0
      %v535 = vpop.f32.mrf.mxu0
      %v536 = vadd.f32 %v233, %v535
      %v537 = vpop.f32.mrf.mxu0
      %538 = vmatprep.mubr.bf16.mxu0 %v444
      %539 = vmatmul.mubr.bf16.gmra.mxu0 %v337
      %v540 = vpop.f32.mrf.mxu0
      %v541 = vadd.f32 %v233, %v540
      %v542 = vpop.f32.mrf.mxu0
      %v543 = vpop.f32.mrf.mxu0
      %v544 = vadd.f32 %v233, %v543
      %v545 = vpop.f32.mrf.mxu0
      %546 = vmatprep.mubr.bf16.mxu0 %v447
      %547 = vmatmul.mubr.bf16.gmra.mxu0 %v339
      %v548 = vpop.f32.mrf.mxu0
      %v549 = vadd.f32 %v233, %v548
      %v550 = vpop.f32.mrf.mxu0
      %v551 = vpop.f32.mrf.mxu0
      %v552 = vadd.f32 %v233, %v551
      %v553 = vpop.f32.mrf.mxu0
      %554 = vmatprep.mubr.bf16.mxu0 %v450
      %555 = vmatmul.mubr.bf16.gmra.mxu0 %v341
      %v556 = vpop.f32.mrf.mxu0
      %v557 = vadd.f32 %v233, %v556
      %v558 = vpop.f32.mrf.mxu0
      %v559 = vpop.f32.mrf.mxu0
      %v560 = vadd.f32 %v233, %v559
      %v561 = vpop.f32.mrf.mxu0
      %562 = vmatprep.mubr.bf16.mxu0 %v453
      %563 = vmatmul.mubr.bf16.gmra.mxu0 %v343
      %v564 = vpop.f32.mrf.mxu0
      %v565 = vadd.f32 %v233, %v564
      %v566 = vpop.f32.mrf.mxu0
      %v567 = vpop.f32.mrf.mxu0
      %v568 = vadd.f32 %v233, %v567
      %v569 = vpop.f32.mrf.mxu0
      %570 = vmatprep.mubr.bf16.mxu0 %v456
      %571 = vmatmul.mubr.bf16.gmra.mxu0 %v345
      %v572 = vpop.f32.mrf.mxu0
      %v573 = vadd.f32 %v233, %v572
      %v574 = vpop.f32.mrf.mxu0
      %v575 = vpop.f32.mrf.mxu0
      %v576 = vadd.f32 %v233, %v575
      %v577 = vpop.f32.mrf.mxu0
      %578 = vmatprep.mubr.bf16.mxu0 %v459
      %579 = vmatmul.mubr.bf16.gmra.mxu0 %v347
      %v580 = vpop.f32.mrf.mxu0
      %v581 = vadd.f32 %v233, %v580
      %v582 = vpop.f32.mrf.mxu0
      %v583 = vpop.f32.mrf.mxu0
      %v584 = vadd.f32 %v233, %v583
      %v585 = vpop.f32.mrf.mxu0
      %586 = vmatprep.mubr.bf16.mxu0 %v462
      %587 = vmatmul.mubr.bf16.gmra.mxu0 %v349
      %v588 = vpop.f32.mrf.mxu0
      %v589 = vadd.f32 %v233, %v588
      %v590 = vpop.f32.mrf.mxu0
      %v591 = vpop.f32.mrf.mxu0
      %v592 = vadd.f32 %v233, %v591
      %v593 = vpop.f32.mrf.mxu0
      %594 = vmatprep.mubr.bf16.mxu0 %v465
      %595 = vmatmul.mubr.bf16.gmra.mxu0 %v351
      %v596 = vpop.f32.mrf.mxu0
      %v597 = vadd.f32 %v233, %v596
      %v598 = vpop.f32.mrf.mxu0
      %v599 = vpop.f32.mrf.mxu0
      %v600 = vadd.f32 %v233, %v599
      %v601 = vpop.f32.mrf.mxu0
      %602 = vmatprep.mubr.bf16.mxu0 %v468
      %603 = vmatmul.mubr.bf16.gmra.mxu0 %v353
      %v604 = vpop.f32.mrf.mxu0
      %v605 = vadd.f32 %v233, %v604
      %v606 = vpop.f32.mrf.mxu0
      %v607 = vpop.f32.mrf.mxu0
      %v608 = vadd.f32 %v233, %v607
      %v609 = vpop.f32.mrf.mxu0
      %610 = vmatprep.mubr.bf16.mxu0 %v471
      %611 = vmatmul.mubr.bf16.gmra.mxu0 %v355
      %v612 = vpop.f32.mrf.mxu0
      %v613 = vadd.f32 %v233, %v612
      %v614 = vpop.f32.mrf.mxu0
      %v615 = vpop.f32.mrf.mxu0
      %v616 = vadd.f32 %v233, %v615
      %v617 = vpop.f32.mrf.mxu0
      %618 = vmatprep.mubr.bf16.mxu0 %v474
      %619 = vmatmul.mubr.bf16.gmra.mxu0 %v357
      %v620 = vpop.f32.mrf.mxu0
      %v621 = vadd.f32 %v233, %v620
      %v622 = vpop.f32.mrf.mxu0
      %v623 = vpop.f32.mrf.mxu0
      %v624 = vadd.f32 %v233, %v623
      %v625 = vpop.f32.mrf.mxu0
      %626 = vmatprep.mubr.bf16.mxu0 %v477
      %627 = vmatmul.mubr.bf16.gmra.mxu0 %v359
      %v628 = vpop.f32.mrf.mxu0
      %v629 = vadd.f32 %v233, %v628
      %v630 = vpop.f32.mrf.mxu0
      %v631 = vpop.f32.mrf.mxu0
      %v632 = vadd.f32 %v233, %v631
      %v633 = vpop.f32.mrf.mxu0
      %634 = vmatprep.mubr.bf16.mxu0 %v480
      %635 = vmatmul.mubr.bf16.gmra.mxu0 %v361
      %v636 = vpop.f32.mrf.mxu0
      %v637 = vadd.f32 %v233, %v636
      %v638 = vpop.f32.mrf.mxu0
      %v639 = vpop.f32.mrf.mxu0
      %v640 = vadd.f32 %v233, %v639
      %v641 = vpop.f32.mrf.mxu0
      %642 = vdwg.mxu0
      %v643 = vmax.f32 %v517, 0.0
      %v644 = vmax.f32 %v520, 0.0
      %v645 = vmax.f32 %v525, 0.0
      %v646 = vmax.f32 %v528, 0.0
      %v647 = vmax.f32 %v533, 0.0
      %v648 = vmax.f32 %v536, 0.0
      %v649 = vmax.f32 %v541, 0.0
      %v650 = vmax.f32 %v544, 0.0
      %v651 = vmax.f32 %v549, 0.0
      %v652 = vmax.f32 %v552, 0.0
      %v653 = vmax.f32 %v557, 0.0
      %v654 = vmax.f32 %v560, 0.0
      %v655 = vmax.f32 %v565, 0.0
      %v656 = vmax.f32 %v568, 0.0
      %v657 = vmax.f32 %v573, 0.0
      %v658 = vmax.f32 %v576, 0.0
      %v659 = vmax.f32 %v581, 0.0
      %v660 = vmax.f32 %v584, 0.0
      %v661 = vmax.f32 %v589, 0.0
      %v662 = vmax.f32 %v592, 0.0
      %v663 = vmax.f32 %v597, 0.0
      %v664 = vmax.f32 %v600, 0.0
      %v665 = vmax.f32 %v605, 0.0
      %v666 = vmax.f32 %v608, 0.0
      %v667 = vmax.f32 %v613, 0.0
      %v668 = vmax.f32 %v616, 0.0
      %v669 = vmax.f32 %v621, 0.0
      %v670 = vmax.f32 %v624, 0.0
      %v671 = vmax.f32 %v629, 0.0
      %v672 = vmax.f32 %v632, 0.0
      %v673 = vmax.f32 %v637, 0.0
      %v674 = vmax.f32 %v640, 0.0
      %v675 = vpack.c.bf16 %v644, %v643
      %v676 = vpack.c.bf16 %v646, %v645
      %v677 = vpack.c.bf16 %v648, %v647
      %v678 = vpack.c.bf16 %v650, %v649
      %v679 = vpack.c.bf16 %v652, %v651
      %v680 = vpack.c.bf16 %v654, %v653
      %v681 = vpack.c.bf16 %v656, %v655
      %v682 = vpack.c.bf16 %v658, %v657
      %v683 = vpack.c.bf16 %v660, %v659
      %v684 = vpack.c.bf16 %v662, %v661
      %v685 = vpack.c.bf16 %v664, %v663
      %v686 = vpack.c.bf16 %v666, %v665
      %v687 = vpack.c.bf16 %v668, %v667
      %v688 = vpack.c.bf16 %v670, %v669
      %v689 = vpack.c.bf16 %v672, %v671
      %v690 = vpack.c.bf16 %v674, %v673
      %v707 = vunpack.c.l.b16 %v675
      %v708 = vunpack.c.h.b16 %v675
      %v709 = vunpack.c.l.b16 %v676
      %v710 = vunpack.c.h.b16 %v676
      %v711 = vunpack.c.l.b16 %v677
      %v712 = vunpack.c.h.b16 %v677
      %v713 = vunpack.c.l.b16 %v678
      %v714 = vunpack.c.h.b16 %v678
      %v715 = vunpack.c.l.b16 %v679
      %v716 = vunpack.c.h.b16 %v679
      %v717 = vunpack.c.l.b16 %v680
      %v718 = vunpack.c.h.b16 %v680
      %v719 = vunpack.c.l.b16 %v681
      %v720 = vunpack.c.h.b16 %v681
      %v721 = vunpack.c.l.b16 %v682
      %v722 = vunpack.c.h.b16 %v682
      %v723 = vunpack.c.l.b16 %v683
      %v724 = vunpack.c.h.b16 %v683
      %v725 = vunpack.c.l.b16 %v684
      %v726 = vunpack.c.h.b16 %v684
      %v727 = vunpack.c.l.b16 %v685
      %v728 = vunpack.c.h.b16 %v685
      %v729 = vunpack.c.l.b16 %v686
      %v730 = vunpack.c.h.b16 %v686
      %v731 = vunpack.c.l.b16 %v687
      %v732 = vunpack.c.h.b16 %v687
      %v733 = vunpack.c.l.b16 %v688
      %v734 = vunpack.c.h.b16 %v688
      %v735 = vunpack.c.l.b16 %v689
      %v736 = vunpack.c.h.b16 %v689
      %v737 = vunpack.c.l.b16 %v690
      %v738 = vunpack.c.h.b16 %v690
      %v739 = vpack.c.b16 %v707, %v707
      %v740 = vpack.c.b16 %v708, %v708
      %v741 = vpack.c.b16 %v709, %v709
      %v742 = vpack.c.b16 %v710, %v710
      %v743 = vpack.c.b16 %v711, %v711
      %v744 = vpack.c.b16 %v712, %v712
      %v745 = vpack.c.b16 %v713, %v713
      %v746 = vpack.c.b16 %v714, %v714
      %v747 = vpack.c.b16 %v715, %v715
      %v748 = vpack.c.b16 %v716, %v716
      %v749 = vpack.c.b16 %v717, %v717
      %v750 = vpack.c.b16 %v718, %v718
      %v751 = vpack.c.b16 %v719, %v719
      %v752 = vpack.c.b16 %v720, %v720
      %v753 = vpack.c.b16 %v721, %v721
      %v754 = vpack.c.b16 %v722, %v722
      %v755 = vpack.c.b16 %v723, %v723
      %v756 = vpack.c.b16 %v724, %v724
      %v757 = vpack.c.b16 %v725, %v725
      %v758 = vpack.c.b16 %v726, %v726
      %v759 = vpack.c.b16 %v727, %v727
      %v760 = vpack.c.b16 %v728, %v728
      %v761 = vpack.c.b16 %v729, %v729
      %v762 = vpack.c.b16 %v730, %v730
      %v763 = vpack.c.b16 %v731, %v731
      %v764 = vpack.c.b16 %v732, %v732
      %v765 = vpack.c.b16 %v733, %v733
      %v766 = vpack.c.b16 %v734, %v734
      %v767 = vpack.c.b16 %v735, %v735
      %v768 = vpack.c.b16 %v736, %v736
      %v769 = vpack.c.b16 %v737, %v737
      %v770 = vpack.c.b16 %v738, %v738
      %vm803 = vcmask 257024
      %804 = vst.msk [vmem:[%s175] sm:$0xf] %vm803, %v739
      %805 = vst.msk [vmem:[%s175 + $0x4] sm:$0xf] %vm803, %v740
      %806 = vst.msk [vmem:[%s175 + $0x8] sm:$0xf] %vm803, %v741
      %807 = vst.msk [vmem:[%s175 + $0xc] sm:$0xf] %vm803, %v742
      %808 = vst.msk [vmem:[%s175 + $0x10] sm:$0xf] %vm803, %v743
      %809 = vst.msk [vmem:[%s175 + $0x14] sm:$0xf] %vm803, %v744
      %810 = vst.msk [vmem:[%s175 + $0x18] sm:$0xf] %vm803, %v745
      %811 = vst.msk [vmem:[%s175 + $0x1c] sm:$0xf] %vm803, %v746
      %812 = vst.msk [vmem:[%s175 + $0x20] sm:$0xf] %vm803, %v747
      %813 = vst.msk [vmem:[%s175 + $0x24] sm:$0xf] %vm803, %v748
      %814 = vst.msk [vmem:[%s175 + $0x28] sm:$0xf] %vm803, %v749
      %815 = vst.msk [vmem:[%s175 + $0x2c] sm:$0xf] %vm803, %v750
      %816 = vst.msk [vmem:[%s175 + $0x30] sm:$0xf] %vm803, %v751
      %817 = vst.msk [vmem:[%s175 + $0x34] sm:$0xf] %vm803, %v752
      %818 = vst.msk [vmem:[%s175 + $0x38] sm:$0xf] %vm803, %v753
      %819 = vst.msk [vmem:[%s175 + $0x3c] sm:$0xf] %vm803, %v754
      %820 = vst.msk [vmem:[%s175 + $0x40] sm:$0xf] %vm803, %v755
      %821 = vst.msk [vmem:[%s175 + $0x44] sm:$0xf] %vm803, %v756
      %822 = vst.msk [vmem:[%s175 + $0x48] sm:$0xf] %vm803, %v757
      %823 = vst.msk [vmem:[%s175 + $0x4c] sm:$0xf] %vm803, %v758
      %824 = vst.msk [vmem:[%s175 + $0x50] sm:$0xf] %vm803, %v759
      %825 = vst.msk [vmem:[%s175 + $0x54] sm:$0xf] %vm803, %v760
      %826 = vst.msk [vmem:[%s175 + $0x58] sm:$0xf] %vm803, %v761
      %827 = vst.msk [vmem:[%s175 + $0x5c] sm:$0xf] %vm803, %v762
      %828 = vst.msk [vmem:[%s175 + $0x60] sm:$0xf] %vm803, %v763
      %829 = vst.msk [vmem:[%s175 + $0x64] sm:$0xf] %vm803, %v764
      %830 = vst.msk [vmem:[%s175 + $0x68] sm:$0xf] %vm803, %v765
      %831 = vst.msk [vmem:[%s175 + $0x6c] sm:$0xf] %vm803, %v766
      %832 = vst.msk [vmem:[%s175 + $0x70] sm:$0xf] %vm803, %v767
      %833 = vst.msk [vmem:[%s175 + $0x74] sm:$0xf] %vm803, %v768
      %834 = vst.msk [vmem:[%s175 + $0x78] sm:$0xf] %vm803, %v769
      %835 = vst.msk [vmem:[%s175 + $0x7c] sm:$0xf] %vm803, %v770
      %s836 = smul.u32 32, %s14
      %p837 = scmp.lt.s32.totalorder %s836, 127
      %s838 = scalar_select %p837, %s836, 127
      %s839 = smul.addr %s838, 4
      %s840 = scalar_lea.vmem %s3, %s839
      // Predicated region
      $region33: #{lnn_forward.5} parent=31 // pred_check
        %p841 = pneg %p100
      $region34: #{lnn_forward.5} parent=31 // pred_check_branch
        %843 = sbr.rel (%p841) target = $region36
      $region35: #{lnn_forward.5} parent=31 // pred_region
        %s844 = smul.u32 32, %s14
      $region36: #{lnn_forward.5} parent=31 // pred_fallthru
        _
    $region32: #{lnn_forward.5} parent=5 // pred_fallthru
      _
    %p845 = scmp.le.s32.totalorder 2, %s9
    // Predicated region
    $region37: #{lnn_forward.5} parent=5 // pred_check
      %p846 = pneg %p845
    $region38: #{lnn_forward.5} parent=5 // pred_check_branch
      %848 = sbr.rel (%p846) target = $region40
    $region39: #{lnn_forward.5} parent=5 // pred_region
      %s849 = ssub.s32 %s9, 2
      // Predicated region
      $region41: #{lnn_forward.5} parent=39 // pred_check
        %p850 = pneg %p106
      $region42: #{lnn_forward.5} parent=39 // pred_check_branch
        %852 = sbr.rel (%p850) target = $region44
      $region43: #{lnn_forward.5} parent=39 // pred_region
        %s853 = smul.u32 32, %s15
        %p854 = scmp.lt.s32.totalorder %s853, 127
        %s855 = scalar_select %p854, %s853, 127
        %s856 = smul.addr %s855, 4
        %s857 = scalar_lea.vmem %s3, %s856
      $region44: #{lnn_forward.5} parent=39 // pred_fallthru
        _
    $region40: #{lnn_forward.5} parent=5 // pred_fallthru
      _
  $region6: #{lnn_forward.5} parent=0 // loop_footer
    %s13 = sadd.s32 1, %s9
  $region7: #{lnn_forward.5} parent=0 // loop_footer_branch
    %8 = sbr.rel target = $region3
  $region8: #{lnn_forward.5} parent=0 // loop_exit
    _

// kernel: lnn_forward.6
$region0: #{lnn_forward.6}
  #allocation0 [shape = 'u32[]', space=smem, size = 0x4, offset = 0x4, fixed_abs, tag = 'smem constant byte address 0x4 - core index']
  #allocation1 [shape = 'u32[144,128]{1,0:T(1,128)}', space=vmem, size = 0x12000, scoped, tag = 'internal scratch']
  %s0 = inlined_call_operand.vmem [shape: bf16[256,288], index: 0, kind: input, shape index: {}]
  %s1 = inlined_call_operand.vmem [shape: bf16[288,64], index: 1, kind: input, shape index: {}]
  %s2 = inlined_call_operand.vmem [shape: f32[1,64], index: 2, kind: input, shape index: {}]
  %s3 = inlined_call_operand.vmem [shape: bf16[256,64], index: 3, kind: output, shape index: {}]
  %s4 = sld [smem:[#allocation0]]
  $region22: #{lnn_forward.6} parent=0
    _
  %s6 = ssub.s32 1, %s4
  %s7 = scalar_select 0, %s6, %s4
  // Predicated region
  $region2: #{lnn_forward.6} parent=0 // pred_check
    _
  $region3: #{lnn_forward.6} parent=0 // pred_check_branch
    %9 = sbr.rel (0) target = $region5
  $region4: #{lnn_forward.6} parent=0 // pred_region
    _
  $region5: #{lnn_forward.6} parent=0 // pred_fallthru
    _
  // Predicated region
  $region6: #{lnn_forward.6} parent=0 // pred_check
    _
  $region7: #{lnn_forward.6} parent=0 // pred_check_branch
    %11 = sbr.rel (0) target = $region9
  $region8: #{lnn_forward.6} parent=0 // pred_region
    _
  $region9: #{lnn_forward.6} parent=0 // pred_fallthru
    _
  // Predicated region
  $region10: #{lnn_forward.6} parent=0 // pred_check
    _
  $region11: #{lnn_forward.6} parent=0 // pred_check_branch
    %13 = sbr.rel (0) target = $region13
  $region12: #{lnn_forward.6} parent=0 // pred_region
    _
  $region13: #{lnn_forward.6} parent=0 // pred_fallthru
    _
  %v15 = vld [vmem:[%s0] sm:$0xff]
  %v16 = vld [vmem:[%s0 + $0x8] sm:$0xf]
  %v17 = vld [vmem:[%s0 + $0xc] sm:$0xff]
  %v18 = vld [vmem:[%s0 + $0x14] sm:$0xf]
  %v19 = vld [vmem:[%s0 + $0x18] sm:$0xff]
  %v20 = vld [vmem:[%s0 + $0x20] sm:$0xf]
  %v21 = vld [vmem:[%s0 + $0x24] sm:$0xff]
  %v22 = vld [vmem:[%s0 + $0x2c] sm:$0xf]
  %v23 = vld [vmem:[%s0 + $0x30] sm:$0xff]
  %v24 = vld [vmem:[%s0 + $0x38] sm:$0xf]
  %v25 = vld [vmem:[%s0 + $0x3c] sm:$0xff]
  %v26 = vld [vmem:[%s0 + $0x44] sm:$0xf]
  %v27 = vld [vmem:[%s0 + $0x48] sm:$0xff]
  %v28 = vld [vmem:[%s0 + $0x50] sm:$0xf]
  %v29 = vld [vmem:[%s0 + $0x54] sm:$0xff]
  %v30 = vld [vmem:[%s0 + $0x5c] sm:$0xf]
  %v31 = vld [vmem:[%s0 + $0x60] sm:$0xff]
  %v32 = vld [vmem:[%s0 + $0x68] sm:$0xf]
  %v33 = vld [vmem:[%s0 + $0x6c] sm:$0xff]
  %v34 = vld [vmem:[%s0 + $0x74] sm:$0xf]
  %v35 = vld [vmem:[%s0 + $0x78] sm:$0xff]
  %v36 = vld [vmem:[%s0 + $0x80] sm:$0xf]
  %v37 = vld [vmem:[%s0 + $0x84] sm:$0xff]
  %v38 = vld [vmem:[%s0 + $0x8c] sm:$0xf]
  %v39 = vld [vmem:[%s0 + $0x90] sm:$0xff]
  %v40 = vld [vmem:[%s0 + $0x98] sm:$0xf]
  %v41 = vld [vmem:[%s0 + $0x9c] sm:$0xff]
  %v42 = vld [vmem:[%s0 + $0xa4] sm:$0xf]
  %v43 = vld [vmem:[%s0 + $0xa8] sm:$0xff]
  %v44 = vld [vmem:[%s0 + $0xb0] sm:$0xf]
  %v45 = vld [vmem:[%s0 + $0xb4] sm:$0xff]
  %v46 = vld [vmem:[%s0 + $0xbc] sm:$0xf]
  %v47 = vld [vmem:[%s0 + $0xc0] sm:$0xff]
  %v48 = vld [vmem:[%s0 + $0xc8] sm:$0xf]
  %v49 = vld [vmem:[%s0 + $0xcc] sm:$0xff]
  %v50 = vld [vmem:[%s0 + $0xd4] sm:$0xf]
  %v51 = vld [vmem:[%s0 + $0xd8] sm:$0xff]
  %v52 = vld [vmem:[%s0 + $0xe0] sm:$0xf]
  %v53 = vld [vmem:[%s0 + $0xe4] sm:$0xff]
  %v54 = vld [vmem:[%s0 + $0xec] sm:$0xf]
  %v55 = vld [vmem:[%s0 + $0xf0] sm:$0xff]
  %v56 = vld [vmem:[%s0 + $0xf8] sm:$0xf]
  %v57 = vld [vmem:[%s0 + $0xfc] sm:$0xff]
  %v58 = vld [vmem:[%s0 + $0x104] sm:$0xf]
  %v59 = vld [vmem:[%s0 + $0x108] sm:$0xff]
  %v60 = vld [vmem:[%s0 + $0x110] sm:$0xf]
  %v61 = vld [vmem:[%s0 + $0x114] sm:$0xff]
  %v62 = vld [vmem:[%s0 + $0x11c] sm:$0xf]
  %v63 = vld [vmem:[%s0 + $0x120] sm:$0xff]
  %v64 = vld [vmem:[%s0 + $0x128] sm:$0xf]
  %v65 = vld [vmem:[%s0 + $0x12c] sm:$0xff]
  %v66 = vld [vmem:[%s0 + $0x134] sm:$0xf]
  %v67 = vld [vmem:[%s0 + $0x138] sm:$0xff]
  %v68 = vld [vmem:[%s0 + $0x140] sm:$0xf]
  %v69 = vld [vmem:[%s0 + $0x144] sm:$0xff]
  %v70 = vld [vmem:[%s0 + $0x14c] sm:$0xf]
  %v71 = vld [vmem:[%s0 + $0x150] sm:$0xff]
  %v72 = vld [vmem:[%s0 + $0x158] sm:$0xf]
  %v73 = vld [vmem:[%s0 + $0x15c] sm:$0xff]
  %v74 = vld [vmem:[%s0 + $0x164] sm:$0xf]
  %v75 = vld [vmem:[%s0 + $0x168] sm:$0xff]
  %v76 = vld [vmem:[%s0 + $0x170] sm:$0xf]
  %v77 = vld [vmem:[%s0 + $0x174] sm:$0xff]
  %v78 = vld [vmem:[%s0 + $0x17c] sm:$0xf]
  %v79 = vld [vmem:[%s1] sm:$0xf]
  %v80 = vld [vmem:[%s1 + $0x4] sm:$0xf]
  %v81 = vld [vmem:[%s1 + $0x8] sm:$0xf]
  %v82 = vld [vmem:[%s1 + $0xc] sm:$0xf]
  %v83 = vld [vmem:[%s1 + $0x10] sm:$0xf]
  %v84 = vld [vmem:[%s1 + $0x14] sm:$0xf]
  %v85 = vld [vmem:[%s1 + $0x18] sm:$0xf]
  %v86 = vld [vmem:[%s1 + $0x1c] sm:$0xf]
  %v87 = vld [vmem:[%s1 + $0x20] sm:$0xf]
  %v88 = vld [vmem:[%s1 + $0x24] sm:$0xf]
  %v89 = vld [vmem:[%s1 + $0x28] sm:$0xf]
  %v90 = vld [vmem:[%s1 + $0x2c] sm:$0xf]
  %v91 = vld [vmem:[%s1 + $0x30] sm:$0xf]
  %v92 = vld [vmem:[%s1 + $0x34] sm:$0xf]
  %v93 = vld [vmem:[%s1 + $0x38] sm:$0xf]
  %v94 = vld [vmem:[%s1 + $0x3c] sm:$0xf]
  %v95 = vld [vmem:[%s1 + $0x40] sm:$0xf]
  %v96 = vld [vmem:[%s1 + $0x44] sm:$0xf]
  %v97 = vld [vmem:[%s1 + $0x48] sm:$0xf]
  %v98 = vld [vmem:[%s1 + $0x4c] sm:$0xf]
  %v99 = vld [vmem:[%s1 + $0x50] sm:$0xf]
  %v100 = vld [vmem:[%s1 + $0x54] sm:$0xf]
  %v101 = vld [vmem:[%s1 + $0x58] sm:$0xf]
  %v102 = vld [vmem:[%s1 + $0x5c] sm:$0xf]
  %v103 = vld [vmem:[%s1 + $0x60] sm:$0xf]
  %v104 = vld [vmem:[%s1 + $0x64] sm:$0xf]
  %v105 = vld [vmem:[%s1 + $0x68] sm:$0xf]
  %v106 = vld [vmem:[%s1 + $0x6c] sm:$0xf]
  %v107 = vld [vmem:[%s1 + $0x70] sm:$0xf]
  %v108 = vld [vmem:[%s1 + $0x74] sm:$0xf]
  %v109 = vld [vmem:[%s1 + $0x78] sm:$0xf]
  %v110 = vld [vmem:[%s1 + $0x7c] sm:$0xf]
  %v111 = vld [vmem:[%s1 + $0x80] sm:$0xf]
  %v112 = vld [vmem:[%s1 + $0x84] sm:$0xf]
  %v113 = vld [vmem:[%s1 + $0x88] sm:$0xf]
  %v114 = vld [vmem:[%s1 + $0x8c] sm:$0xf]
  %v115 = vld [vmem:[%s2] sm:$0x1]
  %v117 = vlaneseq
  %v118 = vshrl.u32 %v117, 7
  %v119 = vsub.s32 0, %v118
  %v120 = vrot.slane %v115, %v119
  %v186 = vunpack.c.l.b16 %v15
  %v187 = vunpack.c.h.b16 %v15
  %v188 = vunpack.c.l.b16 %v16
  %v189 = vunpack.c.l.b16 %v17
  %v190 = vunpack.c.h.b16 %v17
  %v191 = vunpack.c.l.b16 %v18
  %v192 = vunpack.c.l.b16 %v19
  %v193 = vunpack.c.h.b16 %v19
  %v194 = vunpack.c.l.b16 %v20
  %v195 = vunpack.c.l.b16 %v21
  %v196 = vunpack.c.h.b16 %v21
  %v197 = vunpack.c.l.b16 %v22
  %v198 = vunpack.c.l.b16 %v23
  %v199 = vunpack.c.h.b16 %v23
  %v200 = vunpack.c.l.b16 %v24
  %v201 = vunpack.c.l.b16 %v25
  %v202 = vunpack.c.h.b16 %v25
  %v203 = vunpack.c.l.b16 %v26
  %v204 = vunpack.c.l.b16 %v27
  %v205 = vunpack.c.h.b16 %v27
  %v206 = vunpack.c.l.b16 %v28
  %v207 = vunpack.c.l.b16 %v29
  %v208 = vunpack.c.h.b16 %v29
  %v209 = vunpack.c.l.b16 %v30
  %v210 = vunpack.c.l.b16 %v31
  %v211 = vunpack.c.h.b16 %v31
  %v212 = vunpack.c.l.b16 %v32
  %v213 = vunpack.c.l.b16 %v33
  %v214 = vunpack.c.h.b16 %v33
  %v215 = vunpack.c.l.b16 %v34
  %v216 = vunpack.c.l.b16 %v35
  %v217 = vunpack.c.h.b16 %v35
  %v218 = vunpack.c.l.b16 %v36
  %v219 = vunpack.c.l.b16 %v37
  %v220 = vunpack.c.h.b16 %v37
  %v221 = vunpack.c.l.b16 %v38
  %v222 = vunpack.c.l.b16 %v39
  %v223 = vunpack.c.h.b16 %v39
  %v224 = vunpack.c.l.b16 %v40
  %v225 = vunpack.c.l.b16 %v41
  %v226 = vunpack.c.h.b16 %v41
  %v227 = vunpack.c.l.b16 %v42
  %v228 = vunpack.c.l.b16 %v43
  %v229 = vunpack.c.h.b16 %v43
  %v230 = vunpack.c.l.b16 %v44
  %v231 = vunpack.c.l.b16 %v45
  %v232 = vunpack.c.h.b16 %v45
  %v233 = vunpack.c.l.b16 %v46
  %v234 = vunpack.c.l.b16 %v47
  %v235 = vunpack.c.h.b16 %v47
  %v236 = vunpack.c.l.b16 %v48
  %v237 = vunpack.c.l.b16 %v49
  %v238 = vunpack.c.h.b16 %v49
  %v239 = vunpack.c.l.b16 %v50
  %v240 = vunpack.c.l.b16 %v51
  %v241 = vunpack.c.h.b16 %v51
  %v242 = vunpack.c.l.b16 %v52
  %v243 = vunpack.c.l.b16 %v53
  %v244 = vunpack.c.h.b16 %v53
  %v245 = vunpack.c.l.b16 %v54
  %v246 = vunpack.c.l.b16 %v55
  %v247 = vunpack.c.h.b16 %v55
  %v248 = vunpack.c.l.b16 %v56
  %v249 = vunpack.c.l.b16 %v57
  %v250 = vunpack.c.h.b16 %v57
  %v251 = vunpack.c.l.b16 %v58
  %v252 = vunpack.c.l.b16 %v59
  %v253 = vunpack.c.h.b16 %v59
  %v254 = vunpack.c.l.b16 %v60
  %v255 = vunpack.c.l.b16 %v61
  %v256 = vunpack.c.h.b16 %v61
  %v257 = vunpack.c.l.b16 %v62
  %v258 = vunpack.c.l.b16 %v63
  %v259 = vunpack.c.h.b16 %v63
  %v260 = vunpack.c.l.b16 %v64
  %v261 = vunpack.c.l.b16 %v65
  %v262 = vunpack.c.h.b16 %v65
  %v263 = vunpack.c.l.b16 %v66
  %v264 = vunpack.c.l.b16 %v67
  %v265 = vunpack.c.h.b16 %v67
  %v266 = vunpack.c.l.b16 %v68
  %v267 = vunpack.c.l.b16 %v69
  %v268 = vunpack.c.h.b16 %v69
  %v269 = vunpack.c.l.b16 %v70
  %v270 = vunpack.c.l.b16 %v71
  %v271 = vunpack.c.h.b16 %v71
  %v272 = vunpack.c.l.b16 %v72
  %v273 = vunpack.c.l.b16 %v73
  %v274 = vunpack.c.h.b16 %v73
  %v275 = vunpack.c.l.b16 %v74
  %v276 = vunpack.c.l.b16 %v75
  %v277 = vunpack.c.h.b16 %v75
  %v278 = vunpack.c.l.b16 %v76
  %v279 = vunpack.c.l.b16 %v77
  %v280 = vunpack.c.h.b16 %v77
  %v281 = vunpack.c.l.b16 %v78
  %v282 = vpack.c.b16 %v189, %v186
  %v283 = vpack.c.b16 %v190, %v187
  %v284 = vpack.c.b16 %v191, %v188
  %v285 = vpack.c.b16 %v195, %v192
  %v286 = vpack.c.b16 %v196, %v193
  %v287 = vpack.c.b16 %v197, %v194
  %v288 = vpack.c.b16 %v201, %v198
  %v289 = vpack.c.b16 %v202, %v199
  %v290 = vpack.c.b16 %v203, %v200
  %v291 = vpack.c.b16 %v207, %v204
  %v292 = vpack.c.b16 %v208, %v205
  %v293 = vpack.c.b16 %v209, %v206
  %v294 = vpack.c.b16 %v213, %v210
  %v295 = vpack.c.b16 %v214, %v211
  %v296 = vpack.c.b16 %v215, %v212
  %v297 = vpack.c.b16 %v219, %v216
  %v298 = vpack.c.b16 %v220, %v217
  %v299 = vpack.c.b16 %v221, %v218
  %v300 = vpack.c.b16 %v225, %v222
  %v301 = vpack.c.b16 %v226, %v223
  %v302 = vpack.c.b16 %v227, %v224
  %v303 = vpack.c.b16 %v231, %v228
  %v304 = vpack.c.b16 %v232, %v229
  %v305 = vpack.c.b16 %v233, %v230
  %v306 = vpack.c.b16 %v237, %v234
  %v307 = vpack.c.b16 %v238, %v235
  %v308 = vpack.c.b16 %v239, %v236
  %v309 = vpack.c.b16 %v243, %v240
  %v310 = vpack.c.b16 %v244, %v241
  %v311 = vpack.c.b16 %v245, %v242
  %v312 = vpack.c.b16 %v249, %v246
  %v313 = vpack.c.b16 %v250, %v247
  %v314 = vpack.c.b16 %v251, %v248
  %v315 = vpack.c.b16 %v255, %v252
  %v316 = vpack.c.b16 %v256, %v253
  %v317 = vpack.c.b16 %v257, %v254
  %v318 = vpack.c.b16 %v261, %v258
  %v319 = vpack.c.b16 %v262, %v259
  %v320 = vpack.c.b16 %v263, %v260
  %v321 = vpack.c.b16 %v267, %v264
  %v322 = vpack.c.b16 %v268, %v265
  %v323 = vpack.c.b16 %v269, %v266
  %v324 = vpack.c.b16 %v273, %v270
  %v325 = vpack.c.b16 %v274, %v271
  %v326 = vpack.c.b16 %v275, %v272
  %v327 = vpack.c.b16 %v279, %v276
  %v328 = vpack.c.b16 %v280, %v277
  %v329 = vpack.c.b16 %v281, %v278
  %v398 = vunpack.c.l.b16 %v79
  %v399 = vunpack.c.l.b16 %v80
  %v400 = vunpack.c.l.b16 %v81
  %v401 = vunpack.c.l.b16 %v82
  %v402 = vunpack.c.l.b16 %v83
  %v403 = vunpack.c.l.b16 %v84
  %v404 = vunpack.c.l.b16 %v85
  %v405 = vunpack.c.l.b16 %v86
  %v406 = vunpack.c.l.b16 %v87
  %v407 = vunpack.c.l.b16 %v88
  %v408 = vunpack.c.l.b16 %v89
  %v409 = vunpack.c.l.b16 %v90
  %v410 = vunpack.c.l.b16 %v91
  %v411 = vunpack.c.l.b16 %v92
  %v412 = vunpack.c.l.b16 %v93
  %v413 = vunpack.c.l.b16 %v94
  %v414 = vunpack.c.l.b16 %v95
  %v415 = vunpack.c.l.b16 %v96
  %v416 = vunpack.c.l.b16 %v97
  %v417 = vunpack.c.l.b16 %v98
  %v418 = vunpack.c.l.b16 %v99
  %v419 = vunpack.c.l.b16 %v100
  %v420 = vunpack.c.l.b16 %v101
  %v421 = vunpack.c.l.b16 %v102
  %v422 = vunpack.c.l.b16 %v103
  %v423 = vunpack.c.l.b16 %v104
  %v424 = vunpack.c.l.b16 %v105
  %v425 = vunpack.c.l.b16 %v106
  %v426 = vunpack.c.l.b16 %v107
  %v427 = vunpack.c.l.b16 %v108
  %v428 = vunpack.c.l.b16 %v109
  %v429 = vunpack.c.l.b16 %v110
  %v430 = vunpack.c.l.b16 %v111
  %v431 = vunpack.c.l.b16 %v112
  %v432 = vunpack.c.l.b16 %v113
  %v433 = vunpack.c.l.b16 %v114
  %v434 = vpack.c.b16 %v399, %v398
  %v435 = vpack.c.b16 %v401, %v400
  %v436 = vpack.c.b16 %v403, %v402
  %v437 = vpack.c.b16 %v405, %v404
  %v438 = vpack.c.b16 %v407, %v406
  %v439 = vpack.c.b16 %v409, %v408
  %v440 = vpack.c.b16 %v411, %v410
  %v441 = vpack.c.b16 %v413, %v412
  %v442 = vpack.c.b16 %v415, %v414
  %v443 = vpack.c.b16 %v417, %v416
  %v444 = vpack.c.b16 %v419, %v418
  %v445 = vpack.c.b16 %v421, %v420
  %v446 = vpack.c.b16 %v423, %v422
  %v447 = vpack.c.b16 %v425, %v424
  %v448 = vpack.c.b16 %v427, %v426
  %v449 = vpack.c.b16 %v429, %v428
  %v450 = vpack.c.b16 %v431, %v430
  %v451 = vpack.c.b16 %v433, %v432
  %vm470 = vcmask 261120
  %v472 = vsel %vm470, %v284, 0
  %v475 = vsel %vm470, %v287, 0
  %v478 = vsel %vm470, %v290, 0
  %v481 = vsel %vm470, %v293, 0
  %v484 = vsel %vm470, %v296, 0
  %v487 = vsel %vm470, %v299, 0
  %v490 = vsel %vm470, %v302, 0
  %v493 = vsel %vm470, %v305, 0
  %v496 = vsel %vm470, %v308, 0
  %v499 = vsel %vm470, %v311, 0
  %v502 = vsel %vm470, %v314, 0
  %v505 = vsel %vm470, %v317, 0
  %v508 = vsel %vm470, %v320, 0
  %v511 = vsel %vm470, %v323, 0
  %v514 = vsel %vm470, %v326, 0
  %v517 = vsel %vm470, %v329, 0
  %519 = vmatprep.subr.bf16.mxu0 0
  %520 = vmatpush1.bf16.msra.mxu0 %v441
  %521 = vmatprep.subr.bf16.mxu0 0
  %522 = vmatpush1.bf16.msra.mxu0 %v440
  %523 = vmatprep.subr.bf16.mxu0 0
  %524 = vmatpush1.bf16.msra.mxu0 %v439
  %525 = vmatprep.subr.bf16.mxu0 0
  %526 = vmatpush1.bf16.msra.mxu0 %v438
  %527 = vmatprep.subr.bf16.mxu0 0
  %528 = vmatpush1.bf16.msra.mxu0 %v437
  %529 = vmatprep.subr.bf16.mxu0 0
  %530 = vmatpush1.bf16.msra.mxu0 %v436
  %531 = vmatprep.subr.bf16.mxu0 0
  %532 = vmatpush1.bf16.msra.mxu0 %v435
  %533 = vmatprep.subr.bf16.mxu0 0
  %534 = vmatpush1.bf16.msra.mxu0 %v434
  %535 = vmatprep.subr.bf16.mxu0 0
  %536 = vmatpush2.bf16.msra.mxu0 %v449
  %537 = vmatprep.subr.bf16.mxu0 0
  %538 = vmatpush2.bf16.msra.mxu0 %v448
  %539 = vmatprep.subr.bf16.mxu0 0
  %540 = vmatpush2.bf16.msra.mxu0 %v447
  %541 = vmatprep.subr.bf16.mxu0 0
  %542 = vmatpush2.bf16.msra.mxu0 %v446
  %543 = vmatprep.subr.bf16.mxu0 0
  %544 = vmatpush2.bf16.msra.mxu0 %v445
  %545 = vmatprep.subr.bf16.mxu0 0
  %546 = vmatpush2.bf16.msra.mxu0 %v444
  %547 = vmatprep.subr.bf16.mxu0 0
  %548 = vmatpush2.bf16.msra.mxu0 %v443
  %549 = vmatprep.subr.bf16.mxu0 0
  %550 = vmatpush2.bf16.msra.mxu0 %v442
  %551 = vmatprep.mubr.bf16.mxu0 %v283
  %552 = vmatmul.mubr.bf16.gmra.mxu0 %v282
  %v553 = vpop.f32.mrf.mxu0
  %v554 = vadd.f32 %v120, %v553
  %v555 = vpop.f32.mrf.mxu0
  %v556 = vpop.f32.mrf.mxu0
  %v557 = vadd.f32 %v120, %v556
  %v558 = vpop.f32.mrf.mxu0
  %559 = vmatprep.mubr.bf16.mxu0 %v286
  %560 = vmatmul.mubr.bf16.gmra.mxu0 %v285
  %v561 = vpop.f32.mrf.mxu0
  %v562 = vadd.f32 %v120, %v561
  %v563 = vpop.f32.mrf.mxu0
  %v564 = vpop.f32.mrf.mxu0
  %v565 = vadd.f32 %v120, %v564
  %v566 = vpop.f32.mrf.mxu0
  %567 = vmatprep.mubr.bf16.mxu0 %v289
  %568 = vmatmul.mubr.bf16.gmra.mxu0 %v288
  %v569 = vpop.f32.mrf.mxu0
  %v570 = vadd.f32 %v120, %v569
  %v571 = vpop.f32.mrf.mxu0
  %v572 = vpop.f32.mrf.mxu0
  %v573 = vadd.f32 %v120, %v572
  %v574 = vpop.f32.mrf.mxu0
  %575 = vmatprep.mubr.bf16.mxu0 %v292
  %576 = vmatmul.mubr.bf16.gmra.mxu0 %v291
  %v577 = vpop.f32.mrf.mxu0
  %v578 = vadd.f32 %v120, %v577
  %v579 = vpop.f32.mrf.mxu0
  %v580 = vpop.f32.mrf.mxu0
  %v581 = vadd.f32 %v120, %v580
  %v582 = vpop.f32.mrf.mxu0
  %583 = vmatprep.mubr.bf16.mxu0 %v295
  %584 = vmatmul.mubr.bf16.gmra.mxu0 %v294
  %v585 = vpop.f32.mrf.mxu0
  %v586 = vadd.f32 %v120, %v585
  %v587 = vpop.f32.mrf.mxu0
  %v588 = vpop.f32.mrf.mxu0
  %v589 = vadd.f32 %v120, %v588
  %v590 = vpop.f32.mrf.mxu0
  %591 = vmatprep.mubr.bf16.mxu0 %v298
  %592 = vmatmul.mubr.bf16.gmra.mxu0 %v297
  %v593 = vpop.f32.mrf.mxu0
  %v594 = vadd.f32 %v120, %v593
  %v595 = vpop.f32.mrf.mxu0
  %v596 = vpop.f32.mrf.mxu0
  %v597 = vadd.f32 %v120, %v596
  %v598 = vpop.f32.mrf.mxu0
  %599 = vmatprep.mubr.bf16.mxu0 %v301
  %600 = vmatmul.mubr.bf16.gmra.mxu0 %v300
  %v601 = vpop.f32.mrf.mxu0
  %v602 = vadd.f32 %v120, %v601
  %v603 = vpop.f32.mrf.mxu0
  %v604 = vpop.f32.mrf.mxu0
  %v605 = vadd.f32 %v120, %v604
  %v606 = vpop.f32.mrf.mxu0
  %607 = vmatprep.mubr.bf16.mxu0 %v304
  %608 = vmatmul.mubr.bf16.gmra.mxu0 %v303
  %v609 = vpop.f32.mrf.mxu0
  %v610 = vadd.f32 %v120, %v609
  %v611 = vpop.f32.mrf.mxu0
  %v612 = vpop.f32.mrf.mxu0
  %v613 = vadd.f32 %v120, %v612
  %v614 = vpop.f32.mrf.mxu0
  %615 = vmatprep.mubr.bf16.mxu0 %v307
  %616 = vmatmul.mubr.bf16.gmra.mxu0 %v306
  %v617 = vpop.f32.mrf.mxu0
  %v618 = vadd.f32 %v120, %v617
  %v619 = vpop.f32.mrf.mxu0
  %v620 = vpop.f32.mrf.mxu0
  %v621 = vadd.f32 %v120, %v620
  %v622 = vpop.f32.mrf.mxu0
  %623 = vmatprep.mubr.bf16.mxu0 %v310
  %624 = vmatmul.mubr.bf16.gmra.mxu0 %v309
  %v625 = vpop.f32.mrf.mxu0
  %v626 = vadd.f32 %v120, %v625
  %v627 = vpop.f32.mrf.mxu0
  %v628 = vpop.f32.mrf.mxu0
  %v629 = vadd.f32 %v120, %v628
  %v630 = vpop.f32.mrf.mxu0
  %631 = vmatprep.mubr.bf16.mxu0 %v313
  %632 = vmatmul.mubr.bf16.gmra.mxu0 %v312
  %v633 = vpop.f32.mrf.mxu0
  %v634 = vadd.f32 %v120, %v633
  %v635 = vpop.f32.mrf.mxu0
  %v636 = vpop.f32.mrf.mxu0
  %v637 = vadd.f32 %v120, %v636
  %v638 = vpop.f32.mrf.mxu0
  %639 = vmatprep.mubr.bf16.mxu0 %v316
  %640 = vmatmul.mubr.bf16.gmra.mxu0 %v315
  %v641 = vpop.f32.mrf.mxu0
  %v642 = vadd.f32 %v120, %v641
  %v643 = vpop.f32.mrf.mxu0
  %v644 = vpop.f32.mrf.mxu0
  %v645 = vadd.f32 %v120, %v644
  %v646 = vpop.f32.mrf.mxu0
  %647 = vmatprep.mubr.bf16.mxu0 %v319
  %648 = vmatmul.mubr.bf16.gmra.mxu0 %v318
  %v649 = vpop.f32.mrf.mxu0
  %v650 = vadd.f32 %v120, %v649
  %v651 = vpop.f32.mrf.mxu0
  %v652 = vpop.f32.mrf.mxu0
  %v653 = vadd.f32 %v120, %v652
  %v654 = vpop.f32.mrf.mxu0
  %655 = vmatprep.mubr.bf16.mxu0 %v322
  %656 = vmatmul.mubr.bf16.gmra.mxu0 %v321
  %v657 = vpop.f32.mrf.mxu0
  %v658 = vadd.f32 %v120, %v657
  %v659 = vpop.f32.mrf.mxu0
  %v660 = vpop.f32.mrf.mxu0
  %v661 = vadd.f32 %v120, %v660
  %v662 = vpop.f32.mrf.mxu0
  %663 = vmatprep.mubr.bf16.mxu0 %v325
  %664 = vmatmul.mubr.bf16.gmra.mxu0 %v324
  %v665 = vpop.f32.mrf.mxu0
  %v666 = vadd.f32 %v120, %v665
  %v667 = vpop.f32.mrf.mxu0
  %v668 = vpop.f32.mrf.mxu0
  %v669 = vadd.f32 %v120, %v668
  %v670 = vpop.f32.mrf.mxu0
  %671 = vmatprep.mubr.bf16.mxu0 %v328
  %672 = vmatmul.mubr.bf16.gmra.mxu0 %v327
  %v673 = vpop.f32.mrf.mxu0
  %v674 = vadd.f32 %v120, %v673
  %v675 = vpop.f32.mrf.mxu0
  %v676 = vpop.f32.mrf.mxu0
  %v677 = vadd.f32 %v120, %v676
  %v678 = vpop.f32.mrf.mxu0
  %679 = vdwg.mxu0
  %680 = vmatprep.subr.bf16.mxu0 0
  %681 = vmatpush1.bf16.msra.mxu0 0
  %682 = vmatprep.subr.bf16.mxu0 0
  %683 = vmatpush1.bf16.msra.mxu0 0
  %684 = vmatprep.subr.bf16.mxu0 0
  %685 = vmatpush1.bf16.msra.mxu0 0
  %686 = vmatprep.subr.bf16.mxu0 0
  %687 = vmatpush1.bf16.msra.mxu0 0
  %688 = vmatprep.subr.bf16.mxu0 0
  %689 = vmatpush1.bf16.msra.mxu0 0
  %690 = vmatprep.subr.bf16.mxu0 0
  %691 = vmatpush1.bf16.msra.mxu0 0
  %692 = vmatprep.subr.bf16.mxu0 0
  %693 = vmatpush1.bf16.msra.mxu0 %v451
  %694 = vmatprep.subr.bf16.mxu0 0
  %695 = vmatpush1.bf16.msra.mxu0 %v450
  %696 = vmatprep.subr.bf16.mxu0 0
  %697 = vmatpush2.bf16.msra.mxu0 0
  %698 = vmatprep.subr.bf16.mxu0 0
  %699 = vmatpush2.bf16.msra.mxu0 0
  %700 = vmatprep.subr.bf16.mxu0 0
  %701 = vmatpush2.bf16.msra.mxu0 0
  %702 = vmatprep.subr.bf16.mxu0 0
  %703 = vmatpush2.bf16.msra.mxu0 0
  %704 = vmatprep.subr.bf16.mxu0 0
  %705 = vmatpush2.bf16.msra.mxu0 0
  %706 = vmatprep.subr.bf16.mxu0 0
  %707 = vmatpush2.bf16.msra.mxu0 0
  %708 = vmatprep.subr.bf16.mxu0 0
  %709 = vmatpush2.bf16.msra.mxu0 0
  %710 = vmatprep.subr.bf16.mxu0 0
  %711 = vmatpush2.bf16.msra.mxu0 0
  %712 = vmatprep.mubr.bf16.mxu0 0
  %713 = vmatmul.mubr.bf16.gmra.mxu0 %v472
  %v714 = vpop.f32.mrf.mxu0
  %v715 = vadd.f32 %v554, %v714
  %v716 = vpop.f32.mrf.mxu0
  %v717 = vpop.f32.mrf.mxu0
  %v718 = vadd.f32 %v557, %v717
  %v719 = vpop.f32.mrf.mxu0
  %720 = vmatprep.mubr.bf16.mxu0 0
  %721 = vmatmul.mubr.bf16.gmra.mxu0 %v475
  %v722 = vpop.f32.mrf.mxu0
  %v723 = vadd.f32 %v562, %v722
  %v724 = vpop.f32.mrf.mxu0
  %v725 = vpop.f32.mrf.mxu0
  %v726 = vadd.f32 %v565, %v725
  %v727 = vpop.f32.mrf.mxu0
  %728 = vmatprep.mubr.bf16.mxu0 0
  %729 = vmatmul.mubr.bf16.gmra.mxu0 %v478
  %v730 = vpop.f32.mrf.mxu0
  %v731 = vadd.f32 %v570, %v730
  %v732 = vpop.f32.mrf.mxu0
  %v733 = vpop.f32.mrf.mxu0
  %v734 = vadd.f32 %v573, %v733
  %v735 = vpop.f32.mrf.mxu0
  %736 = vmatprep.mubr.bf16.mxu0 0
  %737 = vmatmul.mubr.bf16.gmra.mxu0 %v481
  %v738 = vpop.f32.mrf.mxu0
  %v739 = vadd.f32 %v578, %v738
  %v740 = vpop.f32.mrf.mxu0
  %v741 = vpop.f32.mrf.mxu0
  %v742 = vadd.f32 %v581, %v741
  %v743 = vpop.f32.mrf.mxu0
  %744 = vmatprep.mubr.bf16.mxu0 0
  %745 = vmatmul.mubr.bf16.gmra.mxu0 %v484
  %v746 = vpop.f32.mrf.mxu0
  %v747 = vadd.f32 %v586, %v746
  %v748 = vpop.f32.mrf.mxu0
  %v749 = vpop.f32.mrf.mxu0
  %v750 = vadd.f32 %v589, %v749
  %v751 = vpop.f32.mrf.mxu0
  %752 = vmatprep.mubr.bf16.mxu0 0
  %753 = vmatmul.mubr.bf16.gmra.mxu0 %v487
  %v754 = vpop.f32.mrf.mxu0
  %v755 = vadd.f32 %v594, %v754
  %v756 = vpop.f32.mrf.mxu0
  %v757 = vpop.f32.mrf.mxu0
  %v758 = vadd.f32 %v597, %v757
  %v759 = vpop.f32.mrf.mxu0
  %760 = vmatprep.mubr.bf16.mxu0 0
  %761 = vmatmul.mubr.bf16.gmra.mxu0 %v490
  %v762 = vpop.f32.mrf.mxu0
  %v763 = vadd.f32 %v602, %v762
  %v764 = vpop.f32.mrf.mxu0
  %v765 = vpop.f32.mrf.mxu0
  %v766 = vadd.f32 %v605, %v765
  %v767 = vpop.f32.mrf.mxu0
  %768 = vmatprep.mubr.bf16.mxu0 0
  %769 = vmatmul.mubr.bf16.gmra.mxu0 %v493
  %v770 = vpop.f32.mrf.mxu0
  %v771 = vadd.f32 %v610, %v770
  %v772 = vpop.f32.mrf.mxu0
  %v773 = vpop.f32.mrf.mxu0
  %v774 = vadd.f32 %v613, %v773
  %v775 = vpop.f32.mrf.mxu0
  %776 = vmatprep.mubr.bf16.mxu0 0
  %777 = vmatmul.mubr.bf16.gmra.mxu0 %v496
  %v778 = vpop.f32.mrf.mxu0
  %v779 = vadd.f32 %v618, %v778
  %v780 = vpop.f32.mrf.mxu0
  %v781 = vpop.f32.mrf.mxu0
  %v782 = vadd.f32 %v621, %v781
  %v783 = vpop.f32.mrf.mxu0
  %784 = vmatprep.mubr.bf16.mxu0 0
  %785 = vmatmul.mubr.bf16.gmra.mxu0 %v499
  %v786 = vpop.f32.mrf.mxu0
  %v787 = vadd.f32 %v626, %v786
  %v788 = vpop.f32.mrf.mxu0
  %v789 = vpop.f32.mrf.mxu0
  %v790 = vadd.f32 %v629, %v789
  %v791 = vpop.f32.mrf.mxu0
  %792 = vmatprep.mubr.bf16.mxu0 0
  %793 = vmatmul.mubr.bf16.gmra.mxu0 %v502
  %v794 = vpop.f32.mrf.mxu0
  %v795 = vadd.f32 %v634, %v794
  %v796 = vpop.f32.mrf.mxu0
  %v797 = vpop.f32.mrf.mxu0
  %v798 = vadd.f32 %v637, %v797
  %v799 = vpop.f32.mrf.mxu0
  %800 = vmatprep.mubr.bf16.mxu0 0
  %801 = vmatmul.mubr.bf16.gmra.mxu0 %v505
  %v802 = vpop.f32.mrf.mxu0
  %v803 = vadd.f32 %v642, %v802
  %v804 = vpop.f32.mrf.mxu0
  %v805 = vpop.f32.mrf.mxu0
  %v806 = vadd.f32 %v645, %v805
  %v807 = vpop.f32.mrf.mxu0
  %808 = vmatprep.mubr.bf16.mxu0 0
  %809 = vmatmul.mubr.bf16.gmra.mxu0 %v508
  %v810 = vpop.f32.mrf.mxu0
  %v811 = vadd.f32 %v650, %v810
  %v812 = vpop.f32.mrf.mxu0
  %v813 = vpop.f32.mrf.mxu0
  %v814 = vadd.f32 %v653, %v813
  %v815 = vpop.f32.mrf.mxu0
  %816 = vmatprep.mubr.bf16.mxu0 0
  %817 = vmatmul.mubr.bf16.gmra.mxu0 %v511
  %v818 = vpop.f32.mrf.mxu0
  %v819 = vadd.f32 %v658, %v818
  %v820 = vpop.f32.mrf.mxu0
  %v821 = vpop.f32.mrf.mxu0
  %v822 = vadd.f32 %v661, %v821
  %v823 = vpop.f32.mrf.mxu0
  %824 = vmatprep.mubr.bf16.mxu0 0
  %825 = vmatmul.mubr.bf16.gmra.mxu0 %v514
  %v826 = vpop.f32.mrf.mxu0
  %v827 = vadd.f32 %v666, %v826
  %v828 = vpop.f32.mrf.mxu0
  %v829 = vpop.f32.mrf.mxu0
  %v830 = vadd.f32 %v669, %v829
  %v831 = vpop.f32.mrf.mxu0
  %832 = vmatprep.mubr.bf16.mxu0 0
  %833 = vmatmul.mubr.bf16.gmra.mxu0 %v517
  %v834 = vpop.f32.mrf.mxu0
  %v835 = vadd.f32 %v674, %v834
  %v836 = vpop.f32.mrf.mxu0
  %v837 = vpop.f32.mrf.mxu0
  %v838 = vadd.f32 %v677, %v837
  %v839 = vpop.f32.mrf.mxu0
  %840 = vdwg.mxu0
  %v841 = vmax.f32 %v715, 0.0
  %v842 = vmax.f32 %v718, 0.0
  %v843 = vmax.f32 %v723, 0.0
  %v844 = vmax.f32 %v726, 0.0
  %v845 = vmax.f32 %v731, 0.0
  %v846 = vmax.f32 %v734, 0.0
  %v847 = vmax.f32 %v739, 0.0
  %v848 = vmax.f32 %v742, 0.0
  %v849 = vmax.f32 %v747, 0.0
  %v850 = vmax.f32 %v750, 0.0
  %v851 = vmax.f32 %v755, 0.0
  %v852 = vmax.f32 %v758, 0.0
  %v853 = vmax.f32 %v763, 0.0
  %v854 = vmax.f32 %v766, 0.0
  %v855 = vmax.f32 %v771, 0.0
  %v856 = vmax.f32 %v774, 0.0
  %v857 = vmax.f32 %v779, 0.0
  %v858 = vmax.f32 %v782, 0.0
  %v859 = vmax.f32 %v787, 0.0
  %v860 = vmax.f32 %v790, 0.0
  %v861 = vmax.f32 %v795, 0.0
  %v862 = vmax.f32 %v798, 0.0
  %v863 = vmax.f32 %v803, 0.0
  %v864 = vmax.f32 %v806, 0.0
  %v865 = vmax.f32 %v811, 0.0
  %v866 = vmax.f32 %v814, 0.0
  %v867 = vmax.f32 %v819, 0.0
  %v868 = vmax.f32 %v822, 0.0
  %v869 = vmax.f32 %v827, 0.0
  %v870 = vmax.f32 %v830, 0.0
  %v871 = vmax.f32 %v835, 0.0
  %v872 = vmax.f32 %v838, 0.0
  %v873 = vpack.c.bf16 %v842, %v841
  %v874 = vpack.c.bf16 %v844, %v843
  %v875 = vpack.c.bf16 %v846, %v845
  %v876 = vpack.c.bf16 %v848, %v847
  %v877 = vpack.c.bf16 %v850, %v849
  %v878 = vpack.c.bf16 %v852, %v851
  %v879 = vpack.c.bf16 %v854, %v853
  %v880 = vpack.c.bf16 %v856, %v855
  %v881 = vpack.c.bf16 %v858, %v857
  %v882 = vpack.c.bf16 %v860, %v859
  %v883 = vpack.c.bf16 %v862, %v861
  %v884 = vpack.c.bf16 %v864, %v863
  %v885 = vpack.c.bf16 %v866, %v865
  %v886 = vpack.c.bf16 %v868, %v867
  %v887 = vpack.c.bf16 %v870, %v869
  %v888 = vpack.c.bf16 %v872, %v871
  %v905 = vunpack.c.l.b16 %v873
  %v906 = vunpack.c.h.b16 %v873
  %v907 = vunpack.c.l.b16 %v874
  %v908 = vunpack.c.h.b16 %v874
  %v909 = vunpack.c.l.b16 %v875
  %v910 = vunpack.c.h.b16 %v875
  %v911 = vunpack.c.l.b16 %v876
  %v912 = vunpack.c.h.b16 %v876
  %v913 = vunpack.c.l.b16 %v877
  %v914 = vunpack.c.h.b16 %v877
  %v915 = vunpack.c.l.b16 %v878
  %v916 = vunpack.c.h.b16 %v878
  %v917 = vunpack.c.l.b16 %v879
  %v918 = vunpack.c.h.b16 %v879
  %v919 = vunpack.c.l.b16 %v880
  %v920 = vunpack.c.h.b16 %v880
  %v921 = vunpack.c.l.b16 %v881
  %v922 = vunpack.c.h.b16 %v881
  %v923 = vunpack.c.l.b16 %v882
  %v924 = vunpack.c.h.b16 %v882
  %v925 = vunpack.c.l.b16 %v883
  %v926 = vunpack.c.h.b16 %v883
  %v927 = vunpack.c.l.b16 %v884
  %v928 = vunpack.c.h.b16 %v884
  %v929 = vunpack.c.l.b16 %v885
  %v930 = vunpack.c.h.b16 %v885
  %v931 = vunpack.c.l.b16 %v886
  %v932 = vunpack.c.h.b16 %v886
  %v933 = vunpack.c.l.b16 %v887
  %v934 = vunpack.c.h.b16 %v887
  %v935 = vunpack.c.l.b16 %v888
  %v936 = vunpack.c.h.b16 %v888
  %v937 = vpack.c.b16 %v905, %v905
  %v938 = vpack.c.b16 %v906, %v906
  %v939 = vpack.c.b16 %v907, %v907
  %v940 = vpack.c.b16 %v908, %v908
  %v941 = vpack.c.b16 %v909, %v909
  %v942 = vpack.c.b16 %v910, %v910
  %v943 = vpack.c.b16 %v911, %v911
  %v944 = vpack.c.b16 %v912, %v912
  %v945 = vpack.c.b16 %v913, %v913
  %v946 = vpack.c.b16 %v914, %v914
  %v947 = vpack.c.b16 %v915, %v915
  %v948 = vpack.c.b16 %v916, %v916
  %v949 = vpack.c.b16 %v917, %v917
  %v950 = vpack.c.b16 %v918, %v918
  %v951 = vpack.c.b16 %v919, %v919
  %v952 = vpack.c.b16 %v920, %v920
  %v953 = vpack.c.b16 %v921, %v921
  %v954 = vpack.c.b16 %v922, %v922
  %v955 = vpack.c.b16 %v923, %v923
  %v956 = vpack.c.b16 %v924, %v924
  %v957 = vpack.c.b16 %v925, %v925
  %v958 = vpack.c.b16 %v926, %v926
  %v959 = vpack.c.b16 %v927, %v927
  %v960 = vpack.c.b16 %v928, %v928
  %v961 = vpack.c.b16 %v929, %v929
  %v962 = vpack.c.b16 %v930, %v930
  %v963 = vpack.c.b16 %v931, %v931
  %v964 = vpack.c.b16 %v932, %v932
  %v965 = vpack.c.b16 %v933, %v933
  %v966 = vpack.c.b16 %v934, %v934
  %v967 = vpack.c.b16 %v935, %v935
  %v968 = vpack.c.b16 %v936, %v936
  %vm1001 = vcmask 519168
  %1002 = vst.msk [vmem:[%s3] sm:$0xf] %vm1001, %v937
  %1003 = vst.msk [vmem:[%s3 + $0x4] sm:$0xf] %vm1001, %v938
  %1004 = vst.msk [vmem:[%s3 + $0x8] sm:$0xf] %vm1001, %v939
  %1005 = vst.msk [vmem:[%s3 + $0xc] sm:$0xf] %vm1001, %v940
  %1006 = vst.msk [vmem:[%s3 + $0x10] sm:$0xf] %vm1001, %v941
  %1007 = vst.msk [vmem:[%s3 + $0x14] sm:$0xf] %vm1001, %v942
  %1008 = vst.msk [vmem:[%s3 + $0x18] sm:$0xf] %vm1001, %v943
  %1009 = vst.msk [vmem:[%s3 + $0x1c] sm:$0xf] %vm1001, %v944
  %1010 = vst.msk [vmem:[%s3 + $0x20] sm:$0xf] %vm1001, %v945
  %1011 = vst.msk [vmem:[%s3 + $0x24] sm:$0xf] %vm1001, %v946
  %1012 = vst.msk [vmem:[%s3 + $0x28] sm:$0xf] %vm1001, %v947
  %1013 = vst.msk [vmem:[%s3 + $0x2c] sm:$0xf] %vm1001, %v948
  %1014 = vst.msk [vmem:[%s3 + $0x30] sm:$0xf] %vm1001, %v949
  %1015 = vst.msk [vmem:[%s3 + $0x34] sm:$0xf] %vm1001, %v950
  %1016 = vst.msk [vmem:[%s3 + $0x38] sm:$0xf] %vm1001, %v951
  %1017 = vst.msk [vmem:[%s3 + $0x3c] sm:$0xf] %vm1001, %v952
  %1018 = vst.msk [vmem:[%s3 + $0x40] sm:$0xf] %vm1001, %v953
  %1019 = vst.msk [vmem:[%s3 + $0x44] sm:$0xf] %vm1001, %v954
  %1020 = vst.msk [vmem:[%s3 + $0x48] sm:$0xf] %vm1001, %v955
  %1021 = vst.msk [vmem:[%s3 + $0x4c] sm:$0xf] %vm1001, %v956
  %1022 = vst.msk [vmem:[%s3 + $0x50] sm:$0xf] %vm1001, %v957
  %1023 = vst.msk [vmem:[%s3 + $0x54] sm:$0xf] %vm1001, %v958
  %1024 = vst.msk [vmem:[%s3 + $0x58] sm:$0xf] %vm1001, %v959
  %1025 = vst.msk [vmem:[%s3 + $0x5c] sm:$0xf] %vm1001, %v960
  %1026 = vst.msk [vmem:[%s3 + $0x60] sm:$0xf] %vm1001, %v961
  %1027 = vst.msk [vmem:[%s3 + $0x64] sm:$0xf] %vm1001, %v962
  %1028 = vst.msk [vmem:[%s3 + $0x68] sm:$0xf] %vm1001, %v963
  %1029 = vst.msk [vmem:[%s3 + $0x6c] sm:$0xf] %vm1001, %v964
  %1030 = vst.msk [vmem:[%s3 + $0x70] sm:$0xf] %vm1001, %v965
  %1031 = vst.msk [vmem:[%s3 + $0x74] sm:$0xf] %vm1001, %v966
  %1032 = vst.msk [vmem:[%s3 + $0x78] sm:$0xf] %vm1001, %v967
  %1033 = vst.msk [vmem:[%s3 + $0x7c] sm:$0xf] %vm1001, %v968
  // Predicated region
  $region14: #{lnn_forward.6} parent=0 // pred_check
    _
  $region15: #{lnn_forward.6} parent=0 // pred_check_branch
    %1035 = sbr.rel (0) target = $region17
  $region16: #{lnn_forward.6} parent=0 // pred_region
    _
  $region17: #{lnn_forward.6} parent=0 // pred_fallthru
    _
  // Predicated region
  $region18: #{lnn_forward.6} parent=0 // pred_check
    _
  $region19: #{lnn_forward.6} parent=0 // pred_check_branch
    %1037 = sbr.rel (0) target = $region21
  $region20: #{lnn_forward.6} parent=0 // pred_region
    _
  $region21: #{lnn_forward.6} parent=0 // pred_fallthru
    _

// kernel: lnn_forward.7
$region0: #{lnn_forward.7}
  #allocation0 [shape = 'u32[]', space=smem, size = 0x4, offset = 0x4, fixed_abs, tag = 'smem constant byte address 0x4 - core index']
  #allocation1 [shape = 'u32[144,128]{1,0:T(1,128)}', space=vmem, size = 0x12000, scoped, tag = 'internal scratch']
  %s0 = inlined_call_operand.vmem [shape: bf16[16,4096], index: 0, kind: input, shape index: {}]
  %s1 = inlined_call_operand.vmem [shape: bf16[4096,128], index: 1, kind: input, shape index: {}]
  %s2 = inlined_call_operand.vmem [shape: f32[1,128], index: 2, kind: input, shape index: {}]
  %s3 = inlined_call_operand.vmem [shape: bf16[128,128], index: 3, kind: input, shape index: {}]
  %s4 = inlined_call_operand.vmem [shape: f32[1,128], index: 4, kind: input, shape index: {}]
  %s5 = inlined_call_operand.vmem [shape: bf16[128,128], index: 5, kind: input, shape index: {}]
  %s6 = inlined_call_operand.vmem [shape: f32[1,128], index: 6, kind: input, shape index: {}]
  %s7 = inlined_call_operand.vmem [shape: f32[16,128], index: 7, kind: output, shape index: {}]
  %s8 = sld [smem:[#allocation0]]
  $region38: #{lnn_forward.7} parent=0
    _
  %s10 = ssub.s32 1, %s8
  %s11 = scalar_select 0, %s10, %s8
  // Predicated region
  $region2: #{lnn_forward.7} parent=0 // pred_check
    _
  $region3: #{lnn_forward.7} parent=0 // pred_check_branch
    %13 = sbr.rel (0) target = $region5
  $region4: #{lnn_forward.7} parent=0 // pred_region
    _
  $region5: #{lnn_forward.7} parent=0 // pred_fallthru
    _
  // Predicated region
  $region6: #{lnn_forward.7} parent=0 // pred_check
    _
  $region7: #{lnn_forward.7} parent=0 // pred_check_branch
    %15 = sbr.rel (0) target = $region9
  $region8: #{lnn_forward.7} parent=0 // pred_region
    _
  $region9: #{lnn_forward.7} parent=0 // pred_fallthru
    _
  // Predicated region
  $region10: #{lnn_forward.7} parent=0 // pred_check
    _
  $region11: #{lnn_forward.7} parent=0 // pred_check_branch
    %17 = sbr.rel (0) target = $region13
  $region12: #{lnn_forward.7} parent=0 // pred_region
    _
  $region13: #{lnn_forward.7} parent=0 // pred_fallthru
    _
  // Predicated region
  $region14: #{lnn_forward.7} parent=0 // pred_check
    _
  $region15: #{lnn_forward.7} parent=0 // pred_check_branch
    %19 = sbr.rel (0) target = $region17
  $region16: #{lnn_forward.7} parent=0 // pred_region
    _
  $region17: #{lnn_forward.7} parent=0 // pred_fallthru
    _
  // Predicated region
  $region18: #{lnn_forward.7} parent=0 // pred_check
    _
  $region19: #{lnn_forward.7} parent=0 // pred_check_branch
    %21 = sbr.rel (0) target = $region21
  $region20: #{lnn_forward.7} parent=0 // pred_region
    _
  $region21: #{lnn_forward.7} parent=0 // pred_fallthru
    _
  // Predicated region
  $region22: #{lnn_forward.7} parent=0 // pred_check
    _
  $region23: #{lnn_forward.7} parent=0 // pred_check_branch
    %23 = sbr.rel (0) target = $region25
  $region24: #{lnn_forward.7} parent=0 // pred_region
    _
  $region25: #{lnn_forward.7} parent=0 // pred_fallthru
    _
  // Predicated region
  $region26: #{lnn_forward.7} parent=0 // pred_check
    _
  $region27: #{lnn_forward.7} parent=0 // pred_check_branch
    %25 = sbr.rel (0) target = $region29
  $region28: #{lnn_forward.7} parent=0 // pred_region
    _
  $region29: #{lnn_forward.7} parent=0 // pred_fallthru
    _
  %v27 = vld [vmem:[%s0] sm:$0xff]
  %v28 = vld [vmem:[%s0 + $0x8] sm:$0xff]
  %v29 = vld [vmem:[%s0 + $0x10] sm:$0xff]
  %v30 = vld [vmem:[%s0 + $0x18] sm:$0xff]
  %v31 = vld [vmem:[%s0 + $0x20] sm:$0xff]
  %v32 = vld [vmem:[%s0 + $0x28] sm:$0xff]
  %v33 = vld [vmem:[%s0 + $0x30] sm:$0xff]
  %v34 = vld [vmem:[%s0 + $0x38] sm:$0xff]
  %v35 = vld [vmem:[%s0 + $0x40] sm:$0xff]
  %v36 = vld [vmem:[%s0 + $0x48] sm:$0xff]
  %v37 = vld [vmem:[%s0 + $0x50] sm:$0xff]
  %v38 = vld [vmem:[%s0 + $0x58] sm:$0xff]
  %v39 = vld [vmem:[%s0 + $0x60] sm:$0xff]
  %v40 = vld [vmem:[%s0 + $0x68] sm:$0xff]
  %v41 = vld [vmem:[%s0 + $0x70] sm:$0xff]
  %v42 = vld [vmem:[%s0 + $0x78] sm:$0xff]
  %v43 = vld [vmem:[%s0 + $0x80] sm:$0xff]
  %v44 = vld [vmem:[%s0 + $0x88] sm:$0xff]
  %v45 = vld [vmem:[%s0 + $0x90] sm:$0xff]
  %v46 = vld [vmem:[%s0 + $0x98] sm:$0xff]
  %v47 = vld [vmem:[%s0 + $0xa0] sm:$0xff]
  %v48 = vld [vmem:[%s0 + $0xa8] sm:$0xff]
  %v49 = vld [vmem:[%s0 + $0xb0] sm:$0xff]
  %v50 = vld [vmem:[%s0 + $0xb8] sm:$0xff]
  %v51 = vld [vmem:[%s0 + $0xc0] sm:$0xff]
  %v52 = vld [vmem:[%s0 + $0xc8] sm:$0xff]
  %v53 = vld [vmem:[%s0 + $0xd0] sm:$0xff]
  %v54 = vld [vmem:[%s0 + $0xd8] sm:$0xff]
  %v55 = vld [vmem:[%s0 + $0xe0] sm:$0xff]
  %v56 = vld [vmem:[%s0 + $0xe8] sm:$0xff]
  %v57 = vld [vmem:[%s0 + $0xf0] sm:$0xff]
  %v58 = vld [vmem:[%s0 + $0xf8] sm:$0xff]
  %v59 = vld [vmem:[%s1] sm:$0xf]
  %v60 = vld [vmem:[%s1 + $0x4] sm:$0xf]
  %v61 = vld [vmem:[%s1 + $0x8] sm:$0xf]
  %v62 = vld [vmem:[%s1 + $0xc] sm:$0xf]
  %v63 = vld [vmem:[%s1 + $0x10] sm:$0xf]
  %v64 = vld [vmem:[%s1 + $0x14] sm:$0xf]
  %v65 = vld [vmem:[%s1 + $0x18] sm:$0xf]
  %v66 = vld [vmem:[%s1 + $0x1c] sm:$0xf]
  %v67 = vld [vmem:[%s1 + $0x20] sm:$0xf]
  %v68 = vld [vmem:[%s1 + $0x24] sm:$0xf]
  %v69 = vld [vmem:[%s1 + $0x28] sm:$0xf]
  %v70 = vld [vmem:[%s1 + $0x2c] sm:$0xf]
  %v71 = vld [vmem:[%s1 + $0x30] sm:$0xf]
  %v72 = vld [vmem:[%s1 + $0x34] sm:$0xf]
  %v73 = vld [vmem:[%s1 + $0x38] sm:$0xf]
  %v74 = vld [vmem:[%s1 + $0x3c] sm:$0xf]
  %v75 = vld [vmem:[%s1 + $0x40] sm:$0xf]
  %v76 = vld [vmem:[%s1 + $0x44] sm:$0xf]
  %v77 = vld [vmem:[%s1 + $0x48] sm:$0xf]
  %v78 = vld [vmem:[%s1 + $0x4c] sm:$0xf]
  %v79 = vld [vmem:[%s1 + $0x50] sm:$0xf]
  %v80 = vld [vmem:[%s1 + $0x54] sm:$0xf]
  %v81 = vld [vmem:[%s1 + $0x58] sm:$0xf]
  %v82 = vld [vmem:[%s1 + $0x5c] sm:$0xf]
  %v83 = vld [vmem:[%s1 + $0x60] sm:$0xf]
  %v84 = vld [vmem:[%s1 + $0x64] sm:$0xf]
  %v85 = vld [vmem:[%s1 + $0x68] sm:$0xf]
  %v86 = vld [vmem:[%s1 + $0x6c] sm:$0xf]
  %v87 = vld [vmem:[%s1 + $0x70] sm:$0xf]
  %v88 = vld [vmem:[%s1 + $0x74] sm:$0xf]
  %v89 = vld [vmem:[%s1 + $0x78] sm:$0xf]
  %v90 = vld [vmem:[%s1 + $0x7c] sm:$0xf]
  %v91 = vld [vmem:[%s1 + $0x80] sm:$0xf]
  %v92 = vld [vmem:[%s1 + $0x84] sm:$0xf]
  %v93 = vld [vmem:[%s1 + $0x88] sm:$0xf]
  %v94 = vld [vmem:[%s1 + $0x8c] sm:$0xf]
  %v95 = vld [vmem:[%s1 + $0x90] sm:$0xf]
  %v96 = vld [vmem:[%s1 + $0x94] sm:$0xf]
  %v97 = vld [vmem:[%s1 + $0x98] sm:$0xf]
  %v98 = vld [vmem:[%s1 + $0x9c] sm:$0xf]
  %v99 = vld [vmem:[%s1 + $0xa0] sm:$0xf]
  %v100 = vld [vmem:[%s1 + $0xa4] sm:$0xf]
  %v101 = vld [vmem:[%s1 + $0xa8] sm:$0xf]
  %v102 = vld [vmem:[%s1 + $0xac] sm:$0xf]
  %v103 = vld [vmem:[%s1 + $0xb0] sm:$0xf]
  %v104 = vld [vmem:[%s1 + $0xb4] sm:$0xf]
  %v105 = vld [vmem:[%s1 + $0xb8] sm:$0xf]
  %v106 = vld [vmem:[%s1 + $0xbc] sm:$0xf]
  %v107 = vld [vmem:[%s1 + $0xc0] sm:$0xf]
  %v108 = vld [vmem:[%s1 + $0xc4] sm:$0xf]
  %v109 = vld [vmem:[%s1 + $0xc8] sm:$0xf]
  %v110 = vld [vmem:[%s1 + $0xcc] sm:$0xf]
  %v111 = vld [vmem:[%s1 + $0xd0] sm:$0xf]
  %v112 = vld [vmem:[%s1 + $0xd4] sm:$0xf]
  %v113 = vld [vmem:[%s1 + $0xd8] sm:$0xf]
  %v114 = vld [vmem:[%s1 + $0xdc] sm:$0xf]
  %v115 = vld [vmem:[%s1 + $0xe0] sm:$0xf]
  %v116 = vld [vmem:[%s1 + $0xe4] sm:$0xf]
  %v117 = vld [vmem:[%s1 + $0xe8] sm:$0xf]
  %v118 = vld [vmem:[%s1 + $0xec] sm:$0xf]
  %v119 = vld [vmem:[%s1 + $0xf0] sm:$0xf]
  %v120 = vld [vmem:[%s1 + $0xf4] sm:$0xf]
  %v121 = vld [vmem:[%s1 + $0xf8] sm:$0xf]
  %v122 = vld [vmem:[%s1 + $0xfc] sm:$0xf]
  %v123 = vld [vmem:[%s1 + $0x100] sm:$0xf]
  %v124 = vld [vmem:[%s1 + $0x104] sm:$0xf]
  %v125 = vld [vmem:[%s1 + $0x108] sm:$0xf]
  %v126 = vld [vmem:[%s1 + $0x10c] sm:$0xf]
  %v127 = vld [vmem:[%s1 + $0x110] sm:$0xf]
  %v128 = vld [vmem:[%s1 + $0x114] sm:$0xf]
  %v129 = vld [vmem:[%s1 + $0x118] sm:$0xf]
  %v130 = vld [vmem:[%s1 + $0x11c] sm:$0xf]
  %v131 = vld [vmem:[%s1 + $0x120] sm:$0xf]
  %v132 = vld [vmem:[%s1 + $0x124] sm:$0xf]
  %v133 = vld [vmem:[%s1 + $0x128] sm:$0xf]
  %v134 = vld [vmem:[%s1 + $0x12c] sm:$0xf]
  %v135 = vld [vmem:[%s1 + $0x130] sm:$0xf]
  %v136 = vld [vmem:[%s1 + $0x134] sm:$0xf]
  %v137 = vld [vmem:[%s1 + $0x138] sm:$0xf]
  %v138 = vld [vmem:[%s1 + $0x13c] sm:$0xf]
  %v139 = vld [vmem:[%s1 + $0x140] sm:$0xf]
  %v140 = vld [vmem:[%s1 + $0x144] sm:$0xf]
  %v141 = vld [vmem:[%s1 + $0x148] sm:$0xf]
  %v142 = vld [vmem:[%s1 + $0x14c] sm:$0xf]
  %v143 = vld [vmem:[%s1 + $0x150] sm:$0xf]
  %v144 = vld [vmem:[%s1 + $0x154] sm:$0xf]
  %v145 = vld [vmem:[%s1 + $0x158] sm:$0xf]
  %v146 = vld [vmem:[%s1 + $0x15c] sm:$0xf]
  %v147 = vld [vmem:[%s1 + $0x160] sm:$0xf]
  %v148 = vld [vmem:[%s1 + $0x164] sm:$0xf]
  %v149 = vld [vmem:[%s1 + $0x168] sm:$0xf]
  %v150 = vld [vmem:[%s1 + $0x16c] sm:$0xf]
  %v151 = vld [vmem:[%s1 + $0x170] sm:$0xf]
  %v152 = vld [vmem:[%s1 + $0x174] sm:$0xf]
  %v153 = vld [vmem:[%s1 + $0x178] sm:$0xf]
  %v154 = vld [vmem:[%s1 + $0x17c] sm:$0xf]
  %v155 = vld [vmem:[%s1 + $0x180] sm:$0xf]
  %v156 = vld [vmem:[%s1 + $0x184] sm:$0xf]
  %v157 = vld [vmem:[%s1 + $0x188] sm:$0xf]
  %v158 = vld [vmem:[%s1 + $0x18c] sm:$0xf]
  %v159 = vld [vmem:[%s1 + $0x190] sm:$0xf]
  %v160 = vld [vmem:[%s1 + $0x194] sm:$0xf]
  %v161 = vld [vmem:[%s1 + $0x198] sm:$0xf]
  %v162 = vld [vmem:[%s1 + $0x19c] sm:$0xf]
  %v163 = vld [vmem:[%s1 + $0x1a0] sm:$0xf]
  %v164 = vld [vmem:[%s1 + $0x1a4] sm:$0xf]
  %v165 = vld [vmem:[%s1 + $0x1a8] sm:$0xf]
  %v166 = vld [vmem:[%s1 + $0x1ac] sm:$0xf]
  %v167 = vld [vmem:[%s1 + $0x1b0] sm:$0xf]
  %v168 = vld [vmem:[%s1 + $0x1b4] sm:$0xf]
  %v169 = vld [vmem:[%s1 + $0x1b8] sm:$0xf]
  %v170 = vld [vmem:[%s1 + $0x1bc] sm:$0xf]
  %v171 = vld [vmem:[%s1 + $0x1c0] sm:$0xf]
  %v172 = vld [vmem:[%s1 + $0x1c4] sm:$0xf]
  %v173 = vld [vmem:[%s1 + $0x1c8] sm:$0xf]
  %v174 = vld [vmem:[%s1 + $0x1cc] sm:$0xf]
  %v175 = vld [vmem:[%s1 + $0x1d0] sm:$0xf]
  %v176 = vld [vmem:[%s1 + $0x1d4] sm:$0xf]
  %v177 = vld [vmem:[%s1 + $0x1d8] sm:$0xf]
  %v178 = vld [vmem:[%s1 + $0x1dc] sm:$0xf]
  %v179 = vld [vmem:[%s1 + $0x1e0] sm:$0xf]
  %v180 = vld [vmem:[%s1 + $0x1e4] sm:$0xf]
  %v181 = vld [vmem:[%s1 + $0x1e8] sm:$0xf]
  %v182 = vld [vmem:[%s1 + $0x1ec] sm:$0xf]
  %v183 = vld [vmem:[%s1 + $0x1f0] sm:$0xf]
  %v184 = vld [vmem:[%s1 + $0x1f4] sm:$0xf]
  %v185 = vld [vmem:[%s1 + $0x1f8] sm:$0xf]
  %v186 = vld [vmem:[%s1 + $0x1fc] sm:$0xf]
  %v187 = vld [vmem:[%s1 + $0x200] sm:$0xf]
  %v188 = vld [vmem:[%s1 + $0x204] sm:$0xf]
  %v189 = vld [vmem:[%s1 + $0x208] sm:$0xf]
  %v190 = vld [vmem:[%s1 + $0x20c] sm:$0xf]
  %v191 = vld [vmem:[%s1 + $0x210] sm:$0xf]
  %v192 = vld [vmem:[%s1 + $0x214] sm:$0xf]
  %v193 = vld [vmem:[%s1 + $0x218] sm:$0xf]
  %v194 = vld [vmem:[%s1 + $0x21c] sm:$0xf]
  %v195 = vld [vmem:[%s1 + $0x220] sm:$0xf]
  %v196 = vld [vmem:[%s1 + $0x224] sm:$0xf]
  %v197 = vld [vmem:[%s1 + $0x228] sm:$0xf]
  %v198 = vld [vmem:[%s1 + $0x22c] sm:$0xf]
  %v199 = vld [vmem:[%s1 + $0x230] sm:$0xf]
  %v200 = vld [vmem:[%s1 + $0x234] sm:$0xf]
  %v201 = vld [vmem:[%s1 + $0x238] sm:$0xf]
  %v202 = vld [vmem:[%s1 + $0x23c] sm:$0xf]
  %v203 = vld [vmem:[%s1 + $0x240] sm:$0xf]
  %v204 = vld [vmem:[%s1 + $0x244] sm:$0xf]
  %v205 = vld [vmem:[%s1 + $0x248] sm:$0xf]
  %v206 = vld [vmem:[%s1 + $0x24c] sm:$0xf]
  %v207 = vld [vmem:[%s1 + $0x250] sm:$0xf]
  %v208 = vld [vmem:[%s1 + $0x254] sm:$0xf]
  %v209 = vld [vmem:[%s1 + $0x258] sm:$0xf]
  %v210 = vld [vmem:[%s1 + $0x25c] sm:$0xf]
  %v211 = vld [vmem:[%s1 + $0x260] sm:$0xf]
  %v212 = vld [vmem:[%s1 + $0x264] sm:$0xf]
  %v213 = vld [vmem:[%s1 + $0x268] sm:$0xf]
  %v214 = vld [vmem:[%s1 + $0x26c] sm:$0xf]
  %v215 = vld [vmem:[%s1 + $0x270] sm:$0xf]
  %v216 = vld [vmem:[%s1 + $0x274] sm:$0xf]
  %v217 = vld [vmem:[%s1 + $0x278] sm:$0xf]
  %v218 = vld [vmem:[%s1 + $0x27c] sm:$0xf]
  %v219 = vld [vmem:[%s1 + $0x280] sm:$0xf]
  %v220 = vld [vmem:[%s1 + $0x284] sm:$0xf]
  %v221 = vld [vmem:[%s1 + $0x288] sm:$0xf]
  %v222 = vld [vmem:[%s1 + $0x28c] sm:$0xf]
  %v223 = vld [vmem:[%s1 + $0x290] sm:$0xf]
  %v224 = vld [vmem:[%s1 + $0x294] sm:$0xf]
  %v225 = vld [vmem:[%s1 + $0x298] sm:$0xf]
  %v226 = vld [vmem:[%s1 + $0x29c] sm:$0xf]
  %v227 = vld [vmem:[%s1 + $0x2a0] sm:$0xf]
  %v228 = vld [vmem:[%s1 + $0x2a4] sm:$0xf]
  %v229 = vld [vmem:[%s1 + $0x2a8] sm:$0xf]
  %v230 = vld [vmem:[%s1 + $0x2ac] sm:$0xf]
  %v231 = vld [vmem:[%s1 + $0x2b0] sm:$0xf]
  %v232 = vld [vmem:[%s1 + $0x2b4] sm:$0xf]
  %v233 = vld [vmem:[%s1 + $0x2b8] sm:$0xf]
  %v234 = vld [vmem:[%s1 + $0x2bc] sm:$0xf]
  %v235 = vld [vmem:[%s1 + $0x2c0] sm:$0xf]
  %v236 = vld [vmem:[%s1 + $0x2c4] sm:$0xf]
  %v237 = vld [vmem:[%s1 + $0x2c8] sm:$0xf]
  %v238 = vld [vmem:[%s1 + $0x2cc] sm:$0xf]
  %v239 = vld [vmem:[%s1 + $0x2d0] sm:$0xf]
  %v240 = vld [vmem:[%s1 + $0x2d4] sm:$0xf]
  %v241 = vld [vmem:[%s1 + $0x2d8] sm:$0xf]
  %v242 = vld [vmem:[%s1 + $0x2dc] sm:$0xf]
  %v243 = vld [vmem:[%s1 + $0x2e0] sm:$0xf]
  %v244 = vld [vmem:[%s1 + $0x2e4] sm:$0xf]
  %v245 = vld [vmem:[%s1 + $0x2e8] sm:$0xf]
  %v246 = vld [vmem:[%s1 + $0x2ec] sm:$0xf]
  %v247 = vld [vmem:[%s1 + $0x2f0] sm:$0xf]
  %v248 = vld [vmem:[%s1 + $0x2f4] sm:$0xf]
  %v249 = vld [vmem:[%s1 + $0x2f8] sm:$0xf]
  %v250 = vld [vmem:[%s1 + $0x2fc] sm:$0xf]
  %v251 = vld [vmem:[%s1 + $0x300] sm:$0xf]
  %v252 = vld [vmem:[%s1 + $0x304] sm:$0xf]
  %v253 = vld [vmem:[%s1 + $0x308] sm:$0xf]
  %v254 = vld [vmem:[%s1 + $0x30c] sm:$0xf]
  %v255 = vld [vmem:[%s1 + $0x310] sm:$0xf]
  %v256 = vld [vmem:[%s1 + $0x314] sm:$0xf]
  %v257 = vld [vmem:[%s1 + $0x318] sm:$0xf]
  %v258 = vld [vmem:[%s1 + $0x31c] sm:$0xf]
  %v259 = vld [vmem:[%s1 + $0x320] sm:$0xf]
  %v260 = vld [vmem:[%s1 + $0x324] sm:$0xf]
  %v261 = vld [vmem:[%s1 + $0x328] sm:$0xf]
  %v262 = vld [vmem:[%s1 + $0x32c] sm:$0xf]
  %v263 = vld [vmem:[%s1 + $0x330] sm:$0xf]
  %v264 = vld [vmem:[%s1 + $0x334] sm:$0xf]
  %v265 = vld [vmem:[%s1 + $0x338] sm:$0xf]
  %v266 = vld [vmem:[%s1 + $0x33c] sm:$0xf]
  %v267 = vld [vmem:[%s1 + $0x340] sm:$0xf]
  %v268 = vld [vmem:[%s1 + $0x344] sm:$0xf]
  %v269 = vld [vmem:[%s1 + $0x348] sm:$0xf]
  %v270 = vld [vmem:[%s1 + $0x34c] sm:$0xf]
  %v271 = vld [vmem:[%s1 + $0x350] sm:$0xf]
  %v272 = vld [vmem:[%s1 + $0x354] sm:$0xf]
  %v273 = vld [vmem:[%s1 + $0x358] sm:$0xf]
  %v274 = vld [vmem:[%s1 + $0x35c] sm:$0xf]
  %v275 = vld [vmem:[%s1 + $0x360] sm:$0xf]
  %v276 = vld [vmem:[%s1 + $0x364] sm:$0xf]
  %v277 = vld [vmem:[%s1 + $0x368] sm:$0xf]
  %v278 = vld [vmem:[%s1 + $0x36c] sm:$0xf]
  %v279 = vld [vmem:[%s1 + $0x370] sm:$0xf]
  %v280 = vld [vmem:[%s1 + $0x374] sm:$0xf]
  %v281 = vld [vmem:[%s1 + $0x378] sm:$0xf]
  %v282 = vld [vmem:[%s1 + $0x37c] sm:$0xf]
  %v283 = vld [vmem:[%s1 + $0x380] sm:$0xf]
  %v284 = vld [vmem:[%s1 + $0x384] sm:$0xf]
  %v285 = vld [vmem:[%s1 + $0x388] sm:$0xf]
  %v286 = vld [vmem:[%s1 + $0x38c] sm:$0xf]
  %v287 = vld [vmem:[%s1 + $0x390] sm:$0xf]
  %v288 = vld [vmem:[%s1 + $0x394] sm:$0xf]
  %v289 = vld [vmem:[%s1 + $0x398] sm:$0xf]
  %v290 = vld [vmem:[%s1 + $0x39c] sm:$0xf]
  %v291 = vld [vmem:[%s1 + $0x3a0] sm:$0xf]
  %v292 = vld [vmem:[%s1 + $0x3a4] sm:$0xf]
  %v293 = vld [vmem:[%s1 + $0x3a8] sm:$0xf]
  %v294 = vld [vmem:[%s1 + $0x3ac] sm:$0xf]
  %v295 = vld [vmem:[%s1 + $0x3b0] sm:$0xf]
  %v296 = vld [vmem:[%s1 + $0x3b4] sm:$0xf]
  %v297 = vld [vmem:[%s1 + $0x3b8] sm:$0xf]
  %v298 = vld [vmem:[%s1 + $0x3bc] sm:$0xf]
  %v299 = vld [vmem:[%s1 + $0x3c0] sm:$0xf]
  %v300 = vld [vmem:[%s1 + $0x3c4] sm:$0xf]
  %v301 = vld [vmem:[%s1 + $0x3c8] sm:$0xf]
  %v302 = vld [vmem:[%s1 + $0x3cc] sm:$0xf]
  %v303 = vld [vmem:[%s1 + $0x3d0] sm:$0xf]
  %v304 = vld [vmem:[%s1 + $0x3d4] sm:$0xf]
  %v305 = vld [vmem:[%s1 + $0x3d8] sm:$0xf]
  %v306 = vld [vmem:[%s1 + $0x3dc] sm:$0xf]
  %v307 = vld [vmem:[%s1 + $0x3e0] sm:$0xf]
  %v308 = vld [vmem:[%s1 + $0x3e4] sm:$0xf]
  %v309 = vld [vmem:[%s1 + $0x3e8] sm:$0xf]
  %v310 = vld [vmem:[%s1 + $0x3ec] sm:$0xf]
  %v311 = vld [vmem:[%s1 + $0x3f0] sm:$0xf]
  %v312 = vld [vmem:[%s1 + $0x3f4] sm:$0xf]
  %v313 = vld [vmem:[%s1 + $0x3f8] sm:$0xf]
  %v314 = vld [vmem:[%s1 + $0x3fc] sm:$0xf]
  %v315 = vld [vmem:[%s1 + $0x400] sm:$0xf]
  %v316 = vld [vmem:[%s1 + $0x404] sm:$0xf]
  %v317 = vld [vmem:[%s1 + $0x408] sm:$0xf]
  %v318 = vld [vmem:[%s1 + $0x40c] sm:$0xf]
  %v319 = vld [vmem:[%s1 + $0x410] sm:$0xf]
  %v320 = vld [vmem:[%s1 + $0x414] sm:$0xf]
  %v321 = vld [vmem:[%s1 + $0x418] sm:$0xf]
  %v322 = vld [vmem:[%s1 + $0x41c] sm:$0xf]
  %v323 = vld [vmem:[%s1 + $0x420] sm:$0xf]
  %v324 = vld [vmem:[%s1 + $0x424] sm:$0xf]
  %v325 = vld [vmem:[%s1 + $0x428] sm:$0xf]
  %v326 = vld [vmem:[%s1 + $0x42c] sm:$0xf]
  %v327 = vld [vmem:[%s1 + $0x430] sm:$0xf]
  %v328 = vld [vmem:[%s1 + $0x434] sm:$0xf]
  %v329 = vld [vmem:[%s1 + $0x438] sm:$0xf]
  %v330 = vld [vmem:[%s1 + $0x43c] sm:$0xf]
  %v331 = vld [vmem:[%s1 + $0x440] sm:$0xf]
  %v332 = vld [vmem:[%s1 + $0x444] sm:$0xf]
  %v333 = vld [vmem:[%s1 + $0x448] sm:$0xf]
  %v334 = vld [vmem:[%s1 + $0x44c] sm:$0xf]
  %v335 = vld [vmem:[%s1 + $0x450] sm:$0xf]
  %v336 = vld [vmem:[%s1 + $0x454] sm:$0xf]
  %v337 = vld [vmem:[%s1 + $0x458] sm:$0xf]
  %v338 = vld [vmem:[%s1 + $0x45c] sm:$0xf]
  %v339 = vld [vmem:[%s1 + $0x460] sm:$0xf]
  %v340 = vld [vmem:[%s1 + $0x464] sm:$0xf]
  %v341 = vld [vmem:[%s1 + $0x468] sm:$0xf]
  %v342 = vld [vmem:[%s1 + $0x46c] sm:$0xf]
  %v343 = vld [vmem:[%s1 + $0x470] sm:$0xf]
  %v344 = vld [vmem:[%s1 + $0x474] sm:$0xf]
  %v345 = vld [vmem:[%s1 + $0x478] sm:$0xf]
  %v346 = vld [vmem:[%s1 + $0x47c] sm:$0xf]
  %v347 = vld [vmem:[%s1 + $0x480] sm:$0xf]
  %v348 = vld [vmem:[%s1 + $0x484] sm:$0xf]
  %v349 = vld [vmem:[%s1 + $0x488] sm:$0xf]
  %v350 = vld [vmem:[%s1 + $0x48c] sm:$0xf]
  %v351 = vld [vmem:[%s1 + $0x490] sm:$0xf]
  %v352 = vld [vmem:[%s1 + $0x494] sm:$0xf]
  %v353 = vld [vmem:[%s1 + $0x498] sm:$0xf]
  %v354 = vld [vmem:[%s1 + $0x49c] sm:$0xf]
  %v355 = vld [vmem:[%s1 + $0x4a0] sm:$0xf]
  %v356 = vld [vmem:[%s1 + $0x4a4] sm:$0xf]
  %v357 = vld [vmem:[%s1 + $0x4a8] sm:$0xf]
  %v358 = vld [vmem:[%s1 + $0x4ac] sm:$0xf]
  %v359 = vld [vmem:[%s1 + $0x4b0] sm:$0xf]
  %v360 = vld [vmem:[%s1 + $0x4b4] sm:$0xf]
  %v361 = vld [vmem:[%s1 + $0x4b8] sm:$0xf]
  %v362 = vld [vmem:[%s1 + $0x4bc] sm:$0xf]
  %v363 = vld [vmem:[%s1 + $0x4c0] sm:$0xf]
  %v364 = vld [vmem:[%s1 + $0x4c4] sm:$0xf]
  %v365 = vld [vmem:[%s1 + $0x4c8] sm:$0xf]
  %v366 = vld [vmem:[%s1 + $0x4cc] sm:$0xf]
  %v367 = vld [vmem:[%s1 + $0x4d0] sm:$0xf]
  %v368 = vld [vmem:[%s1 + $0x4d4] sm:$0xf]
  %v369 = vld [vmem:[%s1 + $0x4d8] sm:$0xf]
  %v370 = vld [vmem:[%s1 + $0x4dc] sm:$0xf]
  %v371 = vld [vmem:[%s1 + $0x4e0] sm:$0xf]
  %v372 = vld [vmem:[%s1 + $0x4e4] sm:$0xf]
  %v373 = vld [vmem:[%s1 + $0x4e8] sm:$0xf]
  %v374 = vld [vmem:[%s1 + $0x4ec] sm:$0xf]
  %v375 = vld [vmem:[%s1 + $0x4f0] sm:$0xf]
  %v376 = vld [vmem:[%s1 + $0x4f4] sm:$0xf]
  %v377 = vld [vmem:[%s1 + $0x4f8] sm:$0xf]
  %v378 = vld [vmem:[%s1 + $0x4fc] sm:$0xf]
  %v379 = vld [vmem:[%s1 + $0x500] sm:$0xf]
  %v380 = vld [vmem:[%s1 + $0x504] sm:$0xf]
  %v381 = vld [vmem:[%s1 + $0x508] sm:$0xf]
  %v382 = vld [vmem:[%s1 + $0x50c] sm:$0xf]
  %v383 = vld [vmem:[%s1 + $0x510] sm:$0xf]
  %v384 = vld [vmem:[%s1 + $0x514] sm:$0xf]
  %v385 = vld [vmem:[%s1 + $0x518] sm:$0xf]
  %v386 = vld [vmem:[%s1 + $0x51c] sm:$0xf]
  %v387 = vld [vmem:[%s1 + $0x520] sm:$0xf]
  %v388 = vld [vmem:[%s1 + $0x524] sm:$0xf]
  %v389 = vld [vmem:[%s1 + $0x528] sm:$0xf]
  %v390 = vld [vmem:[%s1 + $0x52c] sm:$0xf]
  %v391 = vld [vmem:[%s1 + $0x530] sm:$0xf]
  %v392 = vld [vmem:[%s1 + $0x534] sm:$0xf]
  %v393 = vld [vmem:[%s1 + $0x538] sm:$0xf]
  %v394 = vld [vmem:[%s1 + $0x53c] sm:$0xf]
  %v395 = vld [vmem:[%s1 + $0x540] sm:$0xf]
  %v396 = vld [vmem:[%s1 + $0x544] sm:$0xf]
  %v397 = vld [vmem:[%s1 + $0x548] sm:$0xf]
  %v398 = vld [vmem:[%s1 + $0x54c] sm:$0xf]
  %v399 = vld [vmem:[%s1 + $0x550] sm:$0xf]
  %v400 = vld [vmem:[%s1 + $0x554] sm:$0xf]
  %v401 = vld [vmem:[%s1 + $0x558] sm:$0xf]
  %v402 = vld [vmem:[%s1 + $0x55c] sm:$0xf]
  %v403 = vld [vmem:[%s1 + $0x560] sm:$0xf]
  %v404 = vld [vmem:[%s1 + $0x564] sm:$0xf]
  %v405 = vld [vmem:[%s1 + $0x568] sm:$0xf]
  %v406 = vld [vmem:[%s1 + $0x56c] sm:$0xf]
  %v407 = vld [vmem:[%s1 + $0x570] sm:$0xf]
  %v408 = vld [vmem:[%s1 + $0x574] sm:$0xf]
  %v409 = vld [vmem:[%s1 + $0x578] sm:$0xf]
  %v410 = vld [vmem:[%s1 + $0x57c] sm:$0xf]
  %v411 = vld [vmem:[%s1 + $0x580] sm:$0xf]
  %v412 = vld [vmem:[%s1 + $0x584] sm:$0xf]
  %v413 = vld [vmem:[%s1 + $0x588] sm:$0xf]
  %v414 = vld [vmem:[%s1 + $0x58c] sm:$0xf]
  %v415 = vld [vmem:[%s1 + $0x590] sm:$0xf]
  %v416 = vld [vmem:[%s1 + $0x594] sm:$0xf]
  %v417 = vld [vmem:[%s1 + $0x598] sm:$0xf]
  %v418 = vld [vmem:[%s1 + $0x59c] sm:$0xf]
  %v419 = vld [vmem:[%s1 + $0x5a0] sm:$0xf]
  %v420 = vld [vmem:[%s1 + $0x5a4] sm:$0xf]
  %v421 = vld [vmem:[%s1 + $0x5a8] sm:$0xf]
  %v422 = vld [vmem:[%s1 + $0x5ac] sm:$0xf]
  %v423 = vld [vmem:[%s1 + $0x5b0] sm:$0xf]
  %v424 = vld [vmem:[%s1 + $0x5b4] sm:$0xf]
  %v425 = vld [vmem:[%s1 + $0x5b8] sm:$0xf]
  %v426 = vld [vmem:[%s1 + $0x5bc] sm:$0xf]
  %v427 = vld [vmem:[%s1 + $0x5c0] sm:$0xf]
  %v428 = vld [vmem:[%s1 + $0x5c4] sm:$0xf]
  %v429 = vld [vmem:[%s1 + $0x5c8] sm:$0xf]
  %v430 = vld [vmem:[%s1 + $0x5cc] sm:$0xf]
  %v431 = vld [vmem:[%s1 + $0x5d0] sm:$0xf]
  %v432 = vld [vmem:[%s1 + $0x5d4] sm:$0xf]
  %v433 = vld [vmem:[%s1 + $0x5d8] sm:$0xf]
  %v434 = vld [vmem:[%s1 + $0x5dc] sm:$0xf]
  %v435 = vld [vmem:[%s1 + $0x5e0] sm:$0xf]
  %v436 = vld [vmem:[%s1 + $0x5e4] sm:$0xf]
  %v437 = vld [vmem:[%s1 + $0x5e8] sm:$0xf]
  %v438 = vld [vmem:[%s1 + $0x5ec] sm:$0xf]
  %v439 = vld [vmem:[%s1 + $0x5f0] sm:$0xf]
  %v440 = vld [vmem:[%s1 + $0x5f4] sm:$0xf]
  %v441 = vld [vmem:[%s1 + $0x5f8] sm:$0xf]
  %v442 = vld [vmem:[%s1 + $0x5fc] sm:$0xf]
  %v443 = vld [vmem:[%s1 + $0x600] sm:$0xf]
  %v444 = vld [vmem:[%s1 + $0x604] sm:$0xf]
  %v445 = vld [vmem:[%s1 + $0x608] sm:$0xf]
  %v446 = vld [vmem:[%s1 + $0x60c] sm:$0xf]
  %v447 = vld [vmem:[%s1 + $0x610] sm:$0xf]
  %v448 = vld [vmem:[%s1 + $0x614] sm:$0xf]
  %v449 = vld [vmem:[%s1 + $0x618] sm:$0xf]
  %v450 = vld [vmem:[%s1 + $0x61c] sm:$0xf]
  %v451 = vld [vmem:[%s1 + $0x620] sm:$0xf]
  %v452 = vld [vmem:[%s1 + $0x624] sm:$0xf]
  %v453 = vld [vmem:[%s1 + $0x628] sm:$0xf]
  %v454 = vld [vmem:[%s1 + $0x62c] sm:$0xf]
  %v455 = vld [vmem:[%s1 + $0x630] sm:$0xf]
  %v456 = vld [vmem:[%s1 + $0x634] sm:$0xf]
  %v457 = vld [vmem:[%s1 + $0x638] sm:$0xf]
  %v458 = vld [vmem:[%s1 + $0x63c] sm:$0xf]
  %v459 = vld [vmem:[%s1 + $0x640] sm:$0xf]
  %v460 = vld [vmem:[%s1 + $0x644] sm:$0xf]
  %v461 = vld [vmem:[%s1 + $0x648] sm:$0xf]
  %v462 = vld [vmem:[%s1 + $0x64c] sm:$0xf]
  %v463 = vld [vmem:[%s1 + $0x650] sm:$0xf]
  %v464 = vld [vmem:[%s1 + $0x654] sm:$0xf]
  %v465 = vld [vmem:[%s1 + $0x658] sm:$0xf]
  %v466 = vld [vmem:[%s1 + $0x65c] sm:$0xf]
  %v467 = vld [vmem:[%s1 + $0x660] sm:$0xf]
  %v468 = vld [vmem:[%s1 + $0x664] sm:$0xf]
  %v469 = vld [vmem:[%s1 + $0x668] sm:$0xf]
  %v470 = vld [vmem:[%s1 + $0x66c] sm:$0xf]
  %v471 = vld [vmem:[%s1 + $0x670] sm:$0xf]
  %v472 = vld [vmem:[%s1 + $0x674] sm:$0xf]
  %v473 = vld [vmem:[%s1 + $0x678] sm:$0xf]
  %v474 = vld [vmem:[%s1 + $0x67c] sm:$0xf]
  %v475 = vld [vmem:[%s1 + $0x680] sm:$0xf]
  %v476 = vld [vmem:[%s1 + $0x684] sm:$0xf]
  %v477 = vld [vmem:[%s1 + $0x688] sm:$0xf]
  %v478 = vld [vmem:[%s1 + $0x68c] sm:$0xf]
  %v479 = vld [vmem:[%s1 + $0x690] sm:$0xf]
  %v480 = vld [vmem:[%s1 + $0x694] sm:$0xf]
  %v481 = vld [vmem:[%s1 + $0x698] sm:$0xf]
  %v482 = vld [vmem:[%s1 + $0x69c] sm:$0xf]
  %v483 = vld [vmem:[%s1 + $0x6a0] sm:$0xf]
  %v484 = vld [vmem:[%s1 + $0x6a4] sm:$0xf]
  %v485 = vld [vmem:[%s1 + $0x6a8] sm:$0xf]
  %v486 = vld [vmem:[%s1 + $0x6ac] sm:$0xf]
  %v487 = vld [vmem:[%s1 + $0x6b0] sm:$0xf]
  %v488 = vld [vmem:[%s1 + $0x6b4] sm:$0xf]
  %v489 = vld [vmem:[%s1 + $0x6b8] sm:$0xf]
  %v490 = vld [vmem:[%s1 + $0x6bc] sm:$0xf]
  %v491 = vld [vmem:[%s1 + $0x6c0] sm:$0xf]
  %v492 = vld [vmem:[%s1 + $0x6c4] sm:$0xf]
  %v493 = vld [vmem:[%s1 + $0x6c8] sm:$0xf]
  %v494 = vld [vmem:[%s1 + $0x6cc] sm:$0xf]
  %v495 = vld [vmem:[%s1 + $0x6d0] sm:$0xf]
  %v496 = vld [vmem:[%s1 + $0x6d4] sm:$0xf]
  %v497 = vld [vmem:[%s1 + $0x6d8] sm:$0xf]
  %v498 = vld [vmem:[%s1 + $0x6dc] sm:$0xf]
  %v499 = vld [vmem:[%s1 + $0x6e0] sm:$0xf]
  %v500 = vld [vmem:[%s1 + $0x6e4] sm:$0xf]
  %v501 = vld [vmem:[%s1 + $0x6e8] sm:$0xf]
  %v502 = vld [vmem:[%s1 + $0x6ec] sm:$0xf]
  %v503 = vld [vmem:[%s1 + $0x6f0] sm:$0xf]
  %v504 = vld [vmem:[%s1 + $0x6f4] sm:$0xf]
  %v505 = vld [vmem:[%s1 + $0x6f8] sm:$0xf]
  %v506 = vld [vmem:[%s1 + $0x6fc] sm:$0xf]
  %v507 = vld [vmem:[%s1 + $0x700] sm:$0xf]
  %v508 = vld [vmem:[%s1 + $0x704] sm:$0xf]
  %v509 = vld [vmem:[%s1 + $0x708] sm:$0xf]
  %v510 = vld [vmem:[%s1 + $0x70c] sm:$0xf]
  %v511 = vld [vmem:[%s1 + $0x710] sm:$0xf]
  %v512 = vld [vmem:[%s1 + $0x714] sm:$0xf]
  %v513 = vld [vmem:[%s1 + $0x718] sm:$0xf]
  %v514 = vld [vmem:[%s1 + $0x71c] sm:$0xf]
  %v515 = vld [vmem:[%s1 + $0x720] sm:$0xf]
  %v516 = vld [vmem:[%s1 + $0x724] sm:$0xf]
  %v517 = vld [vmem:[%s1 + $0x728] sm:$0xf]
  %v518 = vld [vmem:[%s1 + $0x72c] sm:$0xf]
  %v519 = vld [vmem:[%s1 + $0x730] sm:$0xf]
  %v520 = vld [vmem:[%s1 + $0x734] sm:$0xf]
  %v521 = vld [vmem:[%s1 + $0x738] sm:$0xf]
  %v522 = vld [vmem:[%s1 + $0x73c] sm:$0xf]
  %v523 = vld [vmem:[%s1 + $0x740] sm:$0xf]
  %v524 = vld [vmem:[%s1 + $0x744] sm:$0xf]
  %v525 = vld [vmem:[%s1 + $0x748] sm:$0xf]
  %v526 = vld [vmem:[%s1 + $0x74c] sm:$0xf]
  %v527 = vld [vmem:[%s1 + $0x750] sm:$0xf]
  %v528 = vld [vmem:[%s1 + $0x754] sm:$0xf]
  %v529 = vld [vmem:[%s1 + $0x758] sm:$0xf]
  %v530 = vld [vmem:[%s1 + $0x75c] sm:$0xf]
  %v531 = vld [vmem:[%s1 + $0x760] sm:$0xf]
  %v532 = vld [vmem:[%s1 + $0x764] sm:$0xf]
  %v533 = vld [vmem:[%s1 + $0x768] sm:$0xf]
  %v534 = vld [vmem:[%s1 + $0x76c] sm:$0xf]
  %v535 = vld [vmem:[%s1 + $0x770] sm:$0xf]
  %v536 = vld [vmem:[%s1 + $0x774] sm:$0xf]
  %v537 = vld [vmem:[%s1 + $0x778] sm:$0xf]
  %v538 = vld [vmem:[%s1 + $0x77c] sm:$0xf]
  %v539 = vld [vmem:[%s1 + $0x780] sm:$0xf]
  %v540 = vld [vmem:[%s1 + $0x784] sm:$0xf]
  %v541 = vld [vmem:[%s1 + $0x788] sm:$0xf]
  %v542 = vld [vmem:[%s1 + $0x78c] sm:$0xf]
  %v543 = vld [vmem:[%s1 + $0x790] sm:$0xf]
  %v544 = vld [vmem:[%s1 + $0x794] sm:$0xf]
  %v545 = vld [vmem:[%s1 + $0x798] sm:$0xf]
  %v546 = vld [vmem:[%s1 + $0x79c] sm:$0xf]
  %v547 = vld [vmem:[%s1 + $0x7a0] sm:$0xf]
  %v548 = vld [vmem:[%s1 + $0x7a4] sm:$0xf]
  %v549 = vld [vmem:[%s1 + $0x7a8] sm:$0xf]
  %v550 = vld [vmem:[%s1 + $0x7ac] sm:$0xf]
  %v551 = vld [vmem:[%s1 + $0x7b0] sm:$0xf]
  %v552 = vld [vmem:[%s1 + $0x7b4] sm:$0xf]
  %v553 = vld [vmem:[%s1 + $0x7b8] sm:$0xf]
  %v554 = vld [vmem:[%s1 + $0x7bc] sm:$0xf]
  %v555 = vld [vmem:[%s1 + $0x7c0] sm:$0xf]
  %v556 = vld [vmem:[%s1 + $0x7c4] sm:$0xf]
  %v557 = vld [vmem:[%s1 + $0x7c8] sm:$0xf]
  %v558 = vld [vmem:[%s1 + $0x7cc] sm:$0xf]
  %v559 = vld [vmem:[%s1 + $0x7d0] sm:$0xf]
  %v560 = vld [vmem:[%s1 + $0x7d4] sm:$0xf]
  %v561 = vld [vmem:[%s1 + $0x7d8] sm:$0xf]
  %v562 = vld [vmem:[%s1 + $0x7dc] sm:$0xf]
  %v563 = vld [vmem:[%s1 + $0x7e0] sm:$0xf]
  %v564 = vld [vmem:[%s1 + $0x7e4] sm:$0xf]
  %v565 = vld [vmem:[%s1 + $0x7e8] sm:$0xf]
  %v566 = vld [vmem:[%s1 + $0x7ec] sm:$0xf]
  %v567 = vld [vmem:[%s1 + $0x7f0] sm:$0xf]
  %v568 = vld [vmem:[%s1 + $0x7f4] sm:$0xf]
  %v569 = vld [vmem:[%s1 + $0x7f8] sm:$0xf]
  %v570 = vld [vmem:[%s1 + $0x7fc] sm:$0xf]
  %v571 = vld [vmem:[%s2] sm:$0x1]
  %v573 = vlaneseq
  %v574 = vshrl.u32 %v573, 7
  %v575 = vsub.s32 0, %v574
  %v576 = vrot.slane %v571, %v575
  %v610 = vunpack.c.l.b16 %v27
  %v611 = vunpack.c.h.b16 %v27
  %v612 = vunpack.c.l.b16 %v28
  %v613 = vunpack.c.h.b16 %v28
  %v614 = vunpack.c.l.b16 %v29
  %v615 = vunpack.c.h.b16 %v29
  %v616 = vunpack.c.l.b16 %v30
  %v617 = vunpack.c.h.b16 %v30
  %v618 = vunpack.c.l.b16 %v31
  %v619 = vunpack.c.h.b16 %v31
  %v620 = vunpack.c.l.b16 %v32
  %v621 = vunpack.c.h.b16 %v32
  %v622 = vunpack.c.l.b16 %v33
  %v623 = vunpack.c.h.b16 %v33
  %v624 = vunpack.c.l.b16 %v34
  %v625 = vunpack.c.h.b16 %v34
  %v626 = vunpack.c.l.b16 %v35
  %v627 = vunpack.c.h.b16 %v35
  %v628 = vunpack.c.l.b16 %v36
  %v629 = vunpack.c.h.b16 %v36
  %v630 = vunpack.c.l.b16 %v37
  %v631 = vunpack.c.h.b16 %v37
  %v632 = vunpack.c.l.b16 %v38
  %v633 = vunpack.c.h.b16 %v38
  %v634 = vunpack.c.l.b16 %v39
  %v635 = vunpack.c.h.b16 %v39
  %v636 = vunpack.c.l.b16 %v40
  %v637 = vunpack.c.h.b16 %v40
  %v638 = vunpack.c.l.b16 %v41
  %v639 = vunpack.c.h.b16 %v41
  %v640 = vunpack.c.l.b16 %v42
  %v641 = vunpack.c.h.b16 %v42
  %v642 = vunpack.c.l.b16 %v43
  %v643 = vunpack.c.h.b16 %v43
  %v644 = vunpack.c.l.b16 %v44
  %v645 = vunpack.c.h.b16 %v44
  %v646 = vunpack.c.l.b16 %v45
  %v647 = vunpack.c.h.b16 %v45
  %v648 = vunpack.c.l.b16 %v46
  %v649 = vunpack.c.h.b16 %v46
  %v650 = vunpack.c.l.b16 %v47
  %v651 = vunpack.c.h.b16 %v47
  %v652 = vunpack.c.l.b16 %v48
  %v653 = vunpack.c.h.b16 %v48
  %v654 = vunpack.c.l.b16 %v49
  %v655 = vunpack.c.h.b16 %v49
  %v656 = vunpack.c.l.b16 %v50
  %v657 = vunpack.c.h.b16 %v50
  %v658 = vunpack.c.l.b16 %v51
  %v659 = vunpack.c.h.b16 %v51
  %v660 = vunpack.c.l.b16 %v52
  %v661 = vunpack.c.h.b16 %v52
  %v662 = vunpack.c.l.b16 %v53
  %v663 = vunpack.c.h.b16 %v53
  %v664 = vunpack.c.l.b16 %v54
  %v665 = vunpack.c.h.b16 %v54
  %v666 = vunpack.c.l.b16 %v55
  %v667 = vunpack.c.h.b16 %v55
  %v668 = vunpack.c.l.b16 %v56
  %v669 = vunpack.c.h.b16 %v56
  %v670 = vunpack.c.l.b16 %v57
  %v671 = vunpack.c.h.b16 %v57
  %v672 = vunpack.c.l.b16 %v58
  %v673 = vunpack.c.h.b16 %v58
  %v674 = vpack.c.b16 %v642, %v610
  %v675 = vpack.c.b16 %v643, %v611
  %v676 = vpack.c.b16 %v644, %v612
  %v677 = vpack.c.b16 %v645, %v613
  %v678 = vpack.c.b16 %v646, %v614
  %v679 = vpack.c.b16 %v647, %v615
  %v680 = vpack.c.b16 %v648, %v616
  %v681 = vpack.c.b16 %v649, %v617
  %v682 = vpack.c.b16 %v650, %v618
  %v683 = vpack.c.b16 %v651, %v619
  %v684 = vpack.c.b16 %v652, %v620
  %v685 = vpack.c.b16 %v653, %v621
  %v686 = vpack.c.b16 %v654, %v622
  %v687 = vpack.c.b16 %v655, %v623
  %v688 = vpack.c.b16 %v656, %v624
  %v689 = vpack.c.b16 %v657, %v625
  %v690 = vpack.c.b16 %v658, %v626
  %v691 = vpack.c.b16 %v659, %v627
  %v692 = vpack.c.b16 %v660, %v628
  %v693 = vpack.c.b16 %v661, %v629
  %v694 = vpack.c.b16 %v662, %v630
  %v695 = vpack.c.b16 %v663, %v631
  %v696 = vpack.c.b16 %v664, %v632
  %v697 = vpack.c.b16 %v665, %v633
  %v698 = vpack.c.b16 %v666, %v634
  %v699 = vpack.c.b16 %v667, %v635
  %v700 = vpack.c.b16 %v668, %v636
  %v701 = vpack.c.b16 %v669, %v637
  %v702 = vpack.c.b16 %v670, %v638
  %v703 = vpack.c.b16 %v671, %v639
  %v704 = vpack.c.b16 %v672, %v640
  %v705 = vpack.c.b16 %v673, %v641
  %v1250 = vunpack.c.l.b16 %v59
  %v1251 = vunpack.c.l.b16 %v60
  %v1252 = vunpack.c.l.b16 %v61
  %v1253 = vunpack.c.l.b16 %v62
  %v1254 = vunpack.c.l.b16 %v63
  %v1255 = vunpack.c.l.b16 %v64
  %v1256 = vunpack.c.l.b16 %v65
  %v1257 = vunpack.c.l.b16 %v66
  %v1258 = vunpack.c.l.b16 %v67
  %v1259 = vunpack.c.l.b16 %v68
  %v1260 = vunpack.c.l.b16 %v69
  %v1261 = vunpack.c.l.b16 %v70
  %v1262 = vunpack.c.l.b16 %v71
  %v1263 = vunpack.c.l.b16 %v72
  %v1264 = vunpack.c.l.b16 %v73
  %v1265 = vunpack.c.l.b16 %v74
  %v1266 = vunpack.c.l.b16 %v75
  %v1267 = vunpack.c.l.b16 %v76
  %v1268 = vunpack.c.l.b16 %v77
  %v1269 = vunpack.c.l.b16 %v78
  %v1270 = vunpack.c.l.b16 %v79
  %v1271 = vunpack.c.l.b16 %v80
  %v1272 = vunpack.c.l.b16 %v81
  %v1273 = vunpack.c.l.b16 %v82
  %v1274 = vunpack.c.l.b16 %v83
  %v1275 = vunpack.c.l.b16 %v84
  %v1276 = vunpack.c.l.b16 %v85
  %v1277 = vunpack.c.l.b16 %v86
  %v1278 = vunpack.c.l.b16 %v87
  %v1279 = vunpack.c.l.b16 %v88
  %v1280 = vunpack.c.l.b16 %v89
  %v1281 = vunpack.c.l.b16 %v90
  %v1282 = vunpack.c.l.b16 %v91
  %v1283 = vunpack.c.l.b16 %v92
  %v1284 = vunpack.c.l.b16 %v93
  %v1285 = vunpack.c.l.b16 %v94
  %v1286 = vunpack.c.l.b16 %v95
  %v1287 = vunpack.c.l.b16 %v96
  %v1288 = vunpack.c.l.b16 %v97
  %v1289 = vunpack.c.l.b16 %v98
  %v1290 = vunpack.c.l.b16 %v99
  %v1291 = vunpack.c.l.b16 %v100
  %v1292 = vunpack.c.l.b16 %v101
  %v1293 = vunpack.c.l.b16 %v102
  %v1294 = vunpack.c.l.b16 %v103
  %v1295 = vunpack.c.l.b16 %v104
  %v1296 = vunpack.c.l.b16 %v105
  %v1297 = vunpack.c.l.b16 %v106
  %v1298 = vunpack.c.l.b16 %v107
  %v1299 = vunpack.c.l.b16 %v108
  %v1300 = vunpack.c.l.b16 %v109
  %v1301 = vunpack.c.l.b16 %v110
  %v1302 = vunpack.c.l.b16 %v111
  %v1303 = vunpack.c.l.b16 %v112
  %v1304 = vunpack.c.l.b16 %v113
  %v1305 = vunpack.c.l.b16 %v114
  %v1306 = vunpack.c.l.b16 %v115
  %v1307 = vunpack.c.l.b16 %v116
  %v1308 = vunpack.c.l.b16 %v117
  %v1309 = vunpack.c.l.b16 %v118
  %v1310 = vunpack.c.l.b16 %v119
  %v1311 = vunpack.c.l.b16 %v120
  %v1312 = vunpack.c.l.b16 %v121
  %v1313 = vunpack.c.l.b16 %v122
  %v1314 = vunpack.c.l.b16 %v123
  %v1315 = vunpack.c.l.b16 %v124
  %v1316 = vunpack.c.l.b16 %v125
  %v1317 = vunpack.c.l.b16 %v126
  %v1318 = vunpack.c.l.b16 %v127
  %v1319 = vunpack.c.l.b16 %v128
  %v1320 = vunpack.c.l.b16 %v129
  %v1321 = vunpack.c.l.b16 %v130
  %v1322 = vunpack.c.l.b16 %v131
  %v1323 = vunpack.c.l.b16 %v132
  %v1324 = vunpack.c.l.b16 %v133
  %v1325 = vunpack.c.l.b16 %v134
  %v1326 = vunpack.c.l.b16 %v135
  %v1327 = vunpack.c.l.b16 %v136
  %v1328 = vunpack.c.l.b16 %v137
  %v1329 = vunpack.c.l.b16 %v138
  %v1330 = vunpack.c.l.b16 %v139
  %v1331 = vunpack.c.l.b16 %v140
  %v1332 = vunpack.c.l.b16 %v141
  %v1333 = vunpack.c.l.b16 %v142
  %v1334 = vunpack.c.l.b16 %v143
  %v1335 = vunpack.c.l.b16 %v144
  %v1336 = vunpack.c.l.b16 %v145
  %v1337 = vunpack.c.l.b16 %v146
  %v1338 = vunpack.c.l.b16 %v147
  %v1339 = vunpack.c.l.b16 %v148
  %v1340 = vunpack.c.l.b16 %v149
  %v1341 = vunpack.c.l.b16 %v150
  %v1342 = vunpack.c.l.b16 %v151
  %v1343 = vunpack.c.l.b16 %v152
  %v1344 = vunpack.c.l.b16 %v153
  %v1345 = vunpack.c.l.b16 %v154
  %v1346 = vunpack.c.l.b16 %v155
  %v1347 = vunpack.c.l.b16 %v156
  %v1348 = vunpack.c.l.b16 %v157
  %v1349 = vunpack.c.l.b16 %v158
  %v1350 = vunpack.c.l.b16 %v159
  %v1351 = vunpack.c.l.b16 %v160
  %v1352 = vunpack.c.l.b16 %v161
  %v1353 = vunpack.c.l.b16 %v162
  %v1354 = vunpack.c.l.b16 %v163
  %v1355 = vunpack.c.l.b16 %v164
  %v1356 = vunpack.c.l.b16 %v165
  %v1357 = vunpack.c.l.b16 %v166
  %v1358 = vunpack.c.l.b16 %v167
  %v1359 = vunpack.c.l.b16 %v168
  %v1360 = vunpack.c.l.b16 %v169
  %v1361 = vunpack.c.l.b16 %v170
  %v1362 = vunpack.c.l.b16 %v171
  %v1363 = vunpack.c.l.b16 %v172
  %v1364 = vunpack.c.l.b16 %v173
  %v1365 = vunpack.c.l.b16 %v174
  %v1366 = vunpack.c.l.b16 %v175
  %v1367 = vunpack.c.l.b16 %v176
  %v1368 = vunpack.c.l.b16 %v177
  %v1369 = vunpack.c.l.b16 %v178
  %v1370 = vunpack.c.l.b16 %v179
  %v1371 = vunpack.c.l.b16 %v180
  %v1372 = vunpack.c.l.b16 %v181
  %v1373 = vunpack.c.l.b16 %v182
  %v1374 = vunpack.c.l.b16 %v183
  %v1375 = vunpack.c.l.b16 %v184
  %v1376 = vunpack.c.l.b16 %v185
  %v1377 = vunpack.c.l.b16 %v186
  %v1378 = vunpack.c.l.b16 %v187
  %v1379 = vunpack.c.l.b16 %v188
  %v1380 = vunpack.c.l.b16 %v189
  %v1381 = vunpack.c.l.b16 %v190
  %v1382 = vunpack.c.l.b16 %v191
  %v1383 = vunpack.c.l.b16 %v192
  %v1384 = vunpack.c.l.b16 %v193
  %v1385 = vunpack.c.l.b16 %v194
  %v1386 = vunpack.c.l.b16 %v195
  %v1387 = vunpack.c.l.b16 %v196
  %v1388 = vunpack.c.l.b16 %v197
  %v1389 = vunpack.c.l.b16 %v198
  %v1390 = vunpack.c.l.b16 %v199
  %v1391 = vunpack.c.l.b16 %v200
  %v1392 = vunpack.c.l.b16 %v201
  %v1393 = vunpack.c.l.b16 %v202
  %v1394 = vunpack.c.l.b16 %v203
  %v1395 = vunpack.c.l.b16 %v204
  %v1396 = vunpack.c.l.b16 %v205
  %v1397 = vunpack.c.l.b16 %v206
  %v1398 = vunpack.c.l.b16 %v207
  %v1399 = vunpack.c.l.b16 %v208
  %v1400 = vunpack.c.l.b16 %v209
  %v1401 = vunpack.c.l.b16 %v210
  %v1402 = vunpack.c.l.b16 %v211
  %v1403 = vunpack.c.l.b16 %v212
  %v1404 = vunpack.c.l.b16 %v213
  %v1405 = vunpack.c.l.b16 %v214
  %v1406 = vunpack.c.l.b16 %v215
  %v1407 = vunpack.c.l.b16 %v216
  %v1408 = vunpack.c.l.b16 %v217
  %v1409 = vunpack.c.l.b16 %v218
  %v1410 = vunpack.c.l.b16 %v219
  %v1411 = vunpack.c.l.b16 %v220
  %v1412 = vunpack.c.l.b16 %v221
  %v1413 = vunpack.c.l.b16 %v222
  %v1414 = vunpack.c.l.b16 %v223
  %v1415 = vunpack.c.l.b16 %v224
  %v1416 = vunpack.c.l.b16 %v225
  %v1417 = vunpack.c.l.b16 %v226
  %v1418 = vunpack.c.l.b16 %v227
  %v1419 = vunpack.c.l.b16 %v228
  %v1420 = vunpack.c.l.b16 %v229
  %v1421 = vunpack.c.l.b16 %v230
  %v1422 = vunpack.c.l.b16 %v231
  %v1423 = vunpack.c.l.b16 %v232
  %v1424 = vunpack.c.l.b16 %v233
  %v1425 = vunpack.c.l.b16 %v234
  %v1426 = vunpack.c.l.b16 %v235
  %v1427 = vunpack.c.l.b16 %v236
  %v1428 = vunpack.c.l.b16 %v237
  %v1429 = vunpack.c.l.b16 %v238
  %v1430 = vunpack.c.l.b16 %v239
  %v1431 = vunpack.c.l.b16 %v240
  %v1432 = vunpack.c.l.b16 %v241
  %v1433 = vunpack.c.l.b16 %v242
  %v1434 = vunpack.c.l.b16 %v243
  %v1435 = vunpack.c.l.b16 %v244
  %v1436 = vunpack.c.l.b16 %v245
  %v1437 = vunpack.c.l.b16 %v246
  %v1438 = vunpack.c.l.b16 %v247
  %v1439 = vunpack.c.l.b16 %v248
  %v1440 = vunpack.c.l.b16 %v249
  %v1441 = vunpack.c.l.b16 %v250
  %v1442 = vunpack.c.l.b16 %v251
  %v1443 = vunpack.c.l.b16 %v252
  %v1444 = vunpack.c.l.b16 %v253
  %v1445 = vunpack.c.l.b16 %v254
  %v1446 = vunpack.c.l.b16 %v255
  %v1447 = vunpack.c.l.b16 %v256
  %v1448 = vunpack.c.l.b16 %v257
  %v1449 = vunpack.c.l.b16 %v258
  %v1450 = vunpack.c.l.b16 %v259
  %v1451 = vunpack.c.l.b16 %v260
  %v1452 = vunpack.c.l.b16 %v261
  %v1453 = vunpack.c.l.b16 %v262
  %v1454 = vunpack.c.l.b16 %v263
  %v1455 = vunpack.c.l.b16 %v264
  %v1456 = vunpack.c.l.b16 %v265
  %v1457 = vunpack.c.l.b16 %v266
  %v1458 = vunpack.c.l.b16 %v267
  %v1459 = vunpack.c.l.b16 %v268
  %v1460 = vunpack.c.l.b16 %v269
  %v1461 = vunpack.c.l.b16 %v270
  %v1462 = vunpack.c.l.b16 %v271
  %v1463 = vunpack.c.l.b16 %v272
  %v1464 = vunpack.c.l.b16 %v273
  %v1465 = vunpack.c.l.b16 %v274
  %v1466 = vunpack.c.l.b16 %v275
  %v1467 = vunpack.c.l.b16 %v276
  %v1468 = vunpack.c.l.b16 %v277
  %v1469 = vunpack.c.l.b16 %v278
  %v1470 = vunpack.c.l.b16 %v279
  %v1471 = vunpack.c.l.b16 %v280
  %v1472 = vunpack.c.l.b16 %v281
  %v1473 = vunpack.c.l.b16 %v282
  %v1474 = vunpack.c.l.b16 %v283
  %v1475 = vunpack.c.l.b16 %v284
  %v1476 = vunpack.c.l.b16 %v285
  %v1477 = vunpack.c.l.b16 %v286
  %v1478 = vunpack.c.l.b16 %v287
  %v1479 = vunpack.c.l.b16 %v288
  %v1480 = vunpack.c.l.b16 %v289
  %v1481 = vunpack.c.l.b16 %v290
  %v1482 = vunpack.c.l.b16 %v291
  %v1483 = vunpack.c.l.b16 %v292
  %v1484 = vunpack.c.l.b16 %v293
  %v1485 = vunpack.c.l.b16 %v294
  %v1486 = vunpack.c.l.b16 %v295
  %v1487 = vunpack.c.l.b16 %v296
  %v1488 = vunpack.c.l.b16 %v297
  %v1489 = vunpack.c.l.b16 %v298
  %v1490 = vunpack.c.l.b16 %v299
  %v1491 = vunpack.c.l.b16 %v300
  %v1492 = vunpack.c.l.b16 %v301
  %v1493 = vunpack.c.l.b16 %v302
  %v1494 = vunpack.c.l.b16 %v303
  %v1495 = vunpack.c.l.b16 %v304
  %v1496 = vunpack.c.l.b16 %v305
  %v1497 = vunpack.c.l.b16 %v306
  %v1498 = vunpack.c.l.b16 %v307
  %v1499 = vunpack.c.l.b16 %v308
  %v1500 = vunpack.c.l.b16 %v309
  %v1501 = vunpack.c.l.b16 %v310
  %v1502 = vunpack.c.l.b16 %v311
  %v1503 = vunpack.c.l.b16 %v312
  %v1504 = vunpack.c.l.b16 %v313
  %v1505 = vunpack.c.l.b16 %v314
  %v1506 = vunpack.c.l.b16 %v315
  %v1507 = vunpack.c.l.b16 %v316
  %v1508 = vunpack.c.l.b16 %v317
  %v1509 = vunpack.c.l.b16 %v318
  %v1510 = vunpack.c.l.b16 %v319
  %v1511 = vunpack.c.l.b16 %v320
  %v1512 = vunpack.c.l.b16 %v321
  %v1513 = vunpack.c.l.b16 %v322
  %v1514 = vunpack.c.l.b16 %v323
  %v1515 = vunpack.c.l.b16 %v324
  %v1516 = vunpack.c.l.b16 %v325
  %v1517 = vunpack.c.l.b16 %v326
  %v1518 = vunpack.c.l.b16 %v327
  %v1519 = vunpack.c.l.b16 %v328
  %v1520 = vunpack.c.l.b16 %v329
  %v1521 = vunpack.c.l.b16 %v330
  %v1522 = vunpack.c.l.b16 %v331
  %v1523 = vunpack.c.l.b16 %v332
  %v1524 = vunpack.c.l.b16 %v333
  %v1525 = vunpack.c.l.b16 %v334
  %v1526 = vunpack.c.l.b16 %v335
  %v1527 = vunpack.c.l.b16 %v336
  %v1528 = vunpack.c.l.b16 %v337
  %v1529 = vunpack.c.l.b16 %v338
  %v1530 = vunpack.c.l.b16 %v339
  %v1531 = vunpack.c.l.b16 %v340
  %v1532 = vunpack.c.l.b16 %v341
  %v1533 = vunpack.c.l.b16 %v342
  %v1534 = vunpack.c.l.b16 %v343
  %v1535 = vunpack.c.l.b16 %v344
  %v1536 = vunpack.c.l.b16 %v345
  %v1537 = vunpack.c.l.b16 %v346
  %v1538 = vunpack.c.l.b16 %v347
  %v1539 = vunpack.c.l.b16 %v348
  %v1540 = vunpack.c.l.b16 %v349
  %v1541 = vunpack.c.l.b16 %v350
  %v1542 = vunpack.c.l.b16 %v351
  %v1543 = vunpack.c.l.b16 %v352
  %v1544 = vunpack.c.l.b16 %v353
  %v1545 = vunpack.c.l.b16 %v354
  %v1546 = vunpack.c.l.b16 %v355
  %v1547 = vunpack.c.l.b16 %v356
  %v1548 = vunpack.c.l.b16 %v357
  %v1549 = vunpack.c.l.b16 %v358
  %v1550 = vunpack.c.l.b16 %v359
  %v1551 = vunpack.c.l.b16 %v360
  %v1552 = vunpack.c.l.b16 %v361
  %v1553 = vunpack.c.l.b16 %v362
  %v1554 = vunpack.c.l.b16 %v363
  %v1555 = vunpack.c.l.b16 %v364
  %v1556 = vunpack.c.l.b16 %v365
  %v1557 = vunpack.c.l.b16 %v366
  %v1558 = vunpack.c.l.b16 %v367
  %v1559 = vunpack.c.l.b16 %v368
  %v1560 = vunpack.c.l.b16 %v369
  %v1561 = vunpack.c.l.b16 %v370
  %v1562 = vunpack.c.l.b16 %v371
  %v1563 = vunpack.c.l.b16 %v372
  %v1564 = vunpack.c.l.b16 %v373
  %v1565 = vunpack.c.l.b16 %v374
  %v1566 = vunpack.c.l.b16 %v375
  %v1567 = vunpack.c.l.b16 %v376
  %v1568 = vunpack.c.l.b16 %v377
  %v1569 = vunpack.c.l.b16 %v378
  %v1570 = vunpack.c.l.b16 %v379
  %v1571 = vunpack.c.l.b16 %v380
  %v1572 = vunpack.c.l.b16 %v381
  %v1573 = vunpack.c.l.b16 %v382
  %v1574 = vunpack.c.l.b16 %v383
  %v1575 = vunpack.c.l.b16 %v384
  %v1576 = vunpack.c.l.b16 %v385
  %v1577 = vunpack.c.l.b16 %v386
  %v1578 = vunpack.c.l.b16 %v387
  %v1579 = vunpack.c.l.b16 %v388
  %v1580 = vunpack.c.l.b16 %v389
  %v1581 = vunpack.c.l.b16 %v390
  %v1582 = vunpack.c.l.b16 %v391
  %v1583 = vunpack.c.l.b16 %v392
  %v1584 = vunpack.c.l.b16 %v393
  %v1585 = vunpack.c.l.b16 %v394
  %v1586 = vunpack.c.l.b16 %v395
  %v1587 = vunpack.c.l.b16 %v396
  %v1588 = vunpack.c.l.b16 %v397
  %v1589 = vunpack.c.l.b16 %v398
  %v1590 = vunpack.c.l.b16 %v399
  %v1591 = vunpack.c.l.b16 %v400
  %v1592 = vunpack.c.l.b16 %v401
  %v1593 = vunpack.c.l.b16 %v402
  %v1594 = vunpack.c.l.b16 %v403
  %v1595 = vunpack.c.l.b16 %v404
  %v1596 = vunpack.c.l.b16 %v405
  %v1597 = vunpack.c.l.b16 %v406
  %v1598 = vunpack.c.l.b16 %v407
  %v1599 = vunpack.c.l.b16 %v408
  %v1600 = vunpack.c.l.b16 %v409
  %v1601 = vunpack.c.l.b16 %v410
  %v1602 = vunpack.c.l.b16 %v411
  %v1603 = vunpack.c.l.b16 %v412
  %v1604 = vunpack.c.l.b16 %v413
  %v1605 = vunpack.c.l.b16 %v414
  %v1606 = vunpack.c.l.b16 %v415
  %v1607 = vunpack.c.l.b16 %v416
  %v1608 = vunpack.c.l.b16 %v417
  %v1609 = vunpack.c.l.b16 %v418
  %v1610 = vunpack.c.l.b16 %v419
  %v1611 = vunpack.c.l.b16 %v420
  %v1612 = vunpack.c.l.b16 %v421
  %v1613 = vunpack.c.l.b16 %v422
  %v1614 = vunpack.c.l.b16 %v423
  %v1615 = vunpack.c.l.b16 %v424
  %v1616 = vunpack.c.l.b16 %v425
  %v1617 = vunpack.c.l.b16 %v426
  %v1618 = vunpack.c.l.b16 %v427
  %v1619 = vunpack.c.l.b16 %v428
  %v1620 = vunpack.c.l.b16 %v429
  %v1621 = vunpack.c.l.b16 %v430
  %v1622 = vunpack.c.l.b16 %v431
  %v1623 = vunpack.c.l.b16 %v432
  %v1624 = vunpack.c.l.b16 %v433
  %v1625 = vunpack.c.l.b16 %v434
  %v1626 = vunpack.c.l.b16 %v435
  %v1627 = vunpack.c.l.b16 %v436
  %v1628 = vunpack.c.l.b16 %v437
  %v1629 = vunpack.c.l.b16 %v438
  %v1630 = vunpack.c.l.b16 %v439
  %v1631 = vunpack.c.l.b16 %v440
  %v1632 = vunpack.c.l.b16 %v441
  %v1633 = vunpack.c.l.b16 %v442
  %v1634 = vunpack.c.l.b16 %v443
  %v1635 = vunpack.c.l.b16 %v444
  %v1636 = vunpack.c.l.b16 %v445
  %v1637 = vunpack.c.l.b16 %v446
  %v1638 = vunpack.c.l.b16 %v447
  %v1639 = vunpack.c.l.b16 %v448
  %v1640 = vunpack.c.l.b16 %v449
  %v1641 = vunpack.c.l.b16 %v450
  %v1642 = vunpack.c.l.b16 %v451
  %v1643 = vunpack.c.l.b16 %v452
  %v1644 = vunpack.c.l.b16 %v453
  %v1645 = vunpack.c.l.b16 %v454
  %v1646 = vunpack.c.l.b16 %v455
  %v1647 = vunpack.c.l.b16 %v456
  %v1648 = vunpack.c.l.b16 %v457
  %v1649 = vunpack.c.l.b16 %v458
  %v1650 = vunpack.c.l.b16 %v459
  %v1651 = vunpack.c.l.b16 %v460
  %v1652 = vunpack.c.l.b16 %v461
  %v1653 = vunpack.c.l.b16 %v462
  %v1654 = vunpack.c.l.b16 %v463
  %v1655 = vunpack.c.l.b16 %v464
  %v1656 = vunpack.c.l.b16 %v465
  %v1657 = vunpack.c.l.b16 %v466
  %v1658 = vunpack.c.l.b16 %v467
  %v1659 = vunpack.c.l.b16 %v468
  %v1660 = vunpack.c.l.b16 %v469
  %v1661 = vunpack.c.l.b16 %v470
  %v1662 = vunpack.c.l.b16 %v471
  %v1663 = vunpack.c.l.b16 %v472
  %v1664 = vunpack.c.l.b16 %v473
  %v1665 = vunpack.c.l.b16 %v474
  %v1666 = vunpack.c.l.b16 %v475
  %v1667 = vunpack.c.l.b16 %v476
  %v1668 = vunpack.c.l.b16 %v477
  %v1669 = vunpack.c.l.b16 %v478
  %v1670 = vunpack.c.l.b16 %v479
  %v1671 = vunpack.c.l.b16 %v480
  %v1672 = vunpack.c.l.b16 %v481
  %v1673 = vunpack.c.l.b16 %v482
  %v1674 = vunpack.c.l.b16 %v483
  %v1675 = vunpack.c.l.b16 %v484
  %v1676 = vunpack.c.l.b16 %v485
  %v1677 = vunpack.c.l.b16 %v486
  %v1678 = vunpack.c.l.b16 %v487
  %v1679 = vunpack.c.l.b16 %v488
  %v1680 = vunpack.c.l.b16 %v489
  %v1681 = vunpack.c.l.b16 %v490
  %v1682 = vunpack.c.l.b16 %v491
  %v1683 = vunpack.c.l.b16 %v492
  %v1684 = vunpack.c.l.b16 %v493
  %v1685 = vunpack.c.l.b16 %v494
  %v1686 = vunpack.c.l.b16 %v495
  %v1687 = vunpack.c.l.b16 %v496
  %v1688 = vunpack.c.l.b16 %v497
  %v1689 = vunpack.c.l.b16 %v498
  %v1690 = vunpack.c.l.b16 %v499
  %v1691 = vunpack.c.l.b16 %v500
  %v1692 = vunpack.c.l.b16 %v501
  %v1693 = vunpack.c.l.b16 %v502
  %v1694 = vunpack.c.l.b16 %v503
  %v1695 = vunpack.c.l.b16 %v504
  %v1696 = vunpack.c.l.b16 %v505
  %v1697 = vunpack.c.l.b16 %v506
  %v1698 = vunpack.c.l.b16 %v507
  %v1699 = vunpack.c.l.b16 %v508
  %v1700 = vunpack.c.l.b16 %v509
  %v1701 = vunpack.c.l.b16 %v510
  %v1702 = vunpack.c.l.b16 %v511
  %v1703 = vunpack.c.l.b16 %v512
  %v1704 = vunpack.c.l.b16 %v513
  %v1705 = vunpack.c.l.b16 %v514
  %v1706 = vunpack.c.l.b16 %v515
  %v1707 = vunpack.c.l.b16 %v516
  %v1708 = vunpack.c.l.b16 %v517
  %v1709 = vunpack.c.l.b16 %v518
  %v1710 = vunpack.c.l.b16 %v519
  %v1711 = vunpack.c.l.b16 %v520
  %v1712 = vunpack.c.l.b16 %v521
  %v1713 = vunpack.c.l.b16 %v522
  %v1714 = vunpack.c.l.b16 %v523
  %v1715 = vunpack.c.l.b16 %v524
  %v1716 = vunpack.c.l.b16 %v525
  %v1717 = vunpack.c.l.b16 %v526
  %v1718 = vunpack.c.l.b16 %v527
  %v1719 = vunpack.c.l.b16 %v528
  %v1720 = vunpack.c.l.b16 %v529
  %v1721 = vunpack.c.l.b16 %v530
  %v1722 = vunpack.c.l.b16 %v531
  %v1723 = vunpack.c.l.b16 %v532
  %v1724 = vunpack.c.l.b16 %v533
  %v1725 = vunpack.c.l.b16 %v534
  %v1726 = vunpack.c.l.b16 %v535
  %v1727 = vunpack.c.l.b16 %v536
  %v1728 = vunpack.c.l.b16 %v537
  %v1729 = vunpack.c.l.b16 %v538
  %v1730 = vunpack.c.l.b16 %v539
  %v1731 = vunpack.c.l.b16 %v540
  %v1732 = vunpack.c.l.b16 %v541
  %v1733 = vunpack.c.l.b16 %v542
  %v1734 = vunpack.c.l.b16 %v543
  %v1735 = vunpack.c.l.b16 %v544
  %v1736 = vunpack.c.l.b16 %v545
  %v1737 = vunpack.c.l.b16 %v546
  %v1738 = vunpack.c.l.b16 %v547
  %v1739 = vunpack.c.l.b16 %v548
  %v1740 = vunpack.c.l.b16 %v549
  %v1741 = vunpack.c.l.b16 %v550
  %v1742 = vunpack.c.l.b16 %v551
  %v1743 = vunpack.c.l.b16 %v552
  %v1744 = vunpack.c.l.b16 %v553
  %v1745 = vunpack.c.l.b16 %v554
  %v1746 = vunpack.c.l.b16 %v555
  %v1747 = vunpack.c.l.b16 %v556
  %v1748 = vunpack.c.l.b16 %v557
  %v1749 = vunpack.c.l.b16 %v558
  %v1750 = vunpack.c.l.b16 %v559
  %v1751 = vunpack.c.l.b16 %v560
  %v1752 = vunpack.c.l.b16 %v561
  %v1753 = vunpack.c.l.b16 %v562
  %v1754 = vunpack.c.l.b16 %v563
  %v1755 = vunpack.c.l.b16 %v564
  %v1756 = vunpack.c.l.b16 %v565
  %v1757 = vunpack.c.l.b16 %v566
  %v1758 = vunpack.c.l.b16 %v567
  %v1759 = vunpack.c.l.b16 %v568
  %v1760 = vunpack.c.l.b16 %v569
  %v1761 = vunpack.c.l.b16 %v570
  %v1762 = vpack.c.b16 %v1251, %v1250
  %v1763 = vpack.c.b16 %v1253, %v1252
  %v1764 = vpack.c.b16 %v1255, %v1254
  %v1765 = vpack.c.b16 %v1257, %v1256
  %v1766 = vpack.c.b16 %v1259, %v1258
  %v1767 = vpack.c.b16 %v1261, %v1260
  %v1768 = vpack.c.b16 %v1263, %v1262
  %v1769 = vpack.c.b16 %v1265, %v1264
  %v1770 = vpack.c.b16 %v1267, %v1266
  %v1771 = vpack.c.b16 %v1269, %v1268
  %v1772 = vpack.c.b16 %v1271, %v1270
  %v1773 = vpack.c.b16 %v1273, %v1272
  %v1774 = vpack.c.b16 %v1275, %v1274
  %v1775 = vpack.c.b16 %v1277, %v1276
  %v1776 = vpack.c.b16 %v1279, %v1278
  %v1777 = vpack.c.b16 %v1281, %v1280
  %v1778 = vpack.c.b16 %v1283, %v1282
  %v1779 = vpack.c.b16 %v1285, %v1284
  %v1780 = vpack.c.b16 %v1287, %v1286
  %v1781 = vpack.c.b16 %v1289, %v1288
  %v1782 = vpack.c.b16 %v1291, %v1290
  %v1783 = vpack.c.b16 %v1293, %v1292
  %v1784 = vpack.c.b16 %v1295, %v1294
  %v1785 = vpack.c.b16 %v1297, %v1296
  %v1786 = vpack.c.b16 %v1299, %v1298
  %v1787 = vpack.c.b16 %v1301, %v1300
  %v1788 = vpack.c.b16 %v1303, %v1302
  %v1789 = vpack.c.b16 %v1305, %v1304
  %v1790 = vpack.c.b16 %v1307, %v1306
  %v1791 = vpack.c.b16 %v1309, %v1308
  %v1792 = vpack.c.b16 %v1311, %v1310
  %v1793 = vpack.c.b16 %v1313, %v1312
  %v1794 = vpack.c.b16 %v1315, %v1314
  %v1795 = vpack.c.b16 %v1317, %v1316
  %v1796 = vpack.c.b16 %v1319, %v1318
  %v1797 = vpack.c.b16 %v1321, %v1320
  %v1798 = vpack.c.b16 %v1323, %v1322
  %v1799 = vpack.c.b16 %v1325, %v1324
  %v1800 = vpack.c.b16 %v1327, %v1326
  %v1801 = vpack.c.b16 %v1329, %v1328
  %v1802 = vpack.c.b16 %v1331, %v1330
  %v1803 = vpack.c.b16 %v1333, %v1332
  %v1804 = vpack.c.b16 %v1335, %v1334
  %v1805 = vpack.c.b16 %v1337, %v1336
  %v1806 = vpack.c.b16 %v1339, %v1338
  %v1807 = vpack.c.b16 %v1341, %v1340
  %v1808 = vpack.c.b16 %v1343, %v1342
  %v1809 = vpack.c.b16 %v1345, %v1344
  %v1810 = vpack.c.b16 %v1347, %v1346
  %v1811 = vpack.c.b16 %v1349, %v1348
  %v1812 = vpack.c.b16 %v1351, %v1350
  %v1813 = vpack.c.b16 %v1353, %v1352
  %v1814 = vpack.c.b16 %v1355, %v1354
  %v1815 = vpack.c.b16 %v1357, %v1356
  %v1816 = vpack.c.b16 %v1359, %v1358
  %v1817 = vpack.c.b16 %v1361, %v1360
  %v1818 = vpack.c.b16 %v1363, %v1362
  %v1819 = vpack.c.b16 %v1365, %v1364
  %v1820 = vpack.c.b16 %v1367, %v1366
  %v1821 = vpack.c.b16 %v1369, %v1368
  %v1822 = vpack.c.b16 %v1371, %v1370
  %v1823 = vpack.c.b16 %v1373, %v1372
  %v1824 = vpack.c.b16 %v1375, %v1374
  %v1825 = vpack.c.b16 %v1377, %v1376
  %v1826 = vpack.c.b16 %v1379, %v1378
  %v1827 = vpack.c.b16 %v1381, %v1380
  %v1828 = vpack.c.b16 %v1383, %v1382
  %v1829 = vpack.c.b16 %v1385, %v1384
  %v1830 = vpack.c.b16 %v1387, %v1386
  %v1831 = vpack.c.b16 %v1389, %v1388
  %v1832 = vpack.c.b16 %v1391, %v1390
  %v1833 = vpack.c.b16 %v1393, %v1392
  %v1834 = vpack.c.b16 %v1395, %v1394
  %v1835 = vpack.c.b16 %v1397, %v1396
  %v1836 = vpack.c.b16 %v1399, %v1398
  %v1837 = vpack.c.b16 %v1401, %v1400
  %v1838 = vpack.c.b16 %v1403, %v1402
  %v1839 = vpack.c.b16 %v1405, %v1404
  %v1840 = vpack.c.b16 %v1407, %v1406
  %v1841 = vpack.c.b16 %v1409, %v1408
  %v1842 = vpack.c.b16 %v1411, %v1410
  %v1843 = vpack.c.b16 %v1413, %v1412
  %v1844 = vpack.c.b16 %v1415, %v1414
  %v1845 = vpack.c.b16 %v1417, %v1416
  %v1846 = vpack.c.b16 %v1419, %v1418
  %v1847 = vpack.c.b16 %v1421, %v1420
  %v1848 = vpack.c.b16 %v1423, %v1422
  %v1849 = vpack.c.b16 %v1425, %v1424
  %v1850 = vpack.c.b16 %v1427, %v1426
  %v1851 = vpack.c.b16 %v1429, %v1428
  %v1852 = vpack.c.b16 %v1431, %v1430
  %v1853 = vpack.c.b16 %v1433, %v1432
  %v1854 = vpack.c.b16 %v1435, %v1434
  %v1855 = vpack.c.b16 %v1437, %v1436
  %v1856 = vpack.c.b16 %v1439, %v1438
  %v1857 = vpack.c.b16 %v1441, %v1440
  %v1858 = vpack.c.b16 %v1443, %v1442
  %v1859 = vpack.c.b16 %v1445, %v1444
  %v1860 = vpack.c.b16 %v1447, %v1446
  %v1861 = vpack.c.b16 %v1449, %v1448
  %v1862 = vpack.c.b16 %v1451, %v1450
  %v1863 = vpack.c.b16 %v1453, %v1452
  %v1864 = vpack.c.b16 %v1455, %v1454
  %v1865 = vpack.c.b16 %v1457, %v1456
  %v1866 = vpack.c.b16 %v1459, %v1458
  %v1867 = vpack.c.b16 %v1461, %v1460
  %v1868 = vpack.c.b16 %v1463, %v1462
  %v1869 = vpack.c.b16 %v1465, %v1464
  %v1870 = vpack.c.b16 %v1467, %v1466
  %v1871 = vpack.c.b16 %v1469, %v1468
  %v1872 = vpack.c.b16 %v1471, %v1470
  %v1873 = vpack.c.b16 %v1473, %v1472
  %v1874 = vpack.c.b16 %v1475, %v1474
  %v1875 = vpack.c.b16 %v1477, %v1476
  %v1876 = vpack.c.b16 %v1479, %v1478
  %v1877 = vpack.c.b16 %v1481, %v1480
  %v1878 = vpack.c.b16 %v1483, %v1482
  %v1879 = vpack.c.b16 %v1485, %v1484
  %v1880 = vpack.c.b16 %v1487, %v1486
  %v1881 = vpack.c.b16 %v1489, %v1488
  %v1882 = vpack.c.b16 %v1491, %v1490
  %v1883 = vpack.c.b16 %v1493, %v1492
  %v1884 = vpack.c.b16 %v1495, %v1494
  %v1885 = vpack.c.b16 %v1497, %v1496
  %v1886 = vpack.c.b16 %v1499, %v1498
  %v1887 = vpack.c.b16 %v1501, %v1500
  %v1888 = vpack.c.b16 %v1503, %v1502
  %v1889 = vpack.c.b16 %v1505, %v1504
  %v1890 = vpack.c.b16 %v1507, %v1506
  %v1891 = vpack.c.b16 %v1509, %v1508
  %v1892 = vpack.c.b16 %v1511, %v1510
  %v1893 = vpack.c.b16 %v1513, %v1512
  %v1894 = vpack.c.b16 %v1515, %v1514
  %v1895 = vpack.c.b16 %v1517, %v1516
  %v1896 = vpack.c.b16 %v1519, %v1518
  %v1897 = vpack.c.b16 %v1521, %v1520
  %v1898 = vpack.c.b16 %v1523, %v1522
  %v1899 = vpack.c.b16 %v1525, %v1524
  %v1900 = vpack.c.b16 %v1527, %v1526
  %v1901 = vpack.c.b16 %v1529, %v1528
  %v1902 = vpack.c.b16 %v1531, %v1530
  %v1903 = vpack.c.b16 %v1533, %v1532
  %v1904 = vpack.c.b16 %v1535, %v1534
  %v1905 = vpack.c.b16 %v1537, %v1536
  %v1906 = vpack.c.b16 %v1539, %v1538
  %v1907 = vpack.c.b16 %v1541, %v1540
  %v1908 = vpack.c.b16 %v1543, %v1542
  %v1909 = vpack.c.b16 %v1545, %v1544
  %v1910 = vpack.c.b16 %v1547, %v1546
  %v1911 = vpack.c.b16 %v1549, %v1548
  %v1912 = vpack.c.b16 %v1551, %v1550
  %v1913 = vpack.c.b16 %v1553, %v1552
  %v1914 = vpack.c.b16 %v1555, %v1554
  %v1915 = vpack.c.b16 %v1557, %v1556
  %v1916 = vpack.c.b16 %v1559, %v1558
  %v1917 = vpack.c.b16 %v1561, %v1560
  %v1918 = vpack.c.b16 %v1563, %v1562
  %v1919 = vpack.c.b16 %v1565, %v1564
  %v1920 = vpack.c.b16 %v1567, %v1566
  %v1921 = vpack.c.b16 %v1569, %v1568
  %v1922 = vpack.c.b16 %v1571, %v1570
  %v1923 = vpack.c.b16 %v1573, %v1572
  %v1924 = vpack.c.b16 %v1575, %v1574
  %v1925 = vpack.c.b16 %v1577, %v1576
  %v1926 = vpack.c.b16 %v1579, %v1578
  %v1927 = vpack.c.b16 %v1581, %v1580
  %v1928 = vpack.c.b16 %v1583, %v1582
  %v1929 = vpack.c.b16 %v1585, %v1584
  %v1930 = vpack.c.b16 %v1587, %v1586
  %v1931 = vpack.c.b16 %v1589, %v1588
  %v1932 = vpack.c.b16 %v1591, %v1590
  %v1933 = vpack.c.b16 %v1593, %v1592
  %v1934 = vpack.c.b16 %v1595, %v1594
  %v1935 = vpack.c.b16 %v1597, %v1596
  %v1936 = vpack.c.b16 %v1599, %v1598
  %v1937 = vpack.c.b16 %v1601, %v1600
  %v1938 = vpack.c.b16 %v1603, %v1602
  %v1939 = vpack.c.b16 %v1605, %v1604
  %v1940 = vpack.c.b16 %v1607, %v1606
  %v1941 = vpack.c.b16 %v1609, %v1608
  %v1942 = vpack.c.b16 %v1611, %v1610
  %v1943 = vpack.c.b16 %v1613, %v1612
  %v1944 = vpack.c.b16 %v1615, %v1614
  %v1945 = vpack.c.b16 %v1617, %v1616
  %v1946 = vpack.c.b16 %v1619, %v1618
  %v1947 = vpack.c.b16 %v1621, %v1620
  %v1948 = vpack.c.b16 %v1623, %v1622
  %v1949 = vpack.c.b16 %v1625, %v1624
  %v1950 = vpack.c.b16 %v1627, %v1626
  %v1951 = vpack.c.b16 %v1629, %v1628
  %v1952 = vpack.c.b16 %v1631, %v1630
  %v1953 = vpack.c.b16 %v1633, %v1632
  %v1954 = vpack.c.b16 %v1635, %v1634
  %v1955 = vpack.c.b16 %v1637, %v1636
  %v1956 = vpack.c.b16 %v1639, %v1638
  %v1957 = vpack.c.b16 %v1641, %v1640
  %v1958 = vpack.c.b16 %v1643, %v1642
  %v1959 = vpack.c.b16 %v1645, %v1644
  %v1960 = vpack.c.b16 %v1647, %v1646
  %v1961 = vpack.c.b16 %v1649, %v1648
  %v1962 = vpack.c.b16 %v1651, %v1650
  %v1963 = vpack.c.b16 %v1653, %v1652
  %v1964 = vpack.c.b16 %v1655, %v1654
  %v1965 = vpack.c.b16 %v1657, %v1656
  %v1966 = vpack.c.b16 %v1659, %v1658
  %v1967 = vpack.c.b16 %v1661, %v1660
  %v1968 = vpack.c.b16 %v1663, %v1662
  %v1969 = vpack.c.b16 %v1665, %v1664
  %v1970 = vpack.c.b16 %v1667, %v1666
  %v1971 = vpack.c.b16 %v1669, %v1668
  %v1972 = vpack.c.b16 %v1671, %v1670
  %v1973 = vpack.c.b16 %v1673, %v1672
  %v1974 = vpack.c.b16 %v1675, %v1674
  %v1975 = vpack.c.b16 %v1677, %v1676
  %v1976 = vpack.c.b16 %v1679, %v1678
  %v1977 = vpack.c.b16 %v1681, %v1680
  %v1978 = vpack.c.b16 %v1683, %v1682
  %v1979 = vpack.c.b16 %v1685, %v1684
  %v1980 = vpack.c.b16 %v1687, %v1686
  %v1981 = vpack.c.b16 %v1689, %v1688
  %v1982 = vpack.c.b16 %v1691, %v1690
  %v1983 = vpack.c.b16 %v1693, %v1692
  %v1984 = vpack.c.b16 %v1695, %v1694
  %v1985 = vpack.c.b16 %v1697, %v1696
  %v1986 = vpack.c.b16 %v1699, %v1698
  %v1987 = vpack.c.b16 %v1701, %v1700
  %v1988 = vpack.c.b16 %v1703, %v1702
  %v1989 = vpack.c.b16 %v1705, %v1704
  %v1990 = vpack.c.b16 %v1707, %v1706
  %v1991 = vpack.c.b16 %v1709, %v1708
  %v1992 = vpack.c.b16 %v1711, %v1710
  %v1993 = vpack.c.b16 %v1713, %v1712
  %v1994 = vpack.c.b16 %v1715, %v1714
  %v1995 = vpack.c.b16 %v1717, %v1716
  %v1996 = vpack.c.b16 %v1719, %v1718
  %v1997 = vpack.c.b16 %v1721, %v1720
  %v1998 = vpack.c.b16 %v1723, %v1722
  %v1999 = vpack.c.b16 %v1725, %v1724
  %v2000 = vpack.c.b16 %v1727, %v1726
  %v2001 = vpack.c.b16 %v1729, %v1728
  %v2002 = vpack.c.b16 %v1731, %v1730
  %v2003 = vpack.c.b16 %v1733, %v1732
  %v2004 = vpack.c.b16 %v1735, %v1734
  %v2005 = vpack.c.b16 %v1737, %v1736
  %v2006 = vpack.c.b16 %v1739, %v1738
  %v2007 = vpack.c.b16 %v1741, %v1740
  %v2008 = vpack.c.b16 %v1743, %v1742
  %v2009 = vpack.c.b16 %v1745, %v1744
  %v2010 = vpack.c.b16 %v1747, %v1746
  %v2011 = vpack.c.b16 %v1749, %v1748
  %v2012 = vpack.c.b16 %v1751, %v1750
  %v2013 = vpack.c.b16 %v1753, %v1752
  %v2014 = vpack.c.b16 %v1755, %v1754
  %v2015 = vpack.c.b16 %v1757, %v1756
  %v2016 = vpack.c.b16 %v1759, %v1758
  %v2017 = vpack.c.b16 %v1761, %v1760
  %2274 = vmatprep.subr.bf16.mxu0 0
  %2275 = vmatpush1.bf16.msra.mxu0 %v1769
  %2276 = vmatprep.subr.bf16.mxu0 0
  %2277 = vmatpush1.bf16.msra.mxu0 %v1768
  %2278 = vmatprep.subr.bf16.mxu0 0
  %2279 = vmatpush1.bf16.msra.mxu0 %v1767
  %2280 = vmatprep.subr.bf16.mxu0 0
  %2281 = vmatpush1.bf16.msra.mxu0 %v1766
  %2282 = vmatprep.subr.bf16.mxu0 0
  %2283 = vmatpush1.bf16.msra.mxu0 %v1765
  %2284 = vmatprep.subr.bf16.mxu0 0
  %2285 = vmatpush1.bf16.msra.mxu0 %v1764
  %2286 = vmatprep.subr.bf16.mxu0 0
  %2287 = vmatpush1.bf16.msra.mxu0 %v1763
  %2288 = vmatprep.subr.bf16.mxu0 0
  %2289 = vmatpush1.bf16.msra.mxu0 %v1762
  %2290 = vmatprep.subr.bf16.mxu0 0
  %2291 = vmatpush2.bf16.msra.mxu0 %v1777
  %2292 = vmatprep.subr.bf16.mxu0 0
  %2293 = vmatpush2.bf16.msra.mxu0 %v1776
  %2294 = vmatprep.subr.bf16.mxu0 0
  %2295 = vmatpush2.bf16.msra.mxu0 %v1775
  %2296 = vmatprep.subr.bf16.mxu0 0
  %2297 = vmatpush2.bf16.msra.mxu0 %v1774
  %2298 = vmatprep.subr.bf16.mxu0 0
  %2299 = vmatpush2.bf16.msra.mxu0 %v1773
  %2300 = vmatprep.subr.bf16.mxu0 0
  %2301 = vmatpush2.bf16.msra.mxu0 %v1772
  %2302 = vmatprep.subr.bf16.mxu0 0
  %2303 = vmatpush2.bf16.msra.mxu0 %v1771
  %2304 = vmatprep.subr.bf16.mxu0 0
  %2305 = vmatpush2.bf16.msra.mxu0 %v1770
  %2306 = vmatprep.mubr.bf16.mxu0 %v675
  %2307 = vmatmul.mubr.bf16.gmra.mxu0 %v674
  %v2308 = vpop.f32.mrf.mxu0
  %v2309 = vadd.f32 %v576, %v2308
  %v2310 = vpop.f32.mrf.mxu0
  %v2311 = vpop.f32.mrf.mxu0
  %v2312 = vadd.f32 %v576, %v2311
  %v2313 = vpop.f32.mrf.mxu0
  %2314 = vdwg.mxu0
  %2315 = vmatprep.subr.bf16.mxu0 0
  %2316 = vmatpush1.bf16.msra.mxu0 %v1785
  %2317 = vmatprep.subr.bf16.mxu0 0
  %2318 = vmatpush1.bf16.msra.mxu0 %v1784
  %2319 = vmatprep.subr.bf16.mxu0 0
  %2320 = vmatpush1.bf16.msra.mxu0 %v1783
  %2321 = vmatprep.subr.bf16.mxu0 0
  %2322 = vmatpush1.bf16.msra.mxu0 %v1782
  %2323 = vmatprep.subr.bf16.mxu0 0
  %2324 = vmatpush1.bf16.msra.mxu0 %v1781
  %2325 = vmatprep.subr.bf16.mxu0 0
  %2326 = vmatpush1.bf16.msra.mxu0 %v1780
  %2327 = vmatprep.subr.bf16.mxu0 0
  %2328 = vmatpush1.bf16.msra.mxu0 %v1779
  %2329 = vmatprep.subr.bf16.mxu0 0
  %2330 = vmatpush1.bf16.msra.mxu0 %v1778
  %2331 = vmatprep.subr.bf16.mxu0 0
  %2332 = vmatpush2.bf16.msra.mxu0 %v1793
  %2333 = vmatprep.subr.bf16.mxu0 0
  %2334 = vmatpush2.bf16.msra.mxu0 %v1792
  %2335 = vmatprep.subr.bf16.mxu0 0
  %2336 = vmatpush2.bf16.msra.mxu0 %v1791
  %2337 = vmatprep.subr.bf16.mxu0 0
  %2338 = vmatpush2.bf16.msra.mxu0 %v1790
  %2339 = vmatprep.subr.bf16.mxu0 0
  %2340 = vmatpush2.bf16.msra.mxu0 %v1789
  %2341 = vmatprep.subr.bf16.mxu0 0
  %2342 = vmatpush2.bf16.msra.mxu0 %v1788
  %2343 = vmatprep.subr.bf16.mxu0 0
  %2344 = vmatpush2.bf16.msra.mxu0 %v1787
  %2345 = vmatprep.subr.bf16.mxu0 0
  %2346 = vmatpush2.bf16.msra.mxu0 %v1786
  %2347 = vmatprep.mubr.bf16.mxu0 %v677
  %2348 = vmatmul.mubr.bf16.gmra.mxu0 %v676
  %v2349 = vpop.f32.mrf.mxu0
  %v2350 = vadd.f32 %v2309, %v2349
  %v2351 = vpop.f32.mrf.mxu0
  %v2352 = vpop.f32.mrf.mxu0
  %v2353 = vadd.f32 %v2312, %v2352
  %v2354 = vpop.f32.mrf.mxu0
  %2355 = vdwg.mxu0
  %2356 = vmatprep.subr.bf16.mxu0 0
  %2357 = vmatpush1.bf16.msra.mxu0 %v1801
  %2358 = vmatprep.subr.bf16.mxu0 0
  %2359 = vmatpush1.bf16.msra.mxu0 %v1800
  %2360 = vmatprep.subr.bf16.mxu0 0
  %2361 = vmatpush1.bf16.msra.mxu0 %v1799
  %2362 = vmatprep.subr.bf16.mxu0 0
  %2363 = vmatpush1.bf16.msra.mxu0 %v1798
  %2364 = vmatprep.subr.bf16.mxu0 0
  %2365 = vmatpush1.bf16.msra.mxu0 %v1797
  %2366 = vmatprep.subr.bf16.mxu0 0
  %2367 = vmatpush1.bf16.msra.mxu0 %v1796
  %2368 = vmatprep.subr.bf16.mxu0 0
  %2369 = vmatpush1.bf16.msra.mxu0 %v1795
  %2370 = vmatprep.subr.bf16.mxu0 0
  %2371 = vmatpush1.bf16.msra.mxu0 %v1794
  %2372 = vmatprep.subr.bf16.mxu0 0
  %2373 = vmatpush2.bf16.msra.mxu0 %v1809
  %2374 = vmatprep.subr.bf16.mxu0 0
  %2375 = vmatpush2.bf16.msra.mxu0 %v1808
  %2376 = vmatprep.subr.bf16.mxu0 0
  %2377 = vmatpush2.bf16.msra.mxu0 %v1807
  %2378 = vmatprep.subr.bf16.mxu0 0
  %2379 = vmatpush2.bf16.msra.mxu0 %v1806
  %2380 = vmatprep.subr.bf16.mxu0 0
  %2381 = vmatpush2.bf16.msra.mxu0 %v1805
  %2382 = vmatprep.subr.bf16.mxu0 0
  %2383 = vmatpush2.bf16.msra.mxu0 %v1804
  %2384 = vmatprep.subr.bf16.mxu0 0
  %2385 = vmatpush2.bf16.msra.mxu0 %v1803
  %2386 = vmatprep.subr.bf16.mxu0 0
  %2387 = vmatpush2.bf16.msra.mxu0 %v1802
  %2388 = vmatprep.mubr.bf16.mxu0 %v679
  %2389 = vmatmul.mubr.bf16.gmra.mxu0 %v678
  %v2390 = vpop.f32.mrf.mxu0
  %v2391 = vadd.f32 %v2350, %v2390
  %v2392 = vpop.f32.mrf.mxu0
  %v2393 = vpop.f32.mrf.mxu0
  %v2394 = vadd.f32 %v2353, %v2393
  %v2395 = vpop.f32.mrf.mxu0
  %2396 = vdwg.mxu0
  %2397 = vmatprep.subr.bf16.mxu0 0
  %2398 = vmatpush1.bf16.msra.mxu0 %v1817
  %2399 = vmatprep.subr.bf16.mxu0 0
  %2400 = vmatpush1.bf16.msra.mxu0 %v1816
  %2401 = vmatprep.subr.bf16.mxu0 0
  %2402 = vmatpush1.bf16.msra.mxu0 %v1815
  %2403 = vmatprep.subr.bf16.mxu0 0
  %2404 = vmatpush1.bf16.msra.mxu0 %v1814
  %2405 = vmatprep.subr.bf16.mxu0 0
  %2406 = vmatpush1.bf16.msra.mxu0 %v1813
  %2407 = vmatprep.subr.bf16.mxu0 0
  %2408 = vmatpush1.bf16.msra.mxu0 %v1812
  %2409 = vmatprep.subr.bf16.mxu0 0
  %2410 = vmatpush1.bf16.msra.mxu0 %v1811
  %2411 = vmatprep.subr.bf16.mxu0 0
  %2412 = vmatpush1.bf16.msra.mxu0 %v1810
  %2413 = vmatprep.subr.bf16.mxu0 0
  %2414 = vmatpush2.bf16.msra.mxu0 %v1825
  %2415 = vmatprep.subr.bf16.mxu0 0
  %2416 = vmatpush2.bf16.msra.mxu0 %v1824
  %2417 = vmatprep.subr.bf16.mxu0 0
  %2418 = vmatpush2.bf16.msra.mxu0 %v1823
  %2419 = vmatprep.subr.bf16.mxu0 0
  %2420 = vmatpush2.bf16.msra.mxu0 %v1822
  %2421 = vmatprep.subr.bf16.mxu0 0
  %2422 = vmatpush2.bf16.msra.mxu0 %v1821
  %2423 = vmatprep.subr.bf16.mxu0 0
  %2424 = vmatpush2.bf16.msra.mxu0 %v1820
  %2425 = vmatprep.subr.bf16.mxu0 0
  %2426 = vmatpush2.bf16.msra.mxu0 %v1819
  %2427 = vmatprep.subr.bf16.mxu0 0
  %2428 = vmatpush2.bf16.msra.mxu0 %v1818
  %2429 = vmatprep.mubr.bf16.mxu0 %v681
  %2430 = vmatmul.mubr.bf16.gmra.mxu0 %v680
  %v2431 = vpop.f32.mrf.mxu0
  %v2432 = vadd.f32 %v2391, %v2431
  %v2433 = vpop.f32.mrf.mxu0
  %v2434 = vpop.f32.mrf.mxu0
  %v2435 = vadd.f32 %v2394, %v2434
  %v2436 = vpop.f32.mrf.mxu0
  %2437 = vdwg.mxu0
  %2438 = vmatprep.subr.bf16.mxu0 0
  %2439 = vmatpush1.bf16.msra.mxu0 %v1833
  %2440 = vmatprep.subr.bf16.mxu0 0
  %2441 = vmatpush1.bf16.msra.mxu0 %v1832
  %2442 = vmatprep.subr.bf16.mxu0 0
  %2443 = vmatpush1.bf16.msra.mxu0 %v1831
  %2444 = vmatprep.subr.bf16.mxu0 0
  %2445 = vmatpush1.bf16.msra.mxu0 %v1830
  %2446 = vmatprep.subr.bf16.mxu0 0
  %2447 = vmatpush1.bf16.msra.mxu0 %v1829
  %2448 = vmatprep.subr.bf16.mxu0 0
  %2449 = vmatpush1.bf16.msra.mxu0 %v1828
  %2450 = vmatprep.subr.bf16.mxu0 0
  %2451 = vmatpush1.bf16.msra.mxu0 %v1827
  %2452 = vmatprep.subr.bf16.mxu0 0
  %2453 = vmatpush1.bf16.msra.mxu0 %v1826
  %2454 = vmatprep.subr.bf16.mxu0 0
  %2455 = vmatpush2.bf16.msra.mxu0 %v1841
  %2456 = vmatprep.subr.bf16.mxu0 0
  %2457 = vmatpush2.bf16.msra.mxu0 %v1840
  %2458 = vmatprep.subr.bf16.mxu0 0
  %2459 = vmatpush2.bf16.msra.mxu0 %v1839
  %2460 = vmatprep.subr.bf16.mxu0 0
  %2461 = vmatpush2.bf16.msra.mxu0 %v1838
  %2462 = vmatprep.subr.bf16.mxu0 0
  %2463 = vmatpush2.bf16.msra.mxu0 %v1837
  %2464 = vmatprep.subr.bf16.mxu0 0
  %2465 = vmatpush2.bf16.msra.mxu0 %v1836
  %2466 = vmatprep.subr.bf16.mxu0 0
  %2467 = vmatpush2.bf16.msra.mxu0 %v1835
  %2468 = vmatprep.subr.bf16.mxu0 0
  %2469 = vmatpush2.bf16.msra.mxu0 %v1834
  %2470 = vmatprep.mubr.bf16.mxu0 %v683
  %2471 = vmatmul.mubr.bf16.gmra.mxu0 %v682
  %v2472 = vpop.f32.mrf.mxu0
  %v2473 = vadd.f32 %v2432, %v2472
  %v2474 = vpop.f32.mrf.mxu0
  %v2475 = vpop.f32.mrf.mxu0
  %v2476 = vadd.f32 %v2435, %v2475
  %v2477 = vpop.f32.mrf.mxu0
  %2478 = vdwg.mxu0
  %2479 = vmatprep.subr.bf16.mxu0 0
  %2480 = vmatpush1.bf16.msra.mxu0 %v1849
  %2481 = vmatprep.subr.bf16.mxu0 0
  %2482 = vmatpush1.bf16.msra.mxu0 %v1848
  %2483 = vmatprep.subr.bf16.mxu0 0
  %2484 = vmatpush1.bf16.msra.mxu0 %v1847
  %2485 = vmatprep.subr.bf16.mxu0 0
  %2486 = vmatpush1.bf16.msra.mxu0 %v1846
  %2487 = vmatprep.subr.bf16.mxu0 0
  %2488 = vmatpush1.bf16.msra.mxu0 %v1845
  %2489 = vmatprep.subr.bf16.mxu0 0
  %2490 = vmatpush1.bf16.msra.mxu0 %v1844
  %2491 = vmatprep.subr.bf16.mxu0 0
  %2492 = vmatpush1.bf16.msra.mxu0 %v1843
  %2493 = vmatprep.subr.bf16.mxu0 0
  %2494 = vmatpush1.bf16.msra.mxu0 %v1842
  %2495 = vmatprep.subr.bf16.mxu0 0
  %2496 = vmatpush2.bf16.msra.mxu0 %v1857
  %2497 = vmatprep.subr.bf16.mxu0 0
  %2498 = vmatpush2.bf16.msra.mxu0 %v1856
  %2499 = vmatprep.subr.bf16.mxu0 0
  %2500 = vmatpush2.bf16.msra.mxu0 %v1855
  %2501 = vmatprep.subr.bf16.mxu0 0
  %2502 = vmatpush2.bf16.msra.mxu0 %v1854
  %2503 = vmatprep.subr.bf16.mxu0 0
  %2504 = vmatpush2.bf16.msra.mxu0 %v1853
  %2505 = vmatprep.subr.bf16.mxu0 0
  %2506 = vmatpush2.bf16.msra.mxu0 %v1852
  %2507 = vmatprep.subr.bf16.mxu0 0
  %2508 = vmatpush2.bf16.msra.mxu0 %v1851
  %2509 = vmatprep.subr.bf16.mxu0 0
  %2510 = vmatpush2.bf16.msra.mxu0 %v1850
  %2511 = vmatprep.mubr.bf16.mxu0 %v685
  %2512 = vmatmul.mubr.bf16.gmra.mxu0 %v684
  %v2513 = vpop.f32.mrf.mxu0
  %v2514 = vadd.f32 %v2473, %v2513
  %v2515 = vpop.f32.mrf.mxu0
  %v2516 = vpop.f32.mrf.mxu0
  %v2517 = vadd.f32 %v2476, %v2516
  %v2518 = vpop.f32.mrf.mxu0
  %2519 = vdwg.mxu0
  %2520 = vmatprep.subr.bf16.mxu0 0
  %2521 = vmatpush1.bf16.msra.mxu0 %v1865
  %2522 = vmatprep.subr.bf16.mxu0 0
  %2523 = vmatpush1.bf16.msra.mxu0 %v1864
  %2524 = vmatprep.subr.bf16.mxu0 0
  %2525 = vmatpush1.bf16.msra.mxu0 %v1863
  %2526 = vmatprep.subr.bf16.mxu0 0
  %2527 = vmatpush1.bf16.msra.mxu0 %v1862
  %2528 = vmatprep.subr.bf16.mxu0 0
  %2529 = vmatpush1.bf16.msra.mxu0 %v1861
  %2530 = vmatprep.subr.bf16.mxu0 0
  %2531 = vmatpush1.bf16.msra.mxu0 %v1860
  %2532 = vmatprep.subr.bf16.mxu0 0
  %2533 = vmatpush1.bf16.msra.mxu0 %v1859
  %2534 = vmatprep.subr.bf16.mxu0 0
  %2535 = vmatpush1.bf16.msra.mxu0 %v1858
  %2536 = vmatprep.subr.bf16.mxu0 0
  %2537 = vmatpush2.bf16.msra.mxu0 %v1873
  %2538 = vmatprep.subr.bf16.mxu0 0
  %2539 = vmatpush2.bf16.msra.mxu0 %v1872
  %2540 = vmatprep.subr.bf16.mxu0 0
  %2541 = vmatpush2.bf16.msra.mxu0 %v1871
  %2542 = vmatprep.subr.bf16.mxu0 0
  %2543 = vmatpush2.bf16.msra.mxu0 %v1870
  %2544 = vmatprep.subr.bf16.mxu0 0
  %2545 = vmatpush2.bf16.msra.mxu0 %v1869
  %2546 = vmatprep.subr.bf16.mxu0 0
  %2547 = vmatpush2.bf16.msra.mxu0 %v1868
  %2548 = vmatprep.subr.bf16.mxu0 0
  %2549 = vmatpush2.bf16.msra.mxu0 %v1867
  %2550 = vmatprep.subr.bf16.mxu0 0
  %2551 = vmatpush2.bf16.msra.mxu0 %v1866
  %2552 = vmatprep.mubr.bf16.mxu0 %v687
  %2553 = vmatmul.mubr.bf16.gmra.mxu0 %v686
  %v2554 = vpop.f32.mrf.mxu0
  %v2555 = vadd.f32 %v2514, %v2554
  %v2556 = vpop.f32.mrf.mxu0
  %v2557 = vpop.f32.mrf.mxu0
  %v2558 = vadd.f32 %v2517, %v2557
  %v2559 = vpop.f32.mrf.mxu0
  %2560 = vdwg.mxu0
  %2561 = vmatprep.subr.bf16.mxu0 0
  %2562 = vmatpush1.bf16.msra.mxu0 %v1881
  %2563 = vmatprep.subr.bf16.mxu0 0
  %2564 = vmatpush1.bf16.msra.mxu0 %v1880
  %2565 = vmatprep.subr.bf16.mxu0 0
  %2566 = vmatpush1.bf16.msra.mxu0 %v1879
  %2567 = vmatprep.subr.bf16.mxu0 0
  %2568 = vmatpush1.bf16.msra.mxu0 %v1878
  %2569 = vmatprep.subr.bf16.mxu0 0
  %2570 = vmatpush1.bf16.msra.mxu0 %v1877
  %2571 = vmatprep.subr.bf16.mxu0 0
  %2572 = vmatpush1.bf16.msra.mxu0 %v1876
  %2573 = vmatprep.subr.bf16.mxu0 0
  %2574 = vmatpush1.bf16.msra.mxu0 %v1875
  %2575 = vmatprep.subr.bf16.mxu0 0
  %2576 = vmatpush1.bf16.msra.mxu0 %v1874
  %2577 = vmatprep.subr.bf16.mxu0 0
  %2578 = vmatpush2.bf16.msra.mxu0 %v1889
  %2579 = vmatprep.subr.bf16.mxu0 0
  %2580 = vmatpush2.bf16.msra.mxu0 %v1888
  %2581 = vmatprep.subr.bf16.mxu0 0
  %2582 = vmatpush2.bf16.msra.mxu0 %v1887
  %2583 = vmatprep.subr.bf16.mxu0 0
  %2584 = vmatpush2.bf16.msra.mxu0 %v1886
  %2585 = vmatprep.subr.bf16.mxu0 0
  %2586 = vmatpush2.bf16.msra.mxu0 %v1885
  %2587 = vmatprep.subr.bf16.mxu0 0
  %2588 = vmatpush2.bf16.msra.mxu0 %v1884
  %2589 = vmatprep.subr.bf16.mxu0 0
  %2590 = vmatpush2.bf16.msra.mxu0 %v1883
  %2591 = vmatprep.subr.bf16.mxu0 0
  %2592 = vmatpush2.bf16.msra.mxu0 %v1882
  %2593 = vmatprep.mubr.bf16.mxu0 %v689
  %2594 = vmatmul.mubr.bf16.gmra.mxu0 %v688
  %v2595 = vpop.f32.mrf.mxu0
  %v2596 = vadd.f32 %v2555, %v2595
  %v2597 = vpop.f32.mrf.mxu0
  %v2598 = vpop.f32.mrf.mxu0
  %v2599 = vadd.f32 %v2558, %v2598
  %v2600 = vpop.f32.mrf.mxu0
  %2601 = vdwg.mxu0
  %2602 = vmatprep.subr.bf16.mxu0 0
  %2603 = vmatpush1.bf16.msra.mxu0 %v1897
  %2604 = vmatprep.subr.bf16.mxu0 0
  %2605 = vmatpush1.bf16.msra.mxu0 %v1896
  %2606 = vmatprep.subr.bf16.mxu0 0
  %2607 = vmatpush1.bf16.msra.mxu0 %v1895
  %2608 = vmatprep.subr.bf16.mxu0 0
  %2609 = vmatpush1.bf16.msra.mxu0 %v1894
  %2610 = vmatprep.subr.bf16.mxu0 0
  %2611 = vmatpush1.bf16.msra.mxu0 %v1893
  %2612 = vmatprep.subr.bf16.mxu0 0
  %2613 = vmatpush1.bf16.msra.mxu0 %v1892
  %2614 = vmatprep.subr.bf16.mxu0 0
  %2615 = vmatpush1.bf16.msra.mxu0 %v1891
  %2616 = vmatprep.subr.bf16.mxu0 0
  %2617 = vmatpush1.bf16.msra.mxu0 %v1890
  %2618 = vmatprep.subr.bf16.mxu0 0
  %2619 = vmatpush2.bf16.msra.mxu0 %v1905
  %2620 = vmatprep.subr.bf16.mxu0 0
  %2621 = vmatpush2.bf16.msra.mxu0 %v1904
  %2622 = vmatprep.subr.bf16.mxu0 0
  %2623 = vmatpush2.bf16.msra.mxu0 %v1903
  %2624 = vmatprep.subr.bf16.mxu0 0
  %2625 = vmatpush2.bf16.msra.mxu0 %v1902
  %2626 = vmatprep.subr.bf16.mxu0 0
  %2627 = vmatpush2.bf16.msra.mxu0 %v1901
  %2628 = vmatprep.subr.bf16.mxu0 0
  %2629 = vmatpush2.bf16.msra.mxu0 %v1900
  %2630 = vmatprep.subr.bf16.mxu0 0
  %2631 = vmatpush2.bf16.msra.mxu0 %v1899
  %2632 = vmatprep.subr.bf16.mxu0 0
  %2633 = vmatpush2.bf16.msra.mxu0 %v1898
  %2634 = vmatprep.mubr.bf16.mxu0 %v691
  %2635 = vmatmul.mubr.bf16.gmra.mxu0 %v690
  %v2636 = vpop.f32.mrf.mxu0
  %v2637 = vadd.f32 %v2596, %v2636
  %v2638 = vpop.f32.mrf.mxu0
  %v2639 = vpop.f32.mrf.mxu0
  %v2640 = vadd.f32 %v2599, %v2639
  %v2641 = vpop.f32.mrf.mxu0
  %2642 = vdwg.mxu0
  %2643 = vmatprep.subr.bf16.mxu0 0
  %2644 = vmatpush1.bf16.msra.mxu0 %v1913
  %2645 = vmatprep.subr.bf16.mxu0 0
  %2646 = vmatpush1.bf16.msra.mxu0 %v1912
  %2647 = vmatprep.subr.bf16.mxu0 0
  %2648 = vmatpush1.bf16.msra.mxu0 %v1911
  %2649 = vmatprep.subr.bf16.mxu0 0
  %2650 = vmatpush1.bf16.msra.mxu0 %v1910
  %2651 = vmatprep.subr.bf16.mxu0 0
  %2652 = vmatpush1.bf16.msra.mxu0 %v1909
  %2653 = vmatprep.subr.bf16.mxu0 0
  %2654 = vmatpush1.bf16.msra.mxu0 %v1908
  %2655 = vmatprep.subr.bf16.mxu0 0
  %2656 = vmatpush1.bf16.msra.mxu0 %v1907
  %2657 = vmatprep.subr.bf16.mxu0 0
  %2658 = vmatpush1.bf16.msra.mxu0 %v1906
  %2659 = vmatprep.subr.bf16.mxu0 0
  %2660 = vmatpush2.bf16.msra.mxu0 %v1921
  %2661 = vmatprep.subr.bf16.mxu0 0
  %2662 = vmatpush2.bf16.msra.mxu0 %v1920
  %2663 = vmatprep.subr.bf16.mxu0 0
  %2664 = vmatpush2.bf16.msra.mxu0 %v1919
  %2665 = vmatprep.subr.bf16.mxu0 0
  %2666 = vmatpush2.bf16.msra.mxu0 %v1918
  %2667 = vmatprep.subr.bf16.mxu0 0
  %2668 = vmatpush2.bf16.msra.mxu0 %v1917
  %2669 = vmatprep.subr.bf16.mxu0 0
  %2670 = vmatpush2.bf16.msra.mxu0 %v1916
  %2671 = vmatprep.subr.bf16.mxu0 0
  %2672 = vmatpush2.bf16.msra.mxu0 %v1915
  %2673 = vmatprep.subr.bf16.mxu0 0
  %2674 = vmatpush2.bf16.msra.mxu0 %v1914
  %2675 = vmatprep.mubr.bf16.mxu0 %v693
  %2676 = vmatmul.mubr.bf16.gmra.mxu0 %v692
  %v2677 = vpop.f32.mrf.mxu0
  %v2678 = vadd.f32 %v2637, %v2677
  %v2679 = vpop.f32.mrf.mxu0
  %v2680 = vpop.f32.mrf.mxu0
  %v2681 = vadd.f32 %v2640, %v2680
  %v2682 = vpop.f32.mrf.mxu0
  %2683 = vdwg.mxu0
  %2684 = vmatprep.subr.bf16.mxu0 0
  %2685 = vmatpush1.bf16.msra.mxu0 %v1929
  %2686 = vmatprep.subr.bf16.mxu0 0
  %2687 = vmatpush1.bf16.msra.mxu0 %v1928
  %2688 = vmatprep.subr.bf16.mxu0 0
  %2689 = vmatpush1.bf16.msra.mxu0 %v1927
  %2690 = vmatprep.subr.bf16.mxu0 0
  %2691 = vmatpush1.bf16.msra.mxu0 %v1926
  %2692 = vmatprep.subr.bf16.mxu0 0
  %2693 = vmatpush1.bf16.msra.mxu0 %v1925
  %2694 = vmatprep.subr.bf16.mxu0 0
  %2695 = vmatpush1.bf16.msra.mxu0 %v1924
  %2696 = vmatprep.subr.bf16.mxu0 0
  %2697 = vmatpush1.bf16.msra.mxu0 %v1923
  %2698 = vmatprep.subr.bf16.mxu0 0
  %2699 = vmatpush1.bf16.msra.mxu0 %v1922
  %2700 = vmatprep.subr.bf16.mxu0 0
  %2701 = vmatpush2.bf16.msra.mxu0 %v1937
  %2702 = vmatprep.subr.bf16.mxu0 0
  %2703 = vmatpush2.bf16.msra.mxu0 %v1936
  %2704 = vmatprep.subr.bf16.mxu0 0
  %2705 = vmatpush2.bf16.msra.mxu0 %v1935
  %2706 = vmatprep.subr.bf16.mxu0 0
  %2707 = vmatpush2.bf16.msra.mxu0 %v1934
  %2708 = vmatprep.subr.bf16.mxu0 0
  %2709 = vmatpush2.bf16.msra.mxu0 %v1933
  %2710 = vmatprep.subr.bf16.mxu0 0
  %2711 = vmatpush2.bf16.msra.mxu0 %v1932
  %2712 = vmatprep.subr.bf16.mxu0 0
  %2713 = vmatpush2.bf16.msra.mxu0 %v1931
  %2714 = vmatprep.subr.bf16.mxu0 0
  %2715 = vmatpush2.bf16.msra.mxu0 %v1930
  %2716 = vmatprep.mubr.bf16.mxu0 %v695
  %2717 = vmatmul.mubr.bf16.gmra.mxu0 %v694
  %v2718 = vpop.f32.mrf.mxu0
  %v2719 = vadd.f32 %v2678, %v2718
  %v2720 = vpop.f32.mrf.mxu0
  %v2721 = vpop.f32.mrf.mxu0
  %v2722 = vadd.f32 %v2681, %v2721
  %v2723 = vpop.f32.mrf.mxu0
  %2724 = vdwg.mxu0
  %2725 = vmatprep.subr.bf16.mxu0 0
  %2726 = vmatpush1.bf16.msra.mxu0 %v1945
  %2727 = vmatprep.subr.bf16.mxu0 0
  %2728 = vmatpush1.bf16.msra.mxu0 %v1944
  %2729 = vmatprep.subr.bf16.mxu0 0
  %2730 = vmatpush1.bf16.msra.mxu0 %v1943
  %2731 = vmatprep.subr.bf16.mxu0 0
  %2732 = vmatpush1.bf16.msra.mxu0 %v1942
  %2733 = vmatprep.subr.bf16.mxu0 0
  %2734 = vmatpush1.bf16.msra.mxu0 %v1941
  %2735 = vmatprep.subr.bf16.mxu0 0
  %2736 = vmatpush1.bf16.msra.mxu0 %v1940
  %2737 = vmatprep.subr.bf16.mxu0 0
  %2738 = vmatpush1.bf16.msra.mxu0 %v1939
  %2739 = vmatprep.subr.bf16.mxu0 0
  %2740 = vmatpush1.bf16.msra.mxu0 %v1938
  %2741 = vmatprep.subr.bf16.mxu0 0
  %2742 = vmatpush2.bf16.msra.mxu0 %v1953
  %2743 = vmatprep.subr.bf16.mxu0 0
  %2744 = vmatpush2.bf16.msra.mxu0 %v1952
  %2745 = vmatprep.subr.bf16.mxu0 0
  %2746 = vmatpush2.bf16.msra.mxu0 %v1951
  %2747 = vmatprep.subr.bf16.mxu0 0
  %2748 = vmatpush2.bf16.msra.mxu0 %v1950
  %2749 = vmatprep.subr.bf16.mxu0 0
  %2750 = vmatpush2.bf16.msra.mxu0 %v1949
  %2751 = vmatprep.subr.bf16.mxu0 0
  %2752 = vmatpush2.bf16.msra.mxu0 %v1948
  %2753 = vmatprep.subr.bf16.mxu0 0
  %2754 = vmatpush2.bf16.msra.mxu0 %v1947
  %2755 = vmatprep.subr.bf16.mxu0 0
  %2756 = vmatpush2.bf16.msra.mxu0 %v1946
  %2757 = vmatprep.mubr.bf16.mxu0 %v697
  %2758 = vmatmul.mubr.bf16.gmra.mxu0 %v696
  %v2759 = vpop.f32.mrf.mxu0
  %v2760 = vadd.f32 %v2719, %v2759
  %v2761 = vpop.f32.mrf.mxu0
  %v2762 = vpop.f32.mrf.mxu0
  %v2763 = vadd.f32 %v2722, %v2762
  %v2764 = vpop.f32.mrf.mxu0
  %2765 = vdwg.mxu0
  %2766 = vmatprep.subr.bf16.mxu0 0
  %2767 = vmatpush1.bf16.msra.mxu0 %v1961
  %2768 = vmatprep.subr.bf16.mxu0 0
  %2769 = vmatpush1.bf16.msra.mxu0 %v1960
  %2770 = vmatprep.subr.bf16.mxu0 0
  %2771 = vmatpush1.bf16.msra.mxu0 %v1959
  %2772 = vmatprep.subr.bf16.mxu0 0
  %2773 = vmatpush1.bf16.msra.mxu0 %v1958
  %2774 = vmatprep.subr.bf16.mxu0 0
  %2775 = vmatpush1.bf16.msra.mxu0 %v1957
  %2776 = vmatprep.subr.bf16.mxu0 0
  %2777 = vmatpush1.bf16.msra.mxu0 %v1956
  %2778 = vmatprep.subr.bf16.mxu0 0
  %2779 = vmatpush1.bf16.msra.mxu0 %v1955
  %2780 = vmatprep.subr.bf16.mxu0 0
  %2781 = vmatpush1.bf16.msra.mxu0 %v1954
  %2782 = vmatprep.subr.bf16.mxu0 0
  %2783 = vmatpush2.bf16.msra.mxu0 %v1969
  %2784 = vmatprep.subr.bf16.mxu0 0
  %2785 = vmatpush2.bf16.msra.mxu0 %v1968
  %2786 = vmatprep.subr.bf16.mxu0 0
  %2787 = vmatpush2.bf16.msra.mxu0 %v1967
  %2788 = vmatprep.subr.bf16.mxu0 0
  %2789 = vmatpush2.bf16.msra.mxu0 %v1966
  %2790 = vmatprep.subr.bf16.mxu0 0
  %2791 = vmatpush2.bf16.msra.mxu0 %v1965
  %2792 = vmatprep.subr.bf16.mxu0 0
  %2793 = vmatpush2.bf16.msra.mxu0 %v1964
  %2794 = vmatprep.subr.bf16.mxu0 0
  %2795 = vmatpush2.bf16.msra.mxu0 %v1963
  %2796 = vmatprep.subr.bf16.mxu0 0
  %2797 = vmatpush2.bf16.msra.mxu0 %v1962
  %2798 = vmatprep.mubr.bf16.mxu0 %v699
  %2799 = vmatmul.mubr.bf16.gmra.mxu0 %v698
  %v2800 = vpop.f32.mrf.mxu0
  %v2801 = vadd.f32 %v2760, %v2800
  %v2802 = vpop.f32.mrf.mxu0
  %v2803 = vpop.f32.mrf.mxu0
  %v2804 = vadd.f32 %v2763, %v2803
  %v2805 = vpop.f32.mrf.mxu0
  %2806 = vdwg.mxu0
  %2807 = vmatprep.subr.bf16.mxu0 0
  %2808 = vmatpush1.bf16.msra.mxu0 %v1977
  %2809 = vmatprep.subr.bf16.mxu0 0
  %2810 = vmatpush1.bf16.msra.mxu0 %v1976
  %2811 = vmatprep.subr.bf16.mxu0 0
  %2812 = vmatpush1.bf16.msra.mxu0 %v1975
  %2813 = vmatprep.subr.bf16.mxu0 0
  %2814 = vmatpush1.bf16.msra.mxu0 %v1974
  %2815 = vmatprep.subr.bf16.mxu0 0
  %2816 = vmatpush1.bf16.msra.mxu0 %v1973
  %2817 = vmatprep.subr.bf16.mxu0 0
  %2818 = vmatpush1.bf16.msra.mxu0 %v1972
  %2819 = vmatprep.subr.bf16.mxu0 0
  %2820 = vmatpush1.bf16.msra.mxu0 %v1971
  %2821 = vmatprep.subr.bf16.mxu0 0
  %2822 = vmatpush1.bf16.msra.mxu0 %v1970
  %2823 = vmatprep.subr.bf16.mxu0 0
  %2824 = vmatpush2.bf16.msra.mxu0 %v1985
  %2825 = vmatprep.subr.bf16.mxu0 0
  %2826 = vmatpush2.bf16.msra.mxu0 %v1984
  %2827 = vmatprep.subr.bf16.mxu0 0
  %2828 = vmatpush2.bf16.msra.mxu0 %v1983
  %2829 = vmatprep.subr.bf16.mxu0 0
  %2830 = vmatpush2.bf16.msra.mxu0 %v1982
  %2831 = vmatprep.subr.bf16.mxu0 0
  %2832 = vmatpush2.bf16.msra.mxu0 %v1981
  %2833 = vmatprep.subr.bf16.mxu0 0
  %2834 = vmatpush2.bf16.msra.mxu0 %v1980
  %2835 = vmatprep.subr.bf16.mxu0 0
  %2836 = vmatpush2.bf16.msra.mxu0 %v1979
  %2837 = vmatprep.subr.bf16.mxu0 0
  %2838 = vmatpush2.bf16.msra.mxu0 %v1978
  %2839 = vmatprep.mubr.bf16.mxu0 %v701
  %2840 = vmatmul.mubr.bf16.gmra.mxu0 %v700
  %v2841 = vpop.f32.mrf.mxu0
  %v2842 = vadd.f32 %v2801, %v2841
  %v2843 = vpop.f32.mrf.mxu0
  %v2844 = vpop.f32.mrf.mxu0
  %v2845 = vadd.f32 %v2804, %v2844
  %v2846 = vpop.f32.mrf.mxu0
  %2847 = vdwg.mxu0
  %2848 = vmatprep.subr.bf16.mxu0 0
  %2849 = vmatpush1.bf16.msra.mxu0 %v1993
  %2850 = vmatprep.subr.bf16.mxu0 0
  %2851 = vmatpush1.bf16.msra.mxu0 %v1992
  %2852 = vmatprep.subr.bf16.mxu0 0
  %2853 = vmatpush1.bf16.msra.mxu0 %v1991
  %2854 = vmatprep.subr.bf16.mxu0 0
  %2855 = vmatpush1.bf16.msra.mxu0 %v1990
  %2856 = vmatprep.subr.bf16.mxu0 0
  %2857 = vmatpush1.bf16.msra.mxu0 %v1989
  %2858 = vmatprep.subr.bf16.mxu0 0
  %2859 = vmatpush1.bf16.msra.mxu0 %v1988
  %2860 = vmatprep.subr.bf16.mxu0 0
  %2861 = vmatpush1.bf16.msra.mxu0 %v1987
  %2862 = vmatprep.subr.bf16.mxu0 0
  %2863 = vmatpush1.bf16.msra.mxu0 %v1986
  %2864 = vmatprep.subr.bf16.mxu0 0
  %2865 = vmatpush2.bf16.msra.mxu0 %v2001
  %2866 = vmatprep.subr.bf16.mxu0 0
  %2867 = vmatpush2.bf16.msra.mxu0 %v2000
  %2868 = vmatprep.subr.bf16.mxu0 0
  %2869 = vmatpush2.bf16.msra.mxu0 %v1999
  %2870 = vmatprep.subr.bf16.mxu0 0
  %2871 = vmatpush2.bf16.msra.mxu0 %v1998
  %2872 = vmatprep.subr.bf16.mxu0 0
  %2873 = vmatpush2.bf16.msra.mxu0 %v1997
  %2874 = vmatprep.subr.bf16.mxu0 0
  %2875 = vmatpush2.bf16.msra.mxu0 %v1996
  %2876 = vmatprep.subr.bf16.mxu0 0
  %2877 = vmatpush2.bf16.msra.mxu0 %v1995
  %2878 = vmatprep.subr.bf16.mxu0 0
  %2879 = vmatpush2.bf16.msra.mxu0 %v1994
  %2880 = vmatprep.mubr.bf16.mxu0 %v703
  %2881 = vmatmul.mubr.bf16.gmra.mxu0 %v702
  %v2882 = vpop.f32.mrf.mxu0
  %v2883 = vadd.f32 %v2842, %v2882
  %v2884 = vpop.f32.mrf.mxu0
  %v2885 = vpop.f32.mrf.mxu0
  %v2886 = vadd.f32 %v2845, %v2885
  %v2887 = vpop.f32.mrf.mxu0
  %2888 = vdwg.mxu0
  %2889 = vmatprep.subr.bf16.mxu0 0
  %2890 = vmatpush1.bf16.msra.mxu0 %v2009
  %2891 = vmatprep.subr.bf16.mxu0 0
  %2892 = vmatpush1.bf16.msra.mxu0 %v2008
  %2893 = vmatprep.subr.bf16.mxu0 0
  %2894 = vmatpush1.bf16.msra.mxu0 %v2007
  %2895 = vmatprep.subr.bf16.mxu0 0
  %2896 = vmatpush1.bf16.msra.mxu0 %v2006
  %2897 = vmatprep.subr.bf16.mxu0 0
  %2898 = vmatpush1.bf16.msra.mxu0 %v2005
  %2899 = vmatprep.subr.bf16.mxu0 0
  %2900 = vmatpush1.bf16.msra.mxu0 %v2004
  %2901 = vmatprep.subr.bf16.mxu0 0
  %2902 = vmatpush1.bf16.msra.mxu0 %v2003
  %2903 = vmatprep.subr.bf16.mxu0 0
  %2904 = vmatpush1.bf16.msra.mxu0 %v2002
  %2905 = vmatprep.subr.bf16.mxu0 0
  %2906 = vmatpush2.bf16.msra.mxu0 %v2017
  %2907 = vmatprep.subr.bf16.mxu0 0
  %2908 = vmatpush2.bf16.msra.mxu0 %v2016
  %2909 = vmatprep.subr.bf16.mxu0 0
  %2910 = vmatpush2.bf16.msra.mxu0 %v2015
  %2911 = vmatprep.subr.bf16.mxu0 0
  %2912 = vmatpush2.bf16.msra.mxu0 %v2014
  %2913 = vmatprep.subr.bf16.mxu0 0
  %2914 = vmatpush2.bf16.msra.mxu0 %v2013
  %2915 = vmatprep.subr.bf16.mxu0 0
  %2916 = vmatpush2.bf16.msra.mxu0 %v2012
  %2917 = vmatprep.subr.bf16.mxu0 0
  %2918 = vmatpush2.bf16.msra.mxu0 %v2011
  %2919 = vmatprep.subr.bf16.mxu0 0
  %2920 = vmatpush2.bf16.msra.mxu0 %v2010
  %2921 = vmatprep.mubr.bf16.mxu0 %v705
  %2922 = vmatmul.mubr.bf16.gmra.mxu0 %v704
  %v2923 = vpop.f32.mrf.mxu0
  %v2924 = vadd.f32 %v2883, %v2923
  %v2925 = vpop.f32.mrf.mxu0
  %v2926 = vpop.f32.mrf.mxu0
  %v2927 = vadd.f32 %v2886, %v2926
  %v2928 = vpop.f32.mrf.mxu0
  %2929 = vdwg.mxu0
  %v2930 = vmax.f32 %v2924, 0.0
  %v2931 = vmax.f32 %v2927, 0.0
  %v2932 = vpack.c.bf16 %v2931, %v2930
  %v2933 = vld [vmem:[%s3] sm:$0xf]
  %v2934 = vld [vmem:[%s3 + $0x4] sm:$0xf]
  %v2935 = vld [vmem:[%s3 + $0x8] sm:$0xf]
  %v2936 = vld [vmem:[%s3 + $0xc] sm:$0xf]
  %v2937 = vld [vmem:[%s3 + $0x10] sm:$0xf]
  %v2938 = vld [vmem:[%s3 + $0x14] sm:$0xf]
  %v2939 = vld [vmem:[%s3 + $0x18] sm:$0xf]
  %v2940 = vld [vmem:[%s3 + $0x1c] sm:$0xf]
  %v2941 = vld [vmem:[%s3 + $0x20] sm:$0xf]
  %v2942 = vld [vmem:[%s3 + $0x24] sm:$0xf]
  %v2943 = vld [vmem:[%s3 + $0x28] sm:$0xf]
  %v2944 = vld [vmem:[%s3 + $0x2c] sm:$0xf]
  %v2945 = vld [vmem:[%s3 + $0x30] sm:$0xf]
  %v2946 = vld [vmem:[%s3 + $0x34] sm:$0xf]
  %v2947 = vld [vmem:[%s3 + $0x38] sm:$0xf]
  %v2948 = vld [vmem:[%s3 + $0x3c] sm:$0xf]
  %v2949 = vld [vmem:[%s4] sm:$0x1]
  %v2951 = vlaneseq
  %v2952 = vshrl.u32 %v2951, 7
  %v2953 = vsub.s32 0, %v2952
  %v2954 = vrot.slane %v2949, %v2953
  %v2972 = vunpack.c.l.b16 %v2933
  %v2973 = vunpack.c.l.b16 %v2934
  %v2974 = vunpack.c.l.b16 %v2935
  %v2975 = vunpack.c.l.b16 %v2936
  %v2976 = vunpack.c.l.b16 %v2937
  %v2977 = vunpack.c.l.b16 %v2938
  %v2978 = vunpack.c.l.b16 %v2939
  %v2979 = vunpack.c.l.b16 %v2940
  %v2980 = vunpack.c.l.b16 %v2941
  %v2981 = vunpack.c.l.b16 %v2942
  %v2982 = vunpack.c.l.b16 %v2943
  %v2983 = vunpack.c.l.b16 %v2944
  %v2984 = vunpack.c.l.b16 %v2945
  %v2985 = vunpack.c.l.b16 %v2946
  %v2986 = vunpack.c.l.b16 %v2947
  %v2987 = vunpack.c.l.b16 %v2948
  %v2988 = vpack.c.b16 %v2973, %v2972
  %v2989 = vpack.c.b16 %v2975, %v2974
  %v2990 = vpack.c.b16 %v2977, %v2976
  %v2991 = vpack.c.b16 %v2979, %v2978
  %v2992 = vpack.c.b16 %v2981, %v2980
  %v2993 = vpack.c.b16 %v2983, %v2982
  %v2994 = vpack.c.b16 %v2985, %v2984
  %v2995 = vpack.c.b16 %v2987, %v2986
  %3004 = vmatprep.subr.bf16.mxu0 0
  %3005 = vmatpush1.bf16.msra.mxu0 %v2995
  %3006 = vmatprep.subr.bf16.mxu0 0
  %3007 = vmatpush1.bf16.msra.mxu0 %v2994
  %3008 = vmatprep.subr.bf16.mxu0 0
  %3009 = vmatpush1.bf16.msra.mxu0 %v2993
  %3010 = vmatprep.subr.bf16.mxu0 0
  %3011 = vmatpush1.bf16.msra.mxu0 %v2992
  %3012 = vmatprep.subr.bf16.mxu0 0
  %3013 = vmatpush1.bf16.msra.mxu0 %v2991
  %3014 = vmatprep.subr.bf16.mxu0 0
  %3015 = vmatpush1.bf16.msra.mxu0 %v2990
  %3016 = vmatprep.subr.bf16.mxu0 0
  %3017 = vmatpush1.bf16.msra.mxu0 %v2989
  %3018 = vmatprep.subr.bf16.mxu0 0
  %3019 = vmatpush1.bf16.msra.mxu0 %v2988
  %3020 = vmatprep.subr.bf16.mxu0 0
  %3021 = vmatpush2.bf16.msra.mxu0 0
  %3022 = vmatprep.subr.bf16.mxu0 0
  %3023 = vmatpush2.bf16.msra.mxu0 0
  %3024 = vmatprep.subr.bf16.mxu0 0
  %3025 = vmatpush2.bf16.msra.mxu0 0
  %3026 = vmatprep.subr.bf16.mxu0 0
  %3027 = vmatpush2.bf16.msra.mxu0 0
  %3028 = vmatprep.subr.bf16.mxu0 0
  %3029 = vmatpush2.bf16.msra.mxu0 0
  %3030 = vmatprep.subr.bf16.mxu0 0
  %3031 = vmatpush2.bf16.msra.mxu0 0
  %3032 = vmatprep.subr.bf16.mxu0 0
  %3033 = vmatpush2.bf16.msra.mxu0 0
  %3034 = vmatprep.subr.bf16.mxu0 0
  %3035 = vmatpush2.bf16.msra.mxu0 0
  %3036 = vmatprep.mubr.bf16.mxu0 0
  %3037 = vmatmul.mubr.bf16.gmra.mxu0 %v2932
  %v3038 = vpop.f32.mrf.mxu0
  %v3039 = vadd.f32 %v2954, %v3038
  %v3040 = vpop.f32.mrf.mxu0
  %v3041 = vpop.f32.mrf.mxu0
  %v3042 = vadd.f32 %v2954, %v3041
  %v3043 = vpop.f32.mrf.mxu0
  %3044 = vdwg.mxu0
  %v3045 = vmax.f32 %v3039, 0.0
  %v3046 = vmax.f32 %v3042, 0.0
  %v3047 = vpack.c.bf16 %v3046, %v3045
  %v3048 = vld [vmem:[%s5] sm:$0xf]
  %v3049 = vld [vmem:[%s5 + $0x4] sm:$0xf]
  %v3050 = vld [vmem:[%s5 + $0x8] sm:$0xf]
  %v3051 = vld [vmem:[%s5 + $0xc] sm:$0xf]
  %v3052 = vld [vmem:[%s5 + $0x10] sm:$0xf]
  %v3053 = vld [vmem:[%s5 + $0x14] sm:$0xf]
  %v3054 = vld [vmem:[%s5 + $0x18] sm:$0xf]
  %v3055 = vld [vmem:[%s5 + $0x1c] sm:$0xf]
  %v3056 = vld [vmem:[%s5 + $0x20] sm:$0xf]
  %v3057 = vld [vmem:[%s5 + $0x24] sm:$0xf]
  %v3058 = vld [vmem:[%s5 + $0x28] sm:$0xf]
  %v3059 = vld [vmem:[%s5 + $0x2c] sm:$0xf]
  %v3060 = vld [vmem:[%s5 + $0x30] sm:$0xf]
  %v3061 = vld [vmem:[%s5 + $0x34] sm:$0xf]
  %v3062 = vld [vmem:[%s5 + $0x38] sm:$0xf]
  %v3063 = vld [vmem:[%s5 + $0x3c] sm:$0xf]
  %v3064 = vld [vmem:[%s6] sm:$0x1]
  %v3066 = vlaneseq
  %v3067 = vshrl.u32 %v3066, 7
  %v3068 = vsub.s32 0, %v3067
  %v3069 = vrot.slane %v3064, %v3068
  %v3087 = vunpack.c.l.b16 %v3048
  %v3088 = vunpack.c.l.b16 %v3049
  %v3089 = vunpack.c.l.b16 %v3050
  %v3090 = vunpack.c.l.b16 %v3051
  %v3091 = vunpack.c.l.b16 %v3052
  %v3092 = vunpack.c.l.b16 %v3053
  %v3093 = vunpack.c.l.b16 %v3054
  %v3094 = vunpack.c.l.b16 %v3055
  %v3095 = vunpack.c.l.b16 %v3056
  %v3096 = vunpack.c.l.b16 %v3057
  %v3097 = vunpack.c.l.b16 %v3058
  %v3098 = vunpack.c.l.b16 %v3059
  %v3099 = vunpack.c.l.b16 %v3060
  %v3100 = vunpack.c.l.b16 %v3061
  %v3101 = vunpack.c.l.b16 %v3062
  %v3102 = vunpack.c.l.b16 %v3063
  %v3103 = vpack.c.b16 %v3088, %v3087
  %v3104 = vpack.c.b16 %v3090, %v3089
  %v3105 = vpack.c.b16 %v3092, %v3091
  %v3106 = vpack.c.b16 %v3094, %v3093
  %v3107 = vpack.c.b16 %v3096, %v3095
  %v3108 = vpack.c.b16 %v3098, %v3097
  %v3109 = vpack.c.b16 %v3100, %v3099
  %v3110 = vpack.c.b16 %v3102, %v3101
  %3119 = vmatprep.subr.bf16.mxu0 0
  %3120 = vmatpush1.bf16.msra.mxu0 %v3110
  %3121 = vmatprep.subr.bf16.mxu0 0
  %3122 = vmatpush1.bf16.msra.mxu0 %v3109
  %3123 = vmatprep.subr.bf16.mxu0 0
  %3124 = vmatpush1.bf16.msra.mxu0 %v3108
  %3125 = vmatprep.subr.bf16.mxu0 0
  %3126 = vmatpush1.bf16.msra.mxu0 %v3107
  %3127 = vmatprep.subr.bf16.mxu0 0
  %3128 = vmatpush1.bf16.msra.mxu0 %v3106
  %3129 = vmatprep.subr.bf16.mxu0 0
  %3130 = vmatpush1.bf16.msra.mxu0 %v3105
  %3131 = vmatprep.subr.bf16.mxu0 0
  %3132 = vmatpush1.bf16.msra.mxu0 %v3104
  %3133 = vmatprep.subr.bf16.mxu0 0
  %3134 = vmatpush1.bf16.msra.mxu0 %v3103
  %3135 = vmatprep.subr.bf16.mxu0 0
  %3136 = vmatpush2.bf16.msra.mxu0 0
  %3137 = vmatprep.subr.bf16.mxu0 0
  %3138 = vmatpush2.bf16.msra.mxu0 0
  %3139 = vmatprep.subr.bf16.mxu0 0
  %3140 = vmatpush2.bf16.msra.mxu0 0
  %3141 = vmatprep.subr.bf16.mxu0 0
  %3142 = vmatpush2.bf16.msra.mxu0 0
  %3143 = vmatprep.subr.bf16.mxu0 0
  %3144 = vmatpush2.bf16.msra.mxu0 0
  %3145 = vmatprep.subr.bf16.mxu0 0
  %3146 = vmatpush2.bf16.msra.mxu0 0
  %3147 = vmatprep.subr.bf16.mxu0 0
  %3148 = vmatpush2.bf16.msra.mxu0 0
  %3149 = vmatprep.subr.bf16.mxu0 0
  %3150 = vmatpush2.bf16.msra.mxu0 0
  %3151 = vmatprep.mubr.bf16.mxu0 0
  %3152 = vmatmul.mubr.bf16.gmra.mxu0 %v3047
  %v3153 = vpop.f32.mrf.mxu0
  %v3154 = vadd.f32 %v3069, %v3153
  %v3155 = vpop.f32.mrf.mxu0
  %v3156 = vpop.f32.mrf.mxu0
  %v3157 = vadd.f32 %v3069, %v3156
  %v3158 = vpop.f32.mrf.mxu0
  %3159 = vdwg.mxu0
  %3160 = vst [vmem:[%s7] sm:$0xff] %v3154
  %3161 = vst [vmem:[%s7 + $0x8] sm:$0xff] %v3157
  // Predicated region
  $region30: #{lnn_forward.7} parent=0 // pred_check
    _
  $region31: #{lnn_forward.7} parent=0 // pred_check_branch
    %3163 = sbr.rel (0) target = $region33
  $region32: #{lnn_forward.7} parent=0 // pred_region
    _
  $region33: #{lnn_forward.7} parent=0 // pred_fallthru
    _
  // Predicated region
  $region34: #{lnn_forward.7} parent=0 // pred_check
    _
  $region35: #{lnn_forward.7} parent=0 // pred_check_branch
    %3165 = sbr.rel (0) target = $region37
  $region36: #{lnn_forward.7} parent=0 // pred_region
    _
  $region37: #{lnn_forward.7} parent=0 // pred_fallthru
    _

</llo_original>
